<compile_context>
chip_gen: v5e
topology: v5e:2x2
jax: 0.10.0
libtpu: 0.0.40
codegen_flags: <defaults>
</compile_context>

<pallas_src>
import functools

import jax
import jax.numpy as jnp
import numpy as np
from jax.experimental import pallas as pl

# ---- small, TPU-friendly dims consistent with the module's forward ----
B = 2            # batch
CIN = 2048       # resnet101 output channels (fixed by the module)
H = W = 4        # backbone feature-map spatial size
D_IMG = 128      # imageFeatureDim  (!= 2048 -> changeChannel path is taken)
D_INT = 64       # intermediaDim
D_OUT = 128      # outputDim
NCLS = 8         # classNum
D_WORD = 32      # wordFeatureDim
TIME_STEP = 3    # GGNN time steps
BN_EPS = 1e-5


# ---------------------------------------------------------------------------
# Single fused kernel: conv1x1(+folded BN) -> SemanticDecoupling -> GatedGNN
# -> fc+tanh+Element_Wise_Layer.  Everything is one block (no grid); all
# intermediates live in VMEM/vregs; the two HBM outputs are written once.
# ---------------------------------------------------------------------------
def sarb_fused_kernel(x_ref, convw_ref, adj_ref, wslab_ref, uslab_ref,
                      vslab_ref, res_ref, sem_ref,
                      *, b, hw, ncls, d, d_int, d_out, time_step):
    f32 = jnp.float32
    bf16 = jnp.bfloat16
    bn = b * ncls

    # ---- static row offsets into the packed f32 vector slab -----------------
    rw = 2                      # wproj rows
    rbw = rw + ncls             # ggnn bw (z, r, h)
    rbu = rbw + 3               # ggnn bu (z, r)
    rbuh = rbu + 2              # ggnn bu (h)
    rfcb = rbuh + 1             # fc bias
    rclsw = rfcb + 1            # classifier weights
    rclsb = rclsw + ncls        # classifier bias

    shift = vslab_ref[0:1, :]                    # (1, d)
    w34 = vslab_ref[1:2, 0:d_int]                # (1, d_int)
    wproj = vslab_ref[rw:rw + ncls, 0:d_int]     # (C, d_int)
    bwz = vslab_ref[rbw:rbw + 1, :]
    bwr = vslab_ref[rbw + 1:rbw + 2, :]
    bwh = vslab_ref[rbw + 2:rbw + 3, :]
    buz = vslab_ref[rbu:rbu + 1, :]
    bur = vslab_ref[rbu + 1:rbu + 2, :]
    buh = vslab_ref[rbuh:rbuh + 1, :]
    fcb = vslab_ref[rfcb:rfcb + 1, :]
    clsw = vslab_ref[rclsw:rclsw + ncls, :]      # (C, d_out)
    clsb = vslab_ref[rclsb:rclsb + 1, 0:ncls]    # (1, C)

    # ---- static lane offsets into the packed bf16 weight slabs --------------
    inm = adj_ref[:, 0:bn]                       # (B*C, B*C) block-diag, bf16
    outm = adj_ref[:, bn:2 * bn]
    wa_all = wslab_ref[:, 0:3 * d]               # (2d, 3d)  [W_in ; W_out]
    fc_w = wslab_ref[:, 3 * d:3 * d + d_out]     # (2d, d_out)
    uzr = uslab_ref[:, 0:2 * d]                  # (d, 2d)   [U_z | U_r]
    uh = uslab_ref[:, 2 * d:3 * d]               # (d, d)
    sd_w1 = uslab_ref[:, 3 * d:3 * d + d_int]    # (d, d_int)

    # ---- changeChannel: 1x1 conv (BN scale pre-folded) + BN shift -----------
    img = jnp.dot(x_ref[...], convw_ref[...],
                  preferred_element_type=f32) + shift            # (B*HW, d) f32

    # ---- SemanticDecoupling (both batch elements in one shot) ---------------
    xproj = jnp.dot(img.astype(bf16), sd_w1,
                    preferred_element_type=f32)                  # (B*HW, d_int)
    xproj4 = xproj.reshape(b, 1, hw, d_int)
    hmat = jnp.tanh(wproj[None, :, None, :] * xproj4)            # (B, C, HW, d_int)
    # coef = h . (w3@w4); additive biases dropped (softmax shift-invariant)
    coef = jnp.sum(hmat * w34[None, None, :, :], axis=-1)        # (B, C, HW)
    m = jnp.max(coef, axis=-1, keepdims=True)
    e = jnp.exp(coef - m)
    att = e / jnp.sum(e, axis=-1, keepdims=True)                 # softmax over HW
    img3 = img.reshape(b, hw, d)
    sem = jnp.einsum("bcp,bpd->bcd", att, img3,
                     preferred_element_type=f32)                 # (B, C, d) f32
    sem2 = sem.reshape(bn, d)                                    # (B*C, d)

    # ---- Gated GNN: batch folded via block-diagonal adjacency ---------------
    nodes = sem2
    for _ in range(time_step):
        nb = nodes.astype(bf16)
        a_in = jnp.dot(inm, nb, preferred_element_type=f32)      # (B*C, d)
        a_out = jnp.dot(outm, nb, preferred_element_type=f32)
        av = jnp.concatenate([a_in.astype(bf16), a_out.astype(bf16)],
                             axis=-1)                            # (B*C, 2d)
        g_av = jnp.dot(av, wa_all, preferred_element_type=f32)   # (B*C, 3d)
        g_zr = jnp.dot(nb, uzr, preferred_element_type=f32)      # (B*C, 2d)
        zv = jax.nn.sigmoid(g_av[:, 0:d] + bwz + g_zr[:, 0:d] + buz)
        rv = jax.nn.sigmoid(g_av[:, d:2 * d] + bwr + g_zr[:, d:2 * d] + bur)
        hv = jnp.tanh(g_av[:, 2 * d:3 * d] + bwh
                      + jnp.dot((rv * nodes).astype(bf16), uh,
                                preferred_element_type=f32) + buh)
        nodes = (1.0 - zv) * nodes + zv * hv

    # ---- head: tanh(fc([feature | sem])) + Element_Wise_Layer ---------------
    ns = jnp.concatenate([nodes.astype(bf16), sem2.astype(bf16)], axis=-1)
    out = jnp.tanh(jnp.dot(ns, fc_w, preferred_element_type=f32) + fcb)
    out3 = out.reshape(b, ncls, d_out)
    res = jnp.sum(out3 * clsw[None, :, :], axis=2) + clsb        # (B, C)

    # single writeback of the two HBM outputs
    # (res is (2,8): sub-128-lane masked store; negligible at this batch)
    res_ref[...] = res
    sem_ref[...] = sem


# ---------------------------------------------------------------------------
# Wrapper: weight folding / slab packing, then one gridless pallas_call
# (total VMEM footprint ~1 MiB, everything fits in one resident block).
# ---------------------------------------------------------------------------
def sarb_forward(feature_map, p):
    b, cin, h, w = feature_map.shape
    hw = h * w
    d, di, do, c = D_IMG, D_INT, D_OUT, NCLS
    f32 = jnp.float32
    bf16 = jnp.bfloat16

    # cast to bf16 BEFORE the NCHW->NHWC transpose (halves relayout traffic)
    x_bf = jnp.transpose(feature_map.astype(bf16), (0, 2, 3, 1)).reshape(b * hw, cin)

    # ---- weight folding (fold in f32, cast to bf16 afterwards) --------------
    scale = p["bn_gamma"] / jnp.sqrt(p["bn_var"] + BN_EPS)
    shift = (p["bn_beta"] - p["bn_mean"] * scale).reshape(1, d)
    convw_bf = (p["conv_w"] * scale[None, :]).astype(bf16)        # BN scale folded

    w34 = (p["sd_w3"] @ p["sd_w4"]).reshape(1, di)   # b3*w4 + b4 drops in softmax
    wproj = p["word_feat"] @ p["sd_w2"]              # (C, di), constant wrt input

    # block-diagonal adjacency so both batch elements share one GGNN matmul
    eye_b = jnp.eye(b, dtype=f32)
    adj_bf = jnp.concatenate([jnp.kron(eye_b, p["in_matrix"]),
                              jnp.kron(eye_b, p["out_matrix"])],
                             axis=1).astype(bf16)                 # (B*C, 2*B*C)

    # stacked gate weights: [a_in | a_out] @ [W_in ; W_out] -> one dot per step
    w_in = jnp.transpose(p["ggnn_w"][:, :d, :], (1, 0, 2)).reshape(d, 3 * d)
    w_out = jnp.transpose(p["ggnn_w"][:, d:, :], (1, 0, 2)).reshape(d, 3 * d)
    wa_all = jnp.concatenate([w_in, w_out], axis=0)               # (2d, 3d)
    wslab_bf = jnp.concatenate([wa_all, p["fc_w"]], axis=1).astype(bf16)   # (2d, 3d+do)

    u_zr = jnp.transpose(p["ggnn_u"][:2], (1, 0, 2)).reshape(d, 2 * d)
    uslab_bf = jnp.concatenate([u_zr, p["ggnn_u"][2], p["sd_w1"]],
                               axis=1).astype(bf16)               # (d, 3d+di)

    def pad128(a):
        return jnp.pad(a, ((0, 0), (0, d - a.shape[1])))

    # one f32 (10+2C, 128) slab with every small vector / bias / classifier
    vslab = jnp.concatenate([
        shift,                              # row 0
        pad128(w34),                        # row 1
        pad128(wproj),                      # rows 2 .. 2+C
        p["ggnn_bw"].reshape(3, d),         # bw: z, r, h
        p["ggnn_bu"][:2].reshape(2, d),     # bu: z, r
        p["ggnn_bu"][2],                    # bu: h
        p["fc_b"],                          # fc bias
        p["cls_w"],                         # classifier weights (C, d_out)
        pad128(p["cls_b"]),                 # classifier bias
    ], axis=0).astype(f32)

    kernel = functools.partial(sarb_fused_kernel, b=b, hw=hw, ncls=c, d=d,
                               d_int=di, d_out=do, time_step=TIME_STEP)

    res, sem = pl.pallas_call(
        kernel,
        out_shape=(jax.ShapeDtypeStruct((b, c), f32),
                   jax.ShapeDtypeStruct((b, c, d), f32)),
    )(x_bf, convw_bf, adj_bf, wslab_bf, uslab_bf, vslab)
    return res, sem


# ---------------------------------------------------------------------------
# Pure-JAX reference (un-fused, per-batch structure, same precision choices as
# the kernel) for correctness checking of the fused/restructured kernel.
# ---------------------------------------------------------------------------
def sarb_reference(feature_map, p):
    b, cin, h, w = feature_map.shape
    hw = h * w
    d = D_IMG
    f32 = jnp.float32
    bf16 = jnp.bfloat16

    x2d = jnp.transpose(feature_map.astype(bf16), (0, 2, 3, 1)).reshape(b * hw, cin)
    scale = p["bn_gamma"] / jnp.sqrt(p["bn_var"] + BN_EPS)
    shift = p["bn_beta"] - p["bn_mean"] * scale
    convw = (p["conv_w"] * scale[None, :]).astype(bf16)
    img = (jnp.dot(x2d, convw, preferred_element_type=f32) + shift).reshape(b, hw, d)

    # SemanticDecoupling (unfused)
    xproj = jnp.dot(img.reshape(b * hw, d).astype(bf16), p["sd_w1"].astype(bf16),
                    preferred_element_type=f32).reshape(b, hw, D_INT)
    wproj = p["word_feat"] @ p["sd_w2"]                              # (C, Di)
    hmat = jnp.tanh(xproj[:, :, None, :] * wproj[None, None, :, :])  # (b,hw,C,Di)
    feat = hmat @ p["sd_w3"] + p["sd_b3"][0]
    coef = (feat @ p["sd_w4"])[..., 0] + p["sd_b4"][0, 0]            # (b, hw, C)
    att = jax.nn.softmax(coef, axis=1)
    sem = jnp.einsum("bhc,bhd->bcd", att, img)                       # (b, C, d)

    in_m = p["in_matrix"].astype(bf16)
    out_m = p["out_matrix"].astype(bf16)
    wg = p["ggnn_w"].astype(bf16)
    ug = p["ggnn_u"].astype(bf16)

    nodes = sem
    for _ in range(TIME_STEP):
        nb = nodes.astype(bf16)
        a_in = jnp.einsum("ij,bjd->bid", in_m, nb, preferred_element_type=f32)
        a_out = jnp.einsum("ij,bjd->bid", out_m, nb, preferred_element_type=f32)
        av = jnp.concatenate([a_in, a_out], axis=2).astype(bf16)
        zv = jax.nn.sigmoid(
            jnp.einsum("bij,jk->bik", av, wg[0], preferred_element_type=f32)
            + p["ggnn_bw"][0]
            + jnp.einsum("bij,jk->bik", nb, ug[0], preferred_element_type=f32)
            + p["ggnn_bu"][0])
        rv = jax.nn.sigmoid(
            jnp.einsum("bij,jk->bik", av, wg[1], preferred_element_type=f32)
            + p["ggnn_bw"][1]
            + jnp.einsum("bij,jk->bik", nb, ug[1], preferred_element_type=f32)
            + p["ggnn_bu"][1])
        hv = jnp.tanh(
            jnp.einsum("bij,jk->bik", av, wg[2], preferred_element_type=f32)
            + p["ggnn_bw"][2]
            + jnp.einsum("bij,jk->bik", (rv * nodes).astype(bf16), ug[2],
                         preferred_element_type=f32)
            + p["ggnn_bu"][2])
        nodes = (1.0 - zv) * nodes + zv * hv

    cat = jnp.concatenate([nodes.reshape(b * NCLS, d),
                           sem.reshape(b * NCLS, d)], axis=1).astype(bf16)
    out = jnp.tanh(jnp.dot(cat, p["fc_w"].astype(bf16),
                           preferred_element_type=f32) + p["fc_b"][0])
    out = out.reshape(b, NCLS, D_OUT)
    result = jnp.sum(out * p["cls_w"][None], axis=2) + p["cls_b"][0]
    return result, sem


# ---------------------------------------------------------------------------
# Deterministic parameter init (weights stored pre-transposed: (in, out))
# ---------------------------------------------------------------------------
def init_params(key):
    ks = jax.random.split(key, 20)

    def rnd(k, shape, s=0.1):
        return s * jax.random.normal(k, shape, dtype=jnp.float32)

    p = {}
    p["conv_w"] = rnd(ks[0], (CIN, D_IMG), 0.02)
    p["bn_gamma"] = 1.0 + 0.1 * jax.random.normal(ks[1], (D_IMG,), dtype=jnp.float32)
    p["bn_beta"] = rnd(ks[2], (D_IMG,), 0.1)
    p["bn_mean"] = rnd(ks[3], (D_IMG,), 0.1)
    p["bn_var"] = 1.0 + jax.random.uniform(ks[4], (D_IMG,), dtype=jnp.float32)
    p["word_feat"] = rnd(ks[5], (NCLS, D_WORD), 0.3)
    adj = jax.random.uniform(ks[6], (NCLS, NCLS), dtype=jnp.float32)
    p["in_matrix"] = adj
    p["out_matrix"] = adj.T
    p["sd_w1"] = rnd(ks[7], (D_IMG, D_INT))
    p["sd_w2"] = rnd(ks[8], (D_WORD, D_INT))
    p["sd_w3"] = rnd(ks[9], (D_INT, D_INT))
    p["sd_b3"] = rnd(ks[10], (1, D_INT), 0.01)
    p["sd_w4"] = rnd(ks[11], (D_INT, 1))
    p["sd_b4"] = rnd(ks[12], (1, 1), 0.01)
    p["ggnn_w"] = rnd(ks[13], (3, 2 * D_IMG, D_IMG), 0.05)
    p["ggnn_u"] = rnd(ks[14], (3, D_IMG, D_IMG), 0.05)
    p["ggnn_bw"] = rnd(ks[15], (3, 1, D_IMG), 0.01)
    p["ggnn_bu"] = rnd(ks[16], (3, 1, D_IMG), 0.01)
    p["fc_w"] = rnd(ks[17], (2 * D_IMG, D_OUT), 0.05)
    p["fc_b"] = rnd(ks[18], (1, D_OUT), 0.01)
    kc = jax.random.split(ks[19], 2)
    p["cls_w"] = rnd(kc[0], (NCLS, D_OUT))
    p["cls_b"] = rnd(kc[1], (1, NCLS), 0.01)
    return p


if __name__ == "__main__":
    key = jax.random.PRNGKey(0)
    k_in, k_p = jax.random.split(key)
    params = init_params(k_p)

    # input = backbone (resnet101) feature map, NCHW
    x = jax.random.normal(k_in, (B, CIN, H, W), dtype=jnp.float32)

    result, sem = jax.jit(sarb_forward)(x, params)
    jax.block_until_ready(result)

    ref_result, ref_sem = sarb_reference(x, params)
    np.testing.assert_allclose(np.asarray(sem), np.asarray(ref_sem),
                               rtol=5e-3, atol=5e-3)
    np.testing.assert_allclose(np.asarray(result), np.asarray(ref_result),
                               rtol=5e-3, atol=5e-3)
    print("KERNEL_OK")
</pallas_src>

<mosaic_0001>
module attributes {stable_mosaic.version = 11 : i64} {
  func.func @sarb_fused_kernel(%arg0: memref<32x2048xbf16, #tpu.memory_space<vmem>>, %arg1: memref<2048x128xbf16, #tpu.memory_space<vmem>>, %arg2: memref<16x32xbf16, #tpu.memory_space<vmem>>, %arg3: memref<256x512xbf16, #tpu.memory_space<vmem>>, %arg4: memref<128x448xbf16, #tpu.memory_space<vmem>>, %arg5: memref<26x128xf32, #tpu.memory_space<vmem>>, %arg6: memref<2x8xf32, #tpu.memory_space<vmem>>, %arg7: memref<2x8x128xf32, #tpu.memory_space<vmem>>) attributes {dimension_semantics = [], scalar_prefetch = 0 : i64, scratch_operands = 0 : i64, tpu.core_type = #tpu.core_type<tc>} {
    %c0 = arith.constant 0 : index
    %c0_0 = arith.constant 0 : index
    %0 = vector.load %arg5[%c0, %c0_0] : memref<26x128xf32, #tpu.memory_space<vmem>>, vector<1x128xf32>
    %c1 = arith.constant 1 : index
    %c0_1 = arith.constant 0 : index
    %1 = vector.load %arg5[%c1, %c0_1] : memref<26x128xf32, #tpu.memory_space<vmem>>, vector<1x64xf32>
    %c2 = arith.constant 2 : index
    %c0_2 = arith.constant 0 : index
    %2 = vector.load %arg5[%c2, %c0_2] : memref<26x128xf32, #tpu.memory_space<vmem>>, vector<8x64xf32>
    %c10 = arith.constant 10 : index
    %c0_3 = arith.constant 0 : index
    %3 = vector.load %arg5[%c10, %c0_3] : memref<26x128xf32, #tpu.memory_space<vmem>>, vector<1x128xf32>
    %c11 = arith.constant 11 : index
    %c0_4 = arith.constant 0 : index
    %4 = vector.load %arg5[%c11, %c0_4] : memref<26x128xf32, #tpu.memory_space<vmem>>, vector<1x128xf32>
    %c12 = arith.constant 12 : index
    %c0_5 = arith.constant 0 : index
    %5 = vector.load %arg5[%c12, %c0_5] : memref<26x128xf32, #tpu.memory_space<vmem>>, vector<1x128xf32>
    %c13 = arith.constant 13 : index
    %c0_6 = arith.constant 0 : index
    %6 = vector.load %arg5[%c13, %c0_6] : memref<26x128xf32, #tpu.memory_space<vmem>>, vector<1x128xf32>
    %c14 = arith.constant 14 : index
    %c0_7 = arith.constant 0 : index
    %7 = vector.load %arg5[%c14, %c0_7] : memref<26x128xf32, #tpu.memory_space<vmem>>, vector<1x128xf32>
    %c15 = arith.constant 15 : index
    %c0_8 = arith.constant 0 : index
    %8 = vector.load %arg5[%c15, %c0_8] : memref<26x128xf32, #tpu.memory_space<vmem>>, vector<1x128xf32>
    %c16 = arith.constant 16 : index
    %c0_9 = arith.constant 0 : index
    %9 = vector.load %arg5[%c16, %c0_9] : memref<26x128xf32, #tpu.memory_space<vmem>>, vector<1x128xf32>
    %c17 = arith.constant 17 : index
    %c0_10 = arith.constant 0 : index
    %10 = vector.load %arg5[%c17, %c0_10] : memref<26x128xf32, #tpu.memory_space<vmem>>, vector<8x128xf32>
    %c25 = arith.constant 25 : index
    %c0_11 = arith.constant 0 : index
    %11 = vector.load %arg5[%c25, %c0_11] : memref<26x128xf32, #tpu.memory_space<vmem>>, vector<1x8xf32>
    %c0_12 = arith.constant 0 : index
    %c0_13 = arith.constant 0 : index
    %12 = vector.load %arg2[%c0_12, %c0_13] : memref<16x32xbf16, #tpu.memory_space<vmem>>, vector<16x16xbf16>
    %c0_14 = arith.constant 0 : index
    %c16_15 = arith.constant 16 : index
    %13 = vector.load %arg2[%c0_14, %c16_15] : memref<16x32xbf16, #tpu.memory_space<vmem>>, vector<16x16xbf16>
    %c0_16 = arith.constant 0 : index
    %c0_17 = arith.constant 0 : index
    %14 = vector.load %arg3[%c0_16, %c0_17] : memref<256x512xbf16, #tpu.memory_space<vmem>>, vector<256x384xbf16>
    %c0_18 = arith.constant 0 : index
    %c384 = arith.constant 384 : index
    %15 = vector.load %arg3[%c0_18, %c384] : memref<256x512xbf16, #tpu.memory_space<vmem>>, vector<256x128xbf16>
    %c0_19 = arith.constant 0 : index
    %c0_20 = arith.constant 0 : index
    %16 = vector.load %arg4[%c0_19, %c0_20] : memref<128x448xbf16, #tpu.memory_space<vmem>>, vector<128x256xbf16>
    %c0_21 = arith.constant 0 : index
    %c256 = arith.constant 256 : index
    %17 = vector.load %arg4[%c0_21, %c256] : memref<128x448xbf16, #tpu.memory_space<vmem>>, vector<128x128xbf16>
    %c0_22 = arith.constant 0 : index
    %c384_23 = arith.constant 384 : index
    %18 = vector.load %arg4[%c0_22, %c384_23] : memref<128x448xbf16, #tpu.memory_space<vmem>>, vector<128x64xbf16>
    %c0_24 = arith.constant 0 : index
    %c0_25 = arith.constant 0 : index
    %19 = vector.load %arg0[%c0_24, %c0_25] : memref<32x2048xbf16, #tpu.memory_space<vmem>>, vector<32x2048xbf16>
    %c0_26 = arith.constant 0 : index
    %c0_27 = arith.constant 0 : index
    %20 = vector.load %arg1[%c0_26, %c0_27] : memref<2048x128xbf16, #tpu.memory_space<vmem>>, vector<2048x128xbf16>
    %cst = arith.constant dense<0.000000e+00> : vector<32x128xf32>
    %21 = tpu.matmul %19, %20, %cst {dimension_numbers = #tpu.dot_dimension_numbers<[1], [0], [0], [1], [0, 0, 1, 1], [], []>} : vector<32x2048xbf16>, vector<2048x128xbf16>, vector<32x128xf32> -> vector<32x128xf32>
    %22 = vector.broadcast %0 : vector<1x128xf32> to vector<32x128xf32>
    %23 = arith.addf %21, %22 : vector<32x128xf32>
    %24 = arith.truncf %23 : vector<32x128xf32> to vector<32x128xbf16>
    %cst_28 = arith.constant dense<0.000000e+00> : vector<32x64xf32>
    %25 = tpu.matmul %24, %18, %cst_28 {dimension_numbers = #tpu.dot_dimension_numbers<[1], [0], [0], [1], [0, 0, 1, 1], [], []>} : vector<32x128xbf16>, vector<128x64xbf16>, vector<32x64xf32> -> vector<32x64xf32>
    %26 = vector.shape_cast %25 : vector<32x64xf32> to vector<2x1x16x64xf32>
    %27 = vector.shape_cast %2 : vector<8x64xf32> to vector<1x8x1x64xf32>
    %28 = vector.broadcast %27 : vector<1x8x1x64xf32> to vector<2x8x16x64xf32>
    %29 = vector.broadcast %26 : vector<2x1x16x64xf32> to vector<2x8x16x64xf32>
    %30 = arith.mulf %28, %29 : vector<2x8x16x64xf32>
    %31 = math.tanh %30 : vector<2x8x16x64xf32>
    %32 = vector.shape_cast %1 : vector<1x64xf32> to vector<1x1x1x64xf32>
    %33 = vector.broadcast %32 : vector<1x1x1x64xf32> to vector<2x8x16x64xf32>
    %34 = arith.mulf %31, %33 : vector<2x8x16x64xf32>
    %cst_29 = arith.constant dense<0.000000e+00> : vector<2x8x16xf32>
    %35 = vector.multi_reduction <add>, %34, %cst_29 [3] : vector<2x8x16x64xf32> to vector<2x8x16xf32>
    %cst_30 = arith.constant dense<0xFF800000> : vector<2x8xf32>
    %36 = vector.multi_reduction <maximumf>, %35, %cst_30 [2] : vector<2x8x16xf32> to vector<2x8xf32>
    %37 = vector.shape_cast %36 : vector<2x8xf32> to vector<2x8x1xf32>
    %38 = vector.broadcast %37 : vector<2x8x1xf32> to vector<2x8x16xf32>
    %39 = arith.subf %35, %38 : vector<2x8x16xf32>
    %40 = math.exp %39 : vector<2x8x16xf32>
    %cst_31 = arith.constant dense<0.000000e+00> : vector<2x8xf32>
    %41 = vector.multi_reduction <add>, %40, %cst_31 [2] : vector<2x8x16xf32> to vector<2x8xf32>
    %42 = vector.shape_cast %41 : vector<2x8xf32> to vector<2x8x1xf32>
    %43 = vector.broadcast %42 : vector<2x8x1xf32> to vector<2x8x16xf32>
    %44 = arith.divf %40, %43 : vector<2x8x16xf32>
    %45 = vector.shape_cast %23 : vector<32x128xf32> to vector<2x16x128xf32>
    "tpu.trace_start"() <{level = 10 : i32, message = "bcp,bpd->bcd"}> : () -> ()
    %cst_32 = arith.constant dense<0.000000e+00> : vector<2x8x128xf32>
    %46 = tpu.matmul %44, %45, %cst_32 {dimension_numbers = #tpu.dot_dimension_numbers<[2], [1], [1], [2], [0, 0, 0, 1, 1, 2], [0], [0]>} : vector<2x8x16xf32>, vector<2x16x128xf32>, vector<2x8x128xf32> -> vector<2x8x128xf32>
    "tpu.trace_stop"() : () -> ()
    %47 = vector.shape_cast %46 : vector<2x8x128xf32> to vector<16x128xf32>
    %48 = arith.truncf %47 : vector<16x128xf32> to vector<16x128xbf16>
    %cst_33 = arith.constant dense<0.000000e+00> : vector<16x128xf32>
    %49 = tpu.matmul %12, %48, %cst_33 {dimension_numbers = #tpu.dot_dimension_numbers<[1], [0], [0], [1], [0, 0, 1, 1], [], []>} : vector<16x16xbf16>, vector<16x128xbf16>, vector<16x128xf32> -> vector<16x128xf32>
    %cst_34 = arith.constant dense<0.000000e+00> : vector<16x128xf32>
    %50 = tpu.matmul %13, %48, %cst_34 {dimension_numbers = #tpu.dot_dimension_numbers<[1], [0], [0], [1], [0, 0, 1, 1], [], []>} : vector<16x16xbf16>, vector<16x128xbf16>, vector<16x128xf32> -> vector<16x128xf32>
    %51 = arith.truncf %49 : vector<16x128xf32> to vector<16x128xbf16>
    %52 = arith.truncf %50 : vector<16x128xf32> to vector<16x128xbf16>
    %53 = tpu.concatenate %51, %52 in 1 : vector<16x128xbf16>, vector<16x128xbf16> -> vector<16x256xbf16>
    %cst_35 = arith.constant dense<0.000000e+00> : vector<16x384xf32>
    %54 = tpu.matmul %53, %14, %cst_35 {dimension_numbers = #tpu.dot_dimension_numbers<[1], [0], [0], [1], [0, 0, 1, 1], [], []>} : vector<16x256xbf16>, vector<256x384xbf16>, vector<16x384xf32> -> vector<16x384xf32>
    %cst_36 = arith.constant dense<0.000000e+00> : vector<16x256xf32>
    %55 = tpu.matmul %48, %16, %cst_36 {dimension_numbers = #tpu.dot_dimension_numbers<[1], [0], [0], [1], [0, 0, 1, 1], [], []>} : vector<16x128xbf16>, vector<128x256xbf16>, vector<16x256xf32> -> vector<16x256xf32>
    %56 = vector.extract_strided_slice %54 {offsets = [0, 0], sizes = [16, 128], strides = [1, 1]} : vector<16x384xf32> to vector<16x128xf32>
    %57 = vector.broadcast %3 : vector<1x128xf32> to vector<16x128xf32>
    %58 = arith.addf %56, %57 : vector<16x128xf32>
    %59 = vector.extract_strided_slice %55 {offsets = [0, 0], sizes = [16, 128], strides = [1, 1]} : vector<16x256xf32> to vector<16x128xf32>
    %60 = arith.addf %58, %59 : vector<16x128xf32>
    %61 = vector.broadcast %6 : vector<1x128xf32> to vector<16x128xf32>
    %62 = arith.addf %60, %61 : vector<16x128xf32>
    %63 = arith.negf %62 : vector<16x128xf32>
    %64 = math.exp %63 : vector<16x128xf32>
    %cst_37 = arith.constant 1.000000e+00 : f32
    %65 = vector.broadcast %cst_37 : f32 to vector<16x128xf32>
    %66 = arith.addf %65, %64 : vector<16x128xf32>
    %67 = arith.divf %65, %66 : vector<16x128xf32>
    %68 = vector.extract_strided_slice %54 {offsets = [0, 128], sizes = [16, 128], strides = [1, 1]} : vector<16x384xf32> to vector<16x128xf32>
    %69 = vector.broadcast %4 : vector<1x128xf32> to vector<16x128xf32>
    %70 = arith.addf %68, %69 : vector<16x128xf32>
    %71 = vector.extract_strided_slice %55 {offsets = [0, 128], sizes = [16, 128], strides = [1, 1]} : vector<16x256xf32> to vector<16x128xf32>
    %72 = arith.addf %70, %71 : vector<16x128xf32>
    %73 = vector.broadcast %7 : vector<1x128xf32> to vector<16x128xf32>
    %74 = arith.addf %72, %73 : vector<16x128xf32>
    %75 = arith.negf %74 : vector<16x128xf32>
    %76 = math.exp %75 : vector<16x128xf32>
    %cst_38 = arith.constant 1.000000e+00 : f32
    %77 = vector.broadcast %cst_38 : f32 to vector<16x128xf32>
    %78 = arith.addf %77, %76 : vector<16x128xf32>
    %79 = arith.divf %77, %78 : vector<16x128xf32>
    %80 = vector.extract_strided_slice %54 {offsets = [0, 256], sizes = [16, 128], strides = [1, 1]} : vector<16x384xf32> to vector<16x128xf32>
    %81 = vector.broadcast %5 : vector<1x128xf32> to vector<16x128xf32>
    %82 = arith.addf %80, %81 : vector<16x128xf32>
    %83 = arith.mulf %79, %47 : vector<16x128xf32>
    %84 = arith.truncf %83 : vector<16x128xf32> to vector<16x128xbf16>
    %cst_39 = arith.constant dense<0.000000e+00> : vector<16x128xf32>
    %85 = tpu.matmul %84, %17, %cst_39 {dimension_numbers = #tpu.dot_dimension_numbers<[1], [0], [0], [1], [0, 0, 1, 1], [], []>} : vector<16x128xbf16>, vector<128x128xbf16>, vector<16x128xf32> -> vector<16x128xf32>
    %86 = arith.addf %82, %85 : vector<16x128xf32>
    %87 = vector.broadcast %8 : vector<1x128xf32> to vector<16x128xf32>
    %88 = arith.addf %86, %87 : vector<16x128xf32>
    %89 = math.tanh %88 : vector<16x128xf32>
    %cst_40 = arith.constant 1.000000e+00 : f32
    %90 = vector.broadcast %cst_40 : f32 to vector<16x128xf32>
    %91 = arith.subf %90, %67 : vector<16x128xf32>
    %92 = arith.mulf %91, %47 : vector<16x128xf32>
    %93 = arith.mulf %67, %89 : vector<16x128xf32>
    %94 = arith.addf %92, %93 : vector<16x128xf32>
    %95 = arith.truncf %94 : vector<16x128xf32> to vector<16x128xbf16>
    %cst_41 = arith.constant dense<0.000000e+00> : vector<16x128xf32>
    %96 = tpu.matmul %12, %95, %cst_41 {dimension_numbers = #tpu.dot_dimension_numbers<[1], [0], [0], [1], [0, 0, 1, 1], [], []>} : vector<16x16xbf16>, vector<16x128xbf16>, vector<16x128xf32> -> vector<16x128xf32>
    %cst_42 = arith.constant dense<0.000000e+00> : vector<16x128xf32>
    %97 = tpu.matmul %13, %95, %cst_42 {dimension_numbers = #tpu.dot_dimension_numbers<[1], [0], [0], [1], [0, 0, 1, 1], [], []>} : vector<16x16xbf16>, vector<16x128xbf16>, vector<16x128xf32> -> vector<16x128xf32>
    %98 = arith.truncf %96 : vector<16x128xf32> to vector<16x128xbf16>
    %99 = arith.truncf %97 : vector<16x128xf32> to vector<16x128xbf16>
    %100 = tpu.concatenate %98, %99 in 1 : vector<16x128xbf16>, vector<16x128xbf16> -> vector<16x256xbf16>
    %cst_43 = arith.constant dense<0.000000e+00> : vector<16x384xf32>
    %101 = tpu.matmul %100, %14, %cst_43 {dimension_numbers = #tpu.dot_dimension_numbers<[1], [0], [0], [1], [0, 0, 1, 1], [], []>} : vector<16x256xbf16>, vector<256x384xbf16>, vector<16x384xf32> -> vector<16x384xf32>
    %cst_44 = arith.constant dense<0.000000e+00> : vector<16x256xf32>
    %102 = tpu.matmul %95, %16, %cst_44 {dimension_numbers = #tpu.dot_dimension_numbers<[1], [0], [0], [1], [0, 0, 1, 1], [], []>} : vector<16x128xbf16>, vector<128x256xbf16>, vector<16x256xf32> -> vector<16x256xf32>
    %103 = vector.extract_strided_slice %101 {offsets = [0, 0], sizes = [16, 128], strides = [1, 1]} : vector<16x384xf32> to vector<16x128xf32>
    %104 = vector.broadcast %3 : vector<1x128xf32> to vector<16x128xf32>
    %105 = arith.addf %103, %104 : vector<16x128xf32>
    %106 = vector.extract_strided_slice %102 {offsets = [0, 0], sizes = [16, 128], strides = [1, 1]} : vector<16x256xf32> to vector<16x128xf32>
    %107 = arith.addf %105, %106 : vector<16x128xf32>
    %108 = vector.broadcast %6 : vector<1x128xf32> to vector<16x128xf32>
    %109 = arith.addf %107, %108 : vector<16x128xf32>
    %110 = arith.negf %109 : vector<16x128xf32>
    %111 = math.exp %110 : vector<16x128xf32>
    %cst_45 = arith.constant 1.000000e+00 : f32
    %112 = vector.broadcast %cst_45 : f32 to vector<16x128xf32>
    %113 = arith.addf %112, %111 : vector<16x128xf32>
    %114 = arith.divf %112, %113 : vector<16x128xf32>
    %115 = vector.extract_strided_slice %101 {offsets = [0, 128], sizes = [16, 128], strides = [1, 1]} : vector<16x384xf32> to vector<16x128xf32>
    %116 = vector.broadcast %4 : vector<1x128xf32> to vector<16x128xf32>
    %117 = arith.addf %115, %116 : vector<16x128xf32>
    %118 = vector.extract_strided_slice %102 {offsets = [0, 128], sizes = [16, 128], strides = [1, 1]} : vector<16x256xf32> to vector<16x128xf32>
    %119 = arith.addf %117, %118 : vector<16x128xf32>
    %120 = vector.broadcast %7 : vector<1x128xf32> to vector<16x128xf32>
    %121 = arith.addf %119, %120 : vector<16x128xf32>
    %122 = arith.negf %121 : vector<16x128xf32>
    %123 = math.exp %122 : vector<16x128xf32>
    %cst_46 = arith.constant 1.000000e+00 : f32
    %124 = vector.broadcast %cst_46 : f32 to vector<16x128xf32>
    %125 = arith.addf %124, %123 : vector<16x128xf32>
    %126 = arith.divf %124, %125 : vector<16x128xf32>
    %127 = vector.extract_strided_slice %101 {offsets = [0, 256], sizes = [16, 128], strides = [1, 1]} : vector<16x384xf32> to vector<16x128xf32>
    %128 = vector.broadcast %5 : vector<1x128xf32> to vector<16x128xf32>
    %129 = arith.addf %127, %128 : vector<16x128xf32>
    %130 = arith.mulf %126, %94 : vector<16x128xf32>
    %131 = arith.truncf %130 : vector<16x128xf32> to vector<16x128xbf16>
    %cst_47 = arith.constant dense<0.000000e+00> : vector<16x128xf32>
    %132 = tpu.matmul %131, %17, %cst_47 {dimension_numbers = #tpu.dot_dimension_numbers<[1], [0], [0], [1], [0, 0, 1, 1], [], []>} : vector<16x128xbf16>, vector<128x128xbf16>, vector<16x128xf32> -> vector<16x128xf32>
    %133 = arith.addf %129, %132 : vector<16x128xf32>
    %134 = vector.broadcast %8 : vector<1x128xf32> to vector<16x128xf32>
    %135 = arith.addf %133, %134 : vector<16x128xf32>
    %136 = math.tanh %135 : vector<16x128xf32>
    %cst_48 = arith.constant 1.000000e+00 : f32
    %137 = vector.broadcast %cst_48 : f32 to vector<16x128xf32>
    %138 = arith.subf %137, %114 : vector<16x128xf32>
    %139 = arith.mulf %138, %94 : vector<16x128xf32>
    %140 = arith.mulf %114, %136 : vector<16x128xf32>
    %141 = arith.addf %139, %140 : vector<16x128xf32>
    %142 = arith.truncf %141 : vector<16x128xf32> to vector<16x128xbf16>
    %cst_49 = arith.constant dense<0.000000e+00> : vector<16x128xf32>
    %143 = tpu.matmul %12, %142, %cst_49 {dimension_numbers = #tpu.dot_dimension_numbers<[1], [0], [0], [1], [0, 0, 1, 1], [], []>} : vector<16x16xbf16>, vector<16x128xbf16>, vector<16x128xf32> -> vector<16x128xf32>
    %cst_50 = arith.constant dense<0.000000e+00> : vector<16x128xf32>
    %144 = tpu.matmul %13, %142, %cst_50 {dimension_numbers = #tpu.dot_dimension_numbers<[1], [0], [0], [1], [0, 0, 1, 1], [], []>} : vector<16x16xbf16>, vector<16x128xbf16>, vector<16x128xf32> -> vector<16x128xf32>
    %145 = arith.truncf %143 : vector<16x128xf32> to vector<16x128xbf16>
    %146 = arith.truncf %144 : vector<16x128xf32> to vector<16x128xbf16>
    %147 = tpu.concatenate %145, %146 in 1 : vector<16x128xbf16>, vector<16x128xbf16> -> vector<16x256xbf16>
    %cst_51 = arith.constant dense<0.000000e+00> : vector<16x384xf32>
    %148 = tpu.matmul %147, %14, %cst_51 {dimension_numbers = #tpu.dot_dimension_numbers<[1], [0], [0], [1], [0, 0, 1, 1], [], []>} : vector<16x256xbf16>, vector<256x384xbf16>, vector<16x384xf32> -> vector<16x384xf32>
    %cst_52 = arith.constant dense<0.000000e+00> : vector<16x256xf32>
    %149 = tpu.matmul %142, %16, %cst_52 {dimension_numbers = #tpu.dot_dimension_numbers<[1], [0], [0], [1], [0, 0, 1, 1], [], []>} : vector<16x128xbf16>, vector<128x256xbf16>, vector<16x256xf32> -> vector<16x256xf32>
    %150 = vector.extract_strided_slice %148 {offsets = [0, 0], sizes = [16, 128], strides = [1, 1]} : vector<16x384xf32> to vector<16x128xf32>
    %151 = vector.broadcast %3 : vector<1x128xf32> to vector<16x128xf32>
    %152 = arith.addf %150, %151 : vector<16x128xf32>
    %153 = vector.extract_strided_slice %149 {offsets = [0, 0], sizes = [16, 128], strides = [1, 1]} : vector<16x256xf32> to vector<16x128xf32>
    %154 = arith.addf %152, %153 : vector<16x128xf32>
    %155 = vector.broadcast %6 : vector<1x128xf32> to vector<16x128xf32>
    %156 = arith.addf %154, %155 : vector<16x128xf32>
    %157 = arith.negf %156 : vector<16x128xf32>
    %158 = math.exp %157 : vector<16x128xf32>
    %cst_53 = arith.constant 1.000000e+00 : f32
    %159 = vector.broadcast %cst_53 : f32 to vector<16x128xf32>
    %160 = arith.addf %159, %158 : vector<16x128xf32>
    %161 = arith.divf %159, %160 : vector<16x128xf32>
    %162 = vector.extract_strided_slice %148 {offsets = [0, 128], sizes = [16, 128], strides = [1, 1]} : vector<16x384xf32> to vector<16x128xf32>
    %163 = vector.broadcast %4 : vector<1x128xf32> to vector<16x128xf32>
    %164 = arith.addf %162, %163 : vector<16x128xf32>
    %165 = vector.extract_strided_slice %149 {offsets = [0, 128], sizes = [16, 128], strides = [1, 1]} : vector<16x256xf32> to vector<16x128xf32>
    %166 = arith.addf %164, %165 : vector<16x128xf32>
    %167 = vector.broadcast %7 : vector<1x128xf32> to vector<16x128xf32>
    %168 = arith.addf %166, %167 : vector<16x128xf32>
    %169 = arith.negf %168 : vector<16x128xf32>
    %170 = math.exp %169 : vector<16x128xf32>
    %cst_54 = arith.constant 1.000000e+00 : f32
    %171 = vector.broadcast %cst_54 : f32 to vector<16x128xf32>
    %172 = arith.addf %171, %170 : vector<16x128xf32>
    %173 = arith.divf %171, %172 : vector<16x128xf32>
    %174 = vector.extract_strided_slice %148 {offsets = [0, 256], sizes = [16, 128], strides = [1, 1]} : vector<16x384xf32> to vector<16x128xf32>
    %175 = vector.broadcast %5 : vector<1x128xf32> to vector<16x128xf32>
    %176 = arith.addf %174, %175 : vector<16x128xf32>
    %177 = arith.mulf %173, %141 : vector<16x128xf32>
    %178 = arith.truncf %177 : vector<16x128xf32> to vector<16x128xbf16>
    %cst_55 = arith.constant dense<0.000000e+00> : vector<16x128xf32>
    %179 = tpu.matmul %178, %17, %cst_55 {dimension_numbers = #tpu.dot_dimension_numbers<[1], [0], [0], [1], [0, 0, 1, 1], [], []>} : vector<16x128xbf16>, vector<128x128xbf16>, vector<16x128xf32> -> vector<16x128xf32>
    %180 = arith.addf %176, %179 : vector<16x128xf32>
    %181 = vector.broadcast %8 : vector<1x128xf32> to vector<16x128xf32>
    %182 = arith.addf %180, %181 : vector<16x128xf32>
    %183 = math.tanh %182 : vector<16x128xf32>
    %cst_56 = arith.constant 1.000000e+00 : f32
    %184 = vector.broadcast %cst_56 : f32 to vector<16x128xf32>
    %185 = arith.subf %184, %161 : vector<16x128xf32>
    %186 = arith.mulf %185, %141 : vector<16x128xf32>
    %187 = arith.mulf %161, %183 : vector<16x128xf32>
    %188 = arith.addf %186, %187 : vector<16x128xf32>
    %189 = arith.truncf %188 : vector<16x128xf32> to vector<16x128xbf16>
    %190 = arith.truncf %47 : vector<16x128xf32> to vector<16x128xbf16>
    %191 = tpu.concatenate %189, %190 in 1 : vector<16x128xbf16>, vector<16x128xbf16> -> vector<16x256xbf16>
    %cst_57 = arith.constant dense<0.000000e+00> : vector<16x128xf32>
    %192 = tpu.matmul %191, %15, %cst_57 {dimension_numbers = #tpu.dot_dimension_numbers<[1], [0], [0], [1], [0, 0, 1, 1], [], []>} : vector<16x256xbf16>, vector<256x128xbf16>, vector<16x128xf32> -> vector<16x128xf32>
    %193 = vector.broadcast %9 : vector<1x128xf32> to vector<16x128xf32>
    %194 = arith.addf %192, %193 : vector<16x128xf32>
    %195 = math.tanh %194 : vector<16x128xf32>
    %196 = vector.shape_cast %195 : vector<16x128xf32> to vector<2x8x128xf32>
    %197 = vector.shape_cast %10 : vector<8x128xf32> to vector<1x8x128xf32>
    %198 = vector.broadcast %197 : vector<1x8x128xf32> to vector<2x8x128xf32>
    %199 = arith.mulf %196, %198 : vector<2x8x128xf32>
    %cst_58 = arith.constant dense<0.000000e+00> : vector<2x8xf32>
    %200 = vector.multi_reduction <add>, %199, %cst_58 [2] : vector<2x8x128xf32> to vector<2x8xf32>
    %201 = vector.broadcast %11 : vector<1x8xf32> to vector<2x8xf32>
    %202 = arith.addf %200, %201 : vector<2x8xf32>
    %c0_59 = arith.constant 0 : index
    %c0_60 = arith.constant 0 : index
    %203 = vector.load %arg6[%c0_59, %c0_60] : memref<2x8xf32, #tpu.memory_space<vmem>>, vector<2x8xf32>
    tpu.vector_store %arg6[%c0_59, %c0_60], %202 {strides = array<i32>} : memref<2x8xf32, #tpu.memory_space<vmem>>, vector<2x8xf32>,
    %c0_61 = arith.constant 0 : index
    %c0_62 = arith.constant 0 : index
    %c0_63 = arith.constant 0 : index
    %204 = vector.load %arg7[%c0_61, %c0_62, %c0_63] : memref<2x8x128xf32, #tpu.memory_space<vmem>>, vector<2x8x128xf32>
    tpu.vector_store %arg7[%c0_61, %c0_62, %c0_63], %46 {strides = array<i32>} : memref<2x8x128xf32, #tpu.memory_space<vmem>>, vector<2x8x128xf32>,
    return
  }
}

</mosaic_0001>

<llo_original>
// kernel: sarb_forward.1
$region0: #{sarb_forward.1}
  #allocation0 [shape = 'u32[]', space=smem, size = 0x4, offset = 0x4, fixed_abs, tag = 'smem constant byte address 0x4 - core index']
  #allocation1 [shape = 'u32[72,128]{1,0:T(1,128)}', space=vmem, size = 0x9000, scoped, tag = 'internal scratch']
  %s0 = inlined_call_operand.vmem [shape: bf16[32,2048], index: 0, kind: input, shape index: {}]
  %s1 = inlined_call_operand.vmem [shape: bf16[2048,128], index: 1, kind: input, shape index: {}]
  %s2 = inlined_call_operand.vmem [shape: bf16[16,32], index: 2, kind: input, shape index: {}]
  %s3 = inlined_call_operand.vmem [shape: bf16[256,512], index: 3, kind: input, shape index: {}]
  %s4 = inlined_call_operand.vmem [shape: bf16[128,448], index: 4, kind: input, shape index: {}]
  %s5 = inlined_call_operand.vmem [shape: f32[26,128], index: 5, kind: input, shape index: {}]
  %s6 = inlined_call_operand.hbm [shape: f32[2,8], index: 6, kind: output, shape index: {0}]
  %s7 = inlined_call_operand.hbm [shape: f32[2,8,128], index: 7, kind: output, shape index: {1}]
  %8 = xla_tuple %s6, %s7
  %s9 = sld [smem:[#allocation0]]
  $region42: #{sarb_forward.1} parent=0
    _
  %s11 = ssub.s32 1, %s9
  %s12 = scalar_select 0, %s11, %s9
  $region1: #{sarb_forward.1} parent=0
    #allocation2 [shape = 'u8[1024]{0}', space=vmem, size = 0x400, scoped, tag = 'output window, operand 0, single buffered']
    #allocation3 [shape = 's32[1]{0}', space=sflag, size = 0x4, scoped, tag = 'scoped memory for sarb_forward.1']
    #allocation4 [shape = 'u8[8192]{0}', space=vmem, size = 0x2000, scoped, tag = 'output window, operand 1, single buffered']
    #allocation5 [shape = 's32[1]{0}', space=sflag, size = 0x4, scoped, tag = 'scoped memory for sarb_forward.1']
    %13 = vsyncpa [#allocation3], 0
    %14 = vsyncpa [#allocation5], 0
    // Predicated region
    $region2: #{sarb_forward.1} parent=1 // pred_check
      _
    $region3: #{sarb_forward.1} parent=1 // pred_check_branch
      %16 = sbr.rel (0) target = $region5
    $region4: #{sarb_forward.1} parent=1 // pred_region
      _
    $region5: #{sarb_forward.1} parent=1 // pred_fallthru
      _
    // Predicated region
    $region6: #{sarb_forward.1} parent=1 // pred_check
      _
    $region7: #{sarb_forward.1} parent=1 // pred_check_branch
      %18 = sbr.rel (0) target = $region9
    $region8: #{sarb_forward.1} parent=1 // pred_region
      _
    $region9: #{sarb_forward.1} parent=1 // pred_fallthru
      _
    // Predicated region
    $region10: #{sarb_forward.1} parent=1 // pred_check
      _
    $region11: #{sarb_forward.1} parent=1 // pred_check_branch
      %20 = sbr.rel (0) target = $region13
    $region12: #{sarb_forward.1} parent=1 // pred_region
      _
    $region13: #{sarb_forward.1} parent=1 // pred_fallthru
      _
    // Predicated region
    $region14: #{sarb_forward.1} parent=1 // pred_check
      _
    $region15: #{sarb_forward.1} parent=1 // pred_check_branch
      %22 = sbr.rel (0) target = $region17
    $region16: #{sarb_forward.1} parent=1 // pred_region
      _
    $region17: #{sarb_forward.1} parent=1 // pred_fallthru
      _
    // Predicated region
    $region18: #{sarb_forward.1} parent=1 // pred_check
      _
    $region19: #{sarb_forward.1} parent=1 // pred_check_branch
      %24 = sbr.rel (0) target = $region21
    $region20: #{sarb_forward.1} parent=1 // pred_region
      _
    $region21: #{sarb_forward.1} parent=1 // pred_fallthru
      _
    // Predicated region
    $region22: #{sarb_forward.1} parent=1 // pred_check
      _
    $region23: #{sarb_forward.1} parent=1 // pred_check_branch
      %26 = sbr.rel (0) target = $region25
    $region24: #{sarb_forward.1} parent=1 // pred_region
      _
    $region25: #{sarb_forward.1} parent=1 // pred_fallthru
      _
    %v28 = vld [vmem:[%s5] sm:$0x1]
    %v29 = vld [vmem:[%s5 + $0x1] sm:$0x1]
    %v30 = vld [vmem:[%s5 + $0x2] sm:$0xff]
    %v31 = vld [vmem:[%s5 + $0xa] sm:$0x1]
    %v32 = vld [vmem:[%s5 + $0xb] sm:$0x1]
    %v33 = vld [vmem:[%s5 + $0xc] sm:$0x1]
    %v34 = vld [vmem:[%s5 + $0xd] sm:$0x1]
    %v35 = vld [vmem:[%s5 + $0xe] sm:$0x1]
    %v36 = vld [vmem:[%s5 + $0xf] sm:$0x1]
    %v37 = vld [vmem:[%s5 + $0x10] sm:$0x1]
    %v38 = vld [vmem:[%s5 + $0x11] sm:$0xff]
    %v39 = vld [vmem:[%s5 + $0x19] sm:$0x1]
    %v40 = vld [vmem:[%s2] sm:$0xf]
    %v41 = vld [vmem:[%s2 + $0x4] sm:$0xf]
    %v42 = vld [vmem:[%s3] sm:$0xff]
    %v43 = vld [vmem:[%s3 + $0x8] sm:$0xf]
    %v44 = vld [vmem:[%s3 + $0x10] sm:$0xff]
    %v45 = vld [vmem:[%s3 + $0x18] sm:$0xf]
    %v46 = vld [vmem:[%s3 + $0x20] sm:$0xff]
    %v47 = vld [vmem:[%s3 + $0x28] sm:$0xf]
    %v48 = vld [vmem:[%s3 + $0x30] sm:$0xff]
    %v49 = vld [vmem:[%s3 + $0x38] sm:$0xf]
    %v50 = vld [vmem:[%s3 + $0x40] sm:$0xff]
    %v51 = vld [vmem:[%s3 + $0x48] sm:$0xf]
    %v52 = vld [vmem:[%s3 + $0x50] sm:$0xff]
    %v53 = vld [vmem:[%s3 + $0x58] sm:$0xf]
    %v54 = vld [vmem:[%s3 + $0x60] sm:$0xff]
    %v55 = vld [vmem:[%s3 + $0x68] sm:$0xf]
    %v56 = vld [vmem:[%s3 + $0x70] sm:$0xff]
    %v57 = vld [vmem:[%s3 + $0x78] sm:$0xf]
    %v58 = vld [vmem:[%s3 + $0x80] sm:$0xff]
    %v59 = vld [vmem:[%s3 + $0x88] sm:$0xf]
    %v60 = vld [vmem:[%s3 + $0x90] sm:$0xff]
    %v61 = vld [vmem:[%s3 + $0x98] sm:$0xf]
    %v62 = vld [vmem:[%s3 + $0xa0] sm:$0xff]
    %v63 = vld [vmem:[%s3 + $0xa8] sm:$0xf]
    %v64 = vld [vmem:[%s3 + $0xb0] sm:$0xff]
    %v65 = vld [vmem:[%s3 + $0xb8] sm:$0xf]
    %v66 = vld [vmem:[%s3 + $0xc0] sm:$0xff]
    %v67 = vld [vmem:[%s3 + $0xc8] sm:$0xf]
    %v68 = vld [vmem:[%s3 + $0xd0] sm:$0xff]
    %v69 = vld [vmem:[%s3 + $0xd8] sm:$0xf]
    %v70 = vld [vmem:[%s3 + $0xe0] sm:$0xff]
    %v71 = vld [vmem:[%s3 + $0xe8] sm:$0xf]
    %v72 = vld [vmem:[%s3 + $0xf0] sm:$0xff]
    %v73 = vld [vmem:[%s3 + $0xf8] sm:$0xf]
    %v74 = vld [vmem:[%s3 + $0x100] sm:$0xff]
    %v75 = vld [vmem:[%s3 + $0x108] sm:$0xf]
    %v76 = vld [vmem:[%s3 + $0x110] sm:$0xff]
    %v77 = vld [vmem:[%s3 + $0x118] sm:$0xf]
    %v78 = vld [vmem:[%s3 + $0x120] sm:$0xff]
    %v79 = vld [vmem:[%s3 + $0x128] sm:$0xf]
    %v80 = vld [vmem:[%s3 + $0x130] sm:$0xff]
    %v81 = vld [vmem:[%s3 + $0x138] sm:$0xf]
    %v82 = vld [vmem:[%s3 + $0x140] sm:$0xff]
    %v83 = vld [vmem:[%s3 + $0x148] sm:$0xf]
    %v84 = vld [vmem:[%s3 + $0x150] sm:$0xff]
    %v85 = vld [vmem:[%s3 + $0x158] sm:$0xf]
    %v86 = vld [vmem:[%s3 + $0x160] sm:$0xff]
    %v87 = vld [vmem:[%s3 + $0x168] sm:$0xf]
    %v88 = vld [vmem:[%s3 + $0x170] sm:$0xff]
    %v89 = vld [vmem:[%s3 + $0x178] sm:$0xf]
    %v90 = vld [vmem:[%s3 + $0x180] sm:$0xff]
    %v91 = vld [vmem:[%s3 + $0x188] sm:$0xf]
    %v92 = vld [vmem:[%s3 + $0x190] sm:$0xff]
    %v93 = vld [vmem:[%s3 + $0x198] sm:$0xf]
    %v94 = vld [vmem:[%s3 + $0x1a0] sm:$0xff]
    %v95 = vld [vmem:[%s3 + $0x1a8] sm:$0xf]
    %v96 = vld [vmem:[%s3 + $0x1b0] sm:$0xff]
    %v97 = vld [vmem:[%s3 + $0x1b8] sm:$0xf]
    %v98 = vld [vmem:[%s3 + $0x1c0] sm:$0xff]
    %v99 = vld [vmem:[%s3 + $0x1c8] sm:$0xf]
    %v100 = vld [vmem:[%s3 + $0x1d0] sm:$0xff]
    %v101 = vld [vmem:[%s3 + $0x1d8] sm:$0xf]
    %v102 = vld [vmem:[%s3 + $0x1e0] sm:$0xff]
    %v103 = vld [vmem:[%s3 + $0x1e8] sm:$0xf]
    %v104 = vld [vmem:[%s3 + $0x1f0] sm:$0xff]
    %v105 = vld [vmem:[%s3 + $0x1f8] sm:$0xf]
    %v106 = vld [vmem:[%s3 + $0xc] sm:$0xf]
    %v107 = vld [vmem:[%s3 + $0x1c] sm:$0xf]
    %v108 = vld [vmem:[%s3 + $0x2c] sm:$0xf]
    %v109 = vld [vmem:[%s3 + $0x3c] sm:$0xf]
    %v110 = vld [vmem:[%s3 + $0x4c] sm:$0xf]
    %v111 = vld [vmem:[%s3 + $0x5c] sm:$0xf]
    %v112 = vld [vmem:[%s3 + $0x6c] sm:$0xf]
    %v113 = vld [vmem:[%s3 + $0x7c] sm:$0xf]
    %v114 = vld [vmem:[%s3 + $0x8c] sm:$0xf]
    %v115 = vld [vmem:[%s3 + $0x9c] sm:$0xf]
    %v116 = vld [vmem:[%s3 + $0xac] sm:$0xf]
    %v117 = vld [vmem:[%s3 + $0xbc] sm:$0xf]
    %v118 = vld [vmem:[%s3 + $0xcc] sm:$0xf]
    %v119 = vld [vmem:[%s3 + $0xdc] sm:$0xf]
    %v120 = vld [vmem:[%s3 + $0xec] sm:$0xf]
    %v121 = vld [vmem:[%s3 + $0xfc] sm:$0xf]
    %v122 = vld [vmem:[%s3 + $0x10c] sm:$0xf]
    %v123 = vld [vmem:[%s3 + $0x11c] sm:$0xf]
    %v124 = vld [vmem:[%s3 + $0x12c] sm:$0xf]
    %v125 = vld [vmem:[%s3 + $0x13c] sm:$0xf]
    %v126 = vld [vmem:[%s3 + $0x14c] sm:$0xf]
    %v127 = vld [vmem:[%s3 + $0x15c] sm:$0xf]
    %v128 = vld [vmem:[%s3 + $0x16c] sm:$0xf]
    %v129 = vld [vmem:[%s3 + $0x17c] sm:$0xf]
    %v130 = vld [vmem:[%s3 + $0x18c] sm:$0xf]
    %v131 = vld [vmem:[%s3 + $0x19c] sm:$0xf]
    %v132 = vld [vmem:[%s3 + $0x1ac] sm:$0xf]
    %v133 = vld [vmem:[%s3 + $0x1bc] sm:$0xf]
    %v134 = vld [vmem:[%s3 + $0x1cc] sm:$0xf]
    %v135 = vld [vmem:[%s3 + $0x1dc] sm:$0xf]
    %v136 = vld [vmem:[%s3 + $0x1ec] sm:$0xf]
    %v137 = vld [vmem:[%s3 + $0x1fc] sm:$0xf]
    %v138 = vld [vmem:[%s4] sm:$0xff]
    %v139 = vld [vmem:[%s4 + $0x10] sm:$0xff]
    %v140 = vld [vmem:[%s4 + $0x20] sm:$0xff]
    %v141 = vld [vmem:[%s4 + $0x30] sm:$0xff]
    %v142 = vld [vmem:[%s4 + $0x40] sm:$0xff]
    %v143 = vld [vmem:[%s4 + $0x50] sm:$0xff]
    %v144 = vld [vmem:[%s4 + $0x60] sm:$0xff]
    %v145 = vld [vmem:[%s4 + $0x70] sm:$0xff]
    %v146 = vld [vmem:[%s4 + $0x80] sm:$0xff]
    %v147 = vld [vmem:[%s4 + $0x90] sm:$0xff]
    %v148 = vld [vmem:[%s4 + $0xa0] sm:$0xff]
    %v149 = vld [vmem:[%s4 + $0xb0] sm:$0xff]
    %v150 = vld [vmem:[%s4 + $0xc0] sm:$0xff]
    %v151 = vld [vmem:[%s4 + $0xd0] sm:$0xff]
    %v152 = vld [vmem:[%s4 + $0xe0] sm:$0xff]
    %v153 = vld [vmem:[%s4 + $0xf0] sm:$0xff]
    %v154 = vld [vmem:[%s4 + $0x8] sm:$0xf]
    %v155 = vld [vmem:[%s4 + $0x18] sm:$0xf]
    %v156 = vld [vmem:[%s4 + $0x28] sm:$0xf]
    %v157 = vld [vmem:[%s4 + $0x38] sm:$0xf]
    %v158 = vld [vmem:[%s4 + $0x48] sm:$0xf]
    %v159 = vld [vmem:[%s4 + $0x58] sm:$0xf]
    %v160 = vld [vmem:[%s4 + $0x68] sm:$0xf]
    %v161 = vld [vmem:[%s4 + $0x78] sm:$0xf]
    %v162 = vld [vmem:[%s4 + $0x88] sm:$0xf]
    %v163 = vld [vmem:[%s4 + $0x98] sm:$0xf]
    %v164 = vld [vmem:[%s4 + $0xa8] sm:$0xf]
    %v165 = vld [vmem:[%s4 + $0xb8] sm:$0xf]
    %v166 = vld [vmem:[%s4 + $0xc8] sm:$0xf]
    %v167 = vld [vmem:[%s4 + $0xd8] sm:$0xf]
    %v168 = vld [vmem:[%s4 + $0xe8] sm:$0xf]
    %v169 = vld [vmem:[%s4 + $0xf8] sm:$0xf]
    %v170 = vld [vmem:[%s4 + $0xc] sm:$0xf]
    %v171 = vld [vmem:[%s4 + $0x1c] sm:$0xf]
    %v172 = vld [vmem:[%s4 + $0x2c] sm:$0xf]
    %v173 = vld [vmem:[%s4 + $0x3c] sm:$0xf]
    %v174 = vld [vmem:[%s4 + $0x4c] sm:$0xf]
    %v175 = vld [vmem:[%s4 + $0x5c] sm:$0xf]
    %v176 = vld [vmem:[%s4 + $0x6c] sm:$0xf]
    %v177 = vld [vmem:[%s4 + $0x7c] sm:$0xf]
    %v178 = vld [vmem:[%s4 + $0x8c] sm:$0xf]
    %v179 = vld [vmem:[%s4 + $0x9c] sm:$0xf]
    %v180 = vld [vmem:[%s4 + $0xac] sm:$0xf]
    %v181 = vld [vmem:[%s4 + $0xbc] sm:$0xf]
    %v182 = vld [vmem:[%s4 + $0xcc] sm:$0xf]
    %v183 = vld [vmem:[%s4 + $0xdc] sm:$0xf]
    %v184 = vld [vmem:[%s4 + $0xec] sm:$0xf]
    %v185 = vld [vmem:[%s4 + $0xfc] sm:$0xf]
    %v186 = vld [vmem:[%s0] sm:$0xff]
    %v187 = vld [vmem:[%s0 + $0x8] sm:$0xff]
    %v188 = vld [vmem:[%s0 + $0x10] sm:$0xff]
    %v189 = vld [vmem:[%s0 + $0x18] sm:$0xff]
    %v190 = vld [vmem:[%s0 + $0x20] sm:$0xff]
    %v191 = vld [vmem:[%s0 + $0x28] sm:$0xff]
    %v192 = vld [vmem:[%s0 + $0x30] sm:$0xff]
    %v193 = vld [vmem:[%s0 + $0x38] sm:$0xff]
    %v194 = vld [vmem:[%s0 + $0x40] sm:$0xff]
    %v195 = vld [vmem:[%s0 + $0x48] sm:$0xff]
    %v196 = vld [vmem:[%s0 + $0x50] sm:$0xff]
    %v197 = vld [vmem:[%s0 + $0x58] sm:$0xff]
    %v198 = vld [vmem:[%s0 + $0x60] sm:$0xff]
    %v199 = vld [vmem:[%s0 + $0x68] sm:$0xff]
    %v200 = vld [vmem:[%s0 + $0x70] sm:$0xff]
    %v201 = vld [vmem:[%s0 + $0x78] sm:$0xff]
    %v202 = vld [vmem:[%s0 + $0x80] sm:$0xff]
    %v203 = vld [vmem:[%s0 + $0x88] sm:$0xff]
    %v204 = vld [vmem:[%s0 + $0x90] sm:$0xff]
    %v205 = vld [vmem:[%s0 + $0x98] sm:$0xff]
    %v206 = vld [vmem:[%s0 + $0xa0] sm:$0xff]
    %v207 = vld [vmem:[%s0 + $0xa8] sm:$0xff]
    %v208 = vld [vmem:[%s0 + $0xb0] sm:$0xff]
    %v209 = vld [vmem:[%s0 + $0xb8] sm:$0xff]
    %v210 = vld [vmem:[%s0 + $0xc0] sm:$0xff]
    %v211 = vld [vmem:[%s0 + $0xc8] sm:$0xff]
    %v212 = vld [vmem:[%s0 + $0xd0] sm:$0xff]
    %v213 = vld [vmem:[%s0 + $0xd8] sm:$0xff]
    %v214 = vld [vmem:[%s0 + $0xe0] sm:$0xff]
    %v215 = vld [vmem:[%s0 + $0xe8] sm:$0xff]
    %v216 = vld [vmem:[%s0 + $0xf0] sm:$0xff]
    %v217 = vld [vmem:[%s0 + $0xf8] sm:$0xff]
    %v218 = vld [vmem:[%s1] sm:$0xf]
    %v219 = vld [vmem:[%s1 + $0x4] sm:$0xf]
    %v220 = vld [vmem:[%s1 + $0x8] sm:$0xf]
    %v221 = vld [vmem:[%s1 + $0xc] sm:$0xf]
    %v222 = vld [vmem:[%s1 + $0x10] sm:$0xf]
    %v223 = vld [vmem:[%s1 + $0x14] sm:$0xf]
    %v224 = vld [vmem:[%s1 + $0x18] sm:$0xf]
    %v225 = vld [vmem:[%s1 + $0x1c] sm:$0xf]
    %v226 = vld [vmem:[%s1 + $0x20] sm:$0xf]
    %v227 = vld [vmem:[%s1 + $0x24] sm:$0xf]
    %v228 = vld [vmem:[%s1 + $0x28] sm:$0xf]
    %v229 = vld [vmem:[%s1 + $0x2c] sm:$0xf]
    %v230 = vld [vmem:[%s1 + $0x30] sm:$0xf]
    %v231 = vld [vmem:[%s1 + $0x34] sm:$0xf]
    %v232 = vld [vmem:[%s1 + $0x38] sm:$0xf]
    %v233 = vld [vmem:[%s1 + $0x3c] sm:$0xf]
    %v234 = vld [vmem:[%s1 + $0x40] sm:$0xf]
    %v235 = vld [vmem:[%s1 + $0x44] sm:$0xf]
    %v236 = vld [vmem:[%s1 + $0x48] sm:$0xf]
    %v237 = vld [vmem:[%s1 + $0x4c] sm:$0xf]
    %v238 = vld [vmem:[%s1 + $0x50] sm:$0xf]
    %v239 = vld [vmem:[%s1 + $0x54] sm:$0xf]
    %v240 = vld [vmem:[%s1 + $0x58] sm:$0xf]
    %v241 = vld [vmem:[%s1 + $0x5c] sm:$0xf]
    %v242 = vld [vmem:[%s1 + $0x60] sm:$0xf]
    %v243 = vld [vmem:[%s1 + $0x64] sm:$0xf]
    %v244 = vld [vmem:[%s1 + $0x68] sm:$0xf]
    %v245 = vld [vmem:[%s1 + $0x6c] sm:$0xf]
    %v246 = vld [vmem:[%s1 + $0x70] sm:$0xf]
    %v247 = vld [vmem:[%s1 + $0x74] sm:$0xf]
    %v248 = vld [vmem:[%s1 + $0x78] sm:$0xf]
    %v249 = vld [vmem:[%s1 + $0x7c] sm:$0xf]
    %v250 = vld [vmem:[%s1 + $0x80] sm:$0xf]
    %v251 = vld [vmem:[%s1 + $0x84] sm:$0xf]
    %v252 = vld [vmem:[%s1 + $0x88] sm:$0xf]
    %v253 = vld [vmem:[%s1 + $0x8c] sm:$0xf]
    %v254 = vld [vmem:[%s1 + $0x90] sm:$0xf]
    %v255 = vld [vmem:[%s1 + $0x94] sm:$0xf]
    %v256 = vld [vmem:[%s1 + $0x98] sm:$0xf]
    %v257 = vld [vmem:[%s1 + $0x9c] sm:$0xf]
    %v258 = vld [vmem:[%s1 + $0xa0] sm:$0xf]
    %v259 = vld [vmem:[%s1 + $0xa4] sm:$0xf]
    %v260 = vld [vmem:[%s1 + $0xa8] sm:$0xf]
    %v261 = vld [vmem:[%s1 + $0xac] sm:$0xf]
    %v262 = vld [vmem:[%s1 + $0xb0] sm:$0xf]
    %v263 = vld [vmem:[%s1 + $0xb4] sm:$0xf]
    %v264 = vld [vmem:[%s1 + $0xb8] sm:$0xf]
    %v265 = vld [vmem:[%s1 + $0xbc] sm:$0xf]
    %v266 = vld [vmem:[%s1 + $0xc0] sm:$0xf]
    %v267 = vld [vmem:[%s1 + $0xc4] sm:$0xf]
    %v268 = vld [vmem:[%s1 + $0xc8] sm:$0xf]
    %v269 = vld [vmem:[%s1 + $0xcc] sm:$0xf]
    %v270 = vld [vmem:[%s1 + $0xd0] sm:$0xf]
    %v271 = vld [vmem:[%s1 + $0xd4] sm:$0xf]
    %v272 = vld [vmem:[%s1 + $0xd8] sm:$0xf]
    %v273 = vld [vmem:[%s1 + $0xdc] sm:$0xf]
    %v274 = vld [vmem:[%s1 + $0xe0] sm:$0xf]
    %v275 = vld [vmem:[%s1 + $0xe4] sm:$0xf]
    %v276 = vld [vmem:[%s1 + $0xe8] sm:$0xf]
    %v277 = vld [vmem:[%s1 + $0xec] sm:$0xf]
    %v278 = vld [vmem:[%s1 + $0xf0] sm:$0xf]
    %v279 = vld [vmem:[%s1 + $0xf4] sm:$0xf]
    %v280 = vld [vmem:[%s1 + $0xf8] sm:$0xf]
    %v281 = vld [vmem:[%s1 + $0xfc] sm:$0xf]
    %v282 = vld [vmem:[%s1 + $0x100] sm:$0xf]
    %v283 = vld [vmem:[%s1 + $0x104] sm:$0xf]
    %v284 = vld [vmem:[%s1 + $0x108] sm:$0xf]
    %v285 = vld [vmem:[%s1 + $0x10c] sm:$0xf]
    %v286 = vld [vmem:[%s1 + $0x110] sm:$0xf]
    %v287 = vld [vmem:[%s1 + $0x114] sm:$0xf]
    %v288 = vld [vmem:[%s1 + $0x118] sm:$0xf]
    %v289 = vld [vmem:[%s1 + $0x11c] sm:$0xf]
    %v290 = vld [vmem:[%s1 + $0x120] sm:$0xf]
    %v291 = vld [vmem:[%s1 + $0x124] sm:$0xf]
    %v292 = vld [vmem:[%s1 + $0x128] sm:$0xf]
    %v293 = vld [vmem:[%s1 + $0x12c] sm:$0xf]
    %v294 = vld [vmem:[%s1 + $0x130] sm:$0xf]
    %v295 = vld [vmem:[%s1 + $0x134] sm:$0xf]
    %v296 = vld [vmem:[%s1 + $0x138] sm:$0xf]
    %v297 = vld [vmem:[%s1 + $0x13c] sm:$0xf]
    %v298 = vld [vmem:[%s1 + $0x140] sm:$0xf]
    %v299 = vld [vmem:[%s1 + $0x144] sm:$0xf]
    %v300 = vld [vmem:[%s1 + $0x148] sm:$0xf]
    %v301 = vld [vmem:[%s1 + $0x14c] sm:$0xf]
    %v302 = vld [vmem:[%s1 + $0x150] sm:$0xf]
    %v303 = vld [vmem:[%s1 + $0x154] sm:$0xf]
    %v304 = vld [vmem:[%s1 + $0x158] sm:$0xf]
    %v305 = vld [vmem:[%s1 + $0x15c] sm:$0xf]
    %v306 = vld [vmem:[%s1 + $0x160] sm:$0xf]
    %v307 = vld [vmem:[%s1 + $0x164] sm:$0xf]
    %v308 = vld [vmem:[%s1 + $0x168] sm:$0xf]
    %v309 = vld [vmem:[%s1 + $0x16c] sm:$0xf]
    %v310 = vld [vmem:[%s1 + $0x170] sm:$0xf]
    %v311 = vld [vmem:[%s1 + $0x174] sm:$0xf]
    %v312 = vld [vmem:[%s1 + $0x178] sm:$0xf]
    %v313 = vld [vmem:[%s1 + $0x17c] sm:$0xf]
    %v314 = vld [vmem:[%s1 + $0x180] sm:$0xf]
    %v315 = vld [vmem:[%s1 + $0x184] sm:$0xf]
    %v316 = vld [vmem:[%s1 + $0x188] sm:$0xf]
    %v317 = vld [vmem:[%s1 + $0x18c] sm:$0xf]
    %v318 = vld [vmem:[%s1 + $0x190] sm:$0xf]
    %v319 = vld [vmem:[%s1 + $0x194] sm:$0xf]
    %v320 = vld [vmem:[%s1 + $0x198] sm:$0xf]
    %v321 = vld [vmem:[%s1 + $0x19c] sm:$0xf]
    %v322 = vld [vmem:[%s1 + $0x1a0] sm:$0xf]
    %v323 = vld [vmem:[%s1 + $0x1a4] sm:$0xf]
    %v324 = vld [vmem:[%s1 + $0x1a8] sm:$0xf]
    %v325 = vld [vmem:[%s1 + $0x1ac] sm:$0xf]
    %v326 = vld [vmem:[%s1 + $0x1b0] sm:$0xf]
    %v327 = vld [vmem:[%s1 + $0x1b4] sm:$0xf]
    %v328 = vld [vmem:[%s1 + $0x1b8] sm:$0xf]
    %v329 = vld [vmem:[%s1 + $0x1bc] sm:$0xf]
    %v330 = vld [vmem:[%s1 + $0x1c0] sm:$0xf]
    %v331 = vld [vmem:[%s1 + $0x1c4] sm:$0xf]
    %v332 = vld [vmem:[%s1 + $0x1c8] sm:$0xf]
    %v333 = vld [vmem:[%s1 + $0x1cc] sm:$0xf]
    %v334 = vld [vmem:[%s1 + $0x1d0] sm:$0xf]
    %v335 = vld [vmem:[%s1 + $0x1d4] sm:$0xf]
    %v336 = vld [vmem:[%s1 + $0x1d8] sm:$0xf]
    %v337 = vld [vmem:[%s1 + $0x1dc] sm:$0xf]
    %v338 = vld [vmem:[%s1 + $0x1e0] sm:$0xf]
    %v339 = vld [vmem:[%s1 + $0x1e4] sm:$0xf]
    %v340 = vld [vmem:[%s1 + $0x1e8] sm:$0xf]
    %v341 = vld [vmem:[%s1 + $0x1ec] sm:$0xf]
    %v342 = vld [vmem:[%s1 + $0x1f0] sm:$0xf]
    %v343 = vld [vmem:[%s1 + $0x1f4] sm:$0xf]
    %v344 = vld [vmem:[%s1 + $0x1f8] sm:$0xf]
    %v345 = vld [vmem:[%s1 + $0x1fc] sm:$0xf]
    %v346 = vld [vmem:[%s1 + $0x200] sm:$0xf]
    %v347 = vld [vmem:[%s1 + $0x204] sm:$0xf]
    %v348 = vld [vmem:[%s1 + $0x208] sm:$0xf]
    %v349 = vld [vmem:[%s1 + $0x20c] sm:$0xf]
    %v350 = vld [vmem:[%s1 + $0x210] sm:$0xf]
    %v351 = vld [vmem:[%s1 + $0x214] sm:$0xf]
    %v352 = vld [vmem:[%s1 + $0x218] sm:$0xf]
    %v353 = vld [vmem:[%s1 + $0x21c] sm:$0xf]
    %v354 = vld [vmem:[%s1 + $0x220] sm:$0xf]
    %v355 = vld [vmem:[%s1 + $0x224] sm:$0xf]
    %v356 = vld [vmem:[%s1 + $0x228] sm:$0xf]
    %v357 = vld [vmem:[%s1 + $0x22c] sm:$0xf]
    %v358 = vld [vmem:[%s1 + $0x230] sm:$0xf]
    %v359 = vld [vmem:[%s1 + $0x234] sm:$0xf]
    %v360 = vld [vmem:[%s1 + $0x238] sm:$0xf]
    %v361 = vld [vmem:[%s1 + $0x23c] sm:$0xf]
    %v362 = vld [vmem:[%s1 + $0x240] sm:$0xf]
    %v363 = vld [vmem:[%s1 + $0x244] sm:$0xf]
    %v364 = vld [vmem:[%s1 + $0x248] sm:$0xf]
    %v365 = vld [vmem:[%s1 + $0x24c] sm:$0xf]
    %v366 = vld [vmem:[%s1 + $0x250] sm:$0xf]
    %v367 = vld [vmem:[%s1 + $0x254] sm:$0xf]
    %v368 = vld [vmem:[%s1 + $0x258] sm:$0xf]
    %v369 = vld [vmem:[%s1 + $0x25c] sm:$0xf]
    %v370 = vld [vmem:[%s1 + $0x260] sm:$0xf]
    %v371 = vld [vmem:[%s1 + $0x264] sm:$0xf]
    %v372 = vld [vmem:[%s1 + $0x268] sm:$0xf]
    %v373 = vld [vmem:[%s1 + $0x26c] sm:$0xf]
    %v374 = vld [vmem:[%s1 + $0x270] sm:$0xf]
    %v375 = vld [vmem:[%s1 + $0x274] sm:$0xf]
    %v376 = vld [vmem:[%s1 + $0x278] sm:$0xf]
    %v377 = vld [vmem:[%s1 + $0x27c] sm:$0xf]
    %v378 = vld [vmem:[%s1 + $0x280] sm:$0xf]
    %v379 = vld [vmem:[%s1 + $0x284] sm:$0xf]
    %v380 = vld [vmem:[%s1 + $0x288] sm:$0xf]
    %v381 = vld [vmem:[%s1 + $0x28c] sm:$0xf]
    %v382 = vld [vmem:[%s1 + $0x290] sm:$0xf]
    %v383 = vld [vmem:[%s1 + $0x294] sm:$0xf]
    %v384 = vld [vmem:[%s1 + $0x298] sm:$0xf]
    %v385 = vld [vmem:[%s1 + $0x29c] sm:$0xf]
    %v386 = vld [vmem:[%s1 + $0x2a0] sm:$0xf]
    %v387 = vld [vmem:[%s1 + $0x2a4] sm:$0xf]
    %v388 = vld [vmem:[%s1 + $0x2a8] sm:$0xf]
    %v389 = vld [vmem:[%s1 + $0x2ac] sm:$0xf]
    %v390 = vld [vmem:[%s1 + $0x2b0] sm:$0xf]
    %v391 = vld [vmem:[%s1 + $0x2b4] sm:$0xf]
    %v392 = vld [vmem:[%s1 + $0x2b8] sm:$0xf]
    %v393 = vld [vmem:[%s1 + $0x2bc] sm:$0xf]
    %v394 = vld [vmem:[%s1 + $0x2c0] sm:$0xf]
    %v395 = vld [vmem:[%s1 + $0x2c4] sm:$0xf]
    %v396 = vld [vmem:[%s1 + $0x2c8] sm:$0xf]
    %v397 = vld [vmem:[%s1 + $0x2cc] sm:$0xf]
    %v398 = vld [vmem:[%s1 + $0x2d0] sm:$0xf]
    %v399 = vld [vmem:[%s1 + $0x2d4] sm:$0xf]
    %v400 = vld [vmem:[%s1 + $0x2d8] sm:$0xf]
    %v401 = vld [vmem:[%s1 + $0x2dc] sm:$0xf]
    %v402 = vld [vmem:[%s1 + $0x2e0] sm:$0xf]
    %v403 = vld [vmem:[%s1 + $0x2e4] sm:$0xf]
    %v404 = vld [vmem:[%s1 + $0x2e8] sm:$0xf]
    %v405 = vld [vmem:[%s1 + $0x2ec] sm:$0xf]
    %v406 = vld [vmem:[%s1 + $0x2f0] sm:$0xf]
    %v407 = vld [vmem:[%s1 + $0x2f4] sm:$0xf]
    %v408 = vld [vmem:[%s1 + $0x2f8] sm:$0xf]
    %v409 = vld [vmem:[%s1 + $0x2fc] sm:$0xf]
    %v410 = vld [vmem:[%s1 + $0x300] sm:$0xf]
    %v411 = vld [vmem:[%s1 + $0x304] sm:$0xf]
    %v412 = vld [vmem:[%s1 + $0x308] sm:$0xf]
    %v413 = vld [vmem:[%s1 + $0x30c] sm:$0xf]
    %v414 = vld [vmem:[%s1 + $0x310] sm:$0xf]
    %v415 = vld [vmem:[%s1 + $0x314] sm:$0xf]
    %v416 = vld [vmem:[%s1 + $0x318] sm:$0xf]
    %v417 = vld [vmem:[%s1 + $0x31c] sm:$0xf]
    %v418 = vld [vmem:[%s1 + $0x320] sm:$0xf]
    %v419 = vld [vmem:[%s1 + $0x324] sm:$0xf]
    %v420 = vld [vmem:[%s1 + $0x328] sm:$0xf]
    %v421 = vld [vmem:[%s1 + $0x32c] sm:$0xf]
    %v422 = vld [vmem:[%s1 + $0x330] sm:$0xf]
    %v423 = vld [vmem:[%s1 + $0x334] sm:$0xf]
    %v424 = vld [vmem:[%s1 + $0x338] sm:$0xf]
    %v425 = vld [vmem:[%s1 + $0x33c] sm:$0xf]
    %v426 = vld [vmem:[%s1 + $0x340] sm:$0xf]
    %v427 = vld [vmem:[%s1 + $0x344] sm:$0xf]
    %v428 = vld [vmem:[%s1 + $0x348] sm:$0xf]
    %v429 = vld [vmem:[%s1 + $0x34c] sm:$0xf]
    %v430 = vld [vmem:[%s1 + $0x350] sm:$0xf]
    %v431 = vld [vmem:[%s1 + $0x354] sm:$0xf]
    %v432 = vld [vmem:[%s1 + $0x358] sm:$0xf]
    %v433 = vld [vmem:[%s1 + $0x35c] sm:$0xf]
    %v434 = vld [vmem:[%s1 + $0x360] sm:$0xf]
    %v435 = vld [vmem:[%s1 + $0x364] sm:$0xf]
    %v436 = vld [vmem:[%s1 + $0x368] sm:$0xf]
    %v437 = vld [vmem:[%s1 + $0x36c] sm:$0xf]
    %v438 = vld [vmem:[%s1 + $0x370] sm:$0xf]
    %v439 = vld [vmem:[%s1 + $0x374] sm:$0xf]
    %v440 = vld [vmem:[%s1 + $0x378] sm:$0xf]
    %v441 = vld [vmem:[%s1 + $0x37c] sm:$0xf]
    %v442 = vld [vmem:[%s1 + $0x380] sm:$0xf]
    %v443 = vld [vmem:[%s1 + $0x384] sm:$0xf]
    %v444 = vld [vmem:[%s1 + $0x388] sm:$0xf]
    %v445 = vld [vmem:[%s1 + $0x38c] sm:$0xf]
    %v446 = vld [vmem:[%s1 + $0x390] sm:$0xf]
    %v447 = vld [vmem:[%s1 + $0x394] sm:$0xf]
    %v448 = vld [vmem:[%s1 + $0x398] sm:$0xf]
    %v449 = vld [vmem:[%s1 + $0x39c] sm:$0xf]
    %v450 = vld [vmem:[%s1 + $0x3a0] sm:$0xf]
    %v451 = vld [vmem:[%s1 + $0x3a4] sm:$0xf]
    %v452 = vld [vmem:[%s1 + $0x3a8] sm:$0xf]
    %v453 = vld [vmem:[%s1 + $0x3ac] sm:$0xf]
    %v454 = vld [vmem:[%s1 + $0x3b0] sm:$0xf]
    %v455 = vld [vmem:[%s1 + $0x3b4] sm:$0xf]
    %v456 = vld [vmem:[%s1 + $0x3b8] sm:$0xf]
    %v457 = vld [vmem:[%s1 + $0x3bc] sm:$0xf]
    %v458 = vld [vmem:[%s1 + $0x3c0] sm:$0xf]
    %v459 = vld [vmem:[%s1 + $0x3c4] sm:$0xf]
    %v460 = vld [vmem:[%s1 + $0x3c8] sm:$0xf]
    %v461 = vld [vmem:[%s1 + $0x3cc] sm:$0xf]
    %v462 = vld [vmem:[%s1 + $0x3d0] sm:$0xf]
    %v463 = vld [vmem:[%s1 + $0x3d4] sm:$0xf]
    %v464 = vld [vmem:[%s1 + $0x3d8] sm:$0xf]
    %v465 = vld [vmem:[%s1 + $0x3dc] sm:$0xf]
    %v466 = vld [vmem:[%s1 + $0x3e0] sm:$0xf]
    %v467 = vld [vmem:[%s1 + $0x3e4] sm:$0xf]
    %v468 = vld [vmem:[%s1 + $0x3e8] sm:$0xf]
    %v469 = vld [vmem:[%s1 + $0x3ec] sm:$0xf]
    %v470 = vld [vmem:[%s1 + $0x3f0] sm:$0xf]
    %v471 = vld [vmem:[%s1 + $0x3f4] sm:$0xf]
    %v472 = vld [vmem:[%s1 + $0x3f8] sm:$0xf]
    %v473 = vld [vmem:[%s1 + $0x3fc] sm:$0xf]
    %v474 = vperm.slane %v28, 0
    %v507 = vunpack.c.l.b16 %v186
    %v508 = vunpack.c.h.b16 %v186
    %v509 = vunpack.c.l.b16 %v187
    %v510 = vunpack.c.h.b16 %v187
    %v511 = vunpack.c.l.b16 %v188
    %v512 = vunpack.c.h.b16 %v188
    %v513 = vunpack.c.l.b16 %v189
    %v514 = vunpack.c.h.b16 %v189
    %v515 = vunpack.c.l.b16 %v190
    %v516 = vunpack.c.h.b16 %v190
    %v517 = vunpack.c.l.b16 %v191
    %v518 = vunpack.c.h.b16 %v191
    %v519 = vunpack.c.l.b16 %v192
    %v520 = vunpack.c.h.b16 %v192
    %v521 = vunpack.c.l.b16 %v193
    %v522 = vunpack.c.h.b16 %v193
    %v523 = vunpack.c.l.b16 %v194
    %v524 = vunpack.c.h.b16 %v194
    %v525 = vunpack.c.l.b16 %v195
    %v526 = vunpack.c.h.b16 %v195
    %v527 = vunpack.c.l.b16 %v196
    %v528 = vunpack.c.h.b16 %v196
    %v529 = vunpack.c.l.b16 %v197
    %v530 = vunpack.c.h.b16 %v197
    %v531 = vunpack.c.l.b16 %v198
    %v532 = vunpack.c.h.b16 %v198
    %v533 = vunpack.c.l.b16 %v199
    %v534 = vunpack.c.h.b16 %v199
    %v535 = vunpack.c.l.b16 %v200
    %v536 = vunpack.c.h.b16 %v200
    %v537 = vunpack.c.l.b16 %v201
    %v538 = vunpack.c.h.b16 %v201
    %v539 = vunpack.c.l.b16 %v202
    %v540 = vunpack.c.h.b16 %v202
    %v541 = vunpack.c.l.b16 %v203
    %v542 = vunpack.c.h.b16 %v203
    %v543 = vunpack.c.l.b16 %v204
    %v544 = vunpack.c.h.b16 %v204
    %v545 = vunpack.c.l.b16 %v205
    %v546 = vunpack.c.h.b16 %v205
    %v547 = vunpack.c.l.b16 %v206
    %v548 = vunpack.c.h.b16 %v206
    %v549 = vunpack.c.l.b16 %v207
    %v550 = vunpack.c.h.b16 %v207
    %v551 = vunpack.c.l.b16 %v208
    %v552 = vunpack.c.h.b16 %v208
    %v553 = vunpack.c.l.b16 %v209
    %v554 = vunpack.c.h.b16 %v209
    %v555 = vunpack.c.l.b16 %v210
    %v556 = vunpack.c.h.b16 %v210
    %v557 = vunpack.c.l.b16 %v211
    %v558 = vunpack.c.h.b16 %v211
    %v559 = vunpack.c.l.b16 %v212
    %v560 = vunpack.c.h.b16 %v212
    %v561 = vunpack.c.l.b16 %v213
    %v562 = vunpack.c.h.b16 %v213
    %v563 = vunpack.c.l.b16 %v214
    %v564 = vunpack.c.h.b16 %v214
    %v565 = vunpack.c.l.b16 %v215
    %v566 = vunpack.c.h.b16 %v215
    %v567 = vunpack.c.l.b16 %v216
    %v568 = vunpack.c.h.b16 %v216
    %v569 = vunpack.c.l.b16 %v217
    %v570 = vunpack.c.h.b16 %v217
    %v571 = vpack.c.b16 %v523, %v507
    %v572 = vpack.c.b16 %v524, %v508
    %v573 = vpack.c.b16 %v525, %v509
    %v574 = vpack.c.b16 %v526, %v510
    %v575 = vpack.c.b16 %v527, %v511
    %v576 = vpack.c.b16 %v528, %v512
    %v577 = vpack.c.b16 %v529, %v513
    %v578 = vpack.c.b16 %v530, %v514
    %v579 = vpack.c.b16 %v531, %v515
    %v580 = vpack.c.b16 %v532, %v516
    %v581 = vpack.c.b16 %v533, %v517
    %v582 = vpack.c.b16 %v534, %v518
    %v583 = vpack.c.b16 %v535, %v519
    %v584 = vpack.c.b16 %v536, %v520
    %v585 = vpack.c.b16 %v537, %v521
    %v586 = vpack.c.b16 %v538, %v522
    %v587 = vpack.c.b16 %v555, %v539
    %v588 = vpack.c.b16 %v556, %v540
    %v589 = vpack.c.b16 %v557, %v541
    %v590 = vpack.c.b16 %v558, %v542
    %v591 = vpack.c.b16 %v559, %v543
    %v592 = vpack.c.b16 %v560, %v544
    %v593 = vpack.c.b16 %v561, %v545
    %v594 = vpack.c.b16 %v562, %v546
    %v595 = vpack.c.b16 %v563, %v547
    %v596 = vpack.c.b16 %v564, %v548
    %v597 = vpack.c.b16 %v565, %v549
    %v598 = vpack.c.b16 %v566, %v550
    %v599 = vpack.c.b16 %v567, %v551
    %v600 = vpack.c.b16 %v568, %v552
    %v601 = vpack.c.b16 %v569, %v553
    %v602 = vpack.c.b16 %v570, %v554
    %v891 = vunpack.c.l.b16 %v218
    %v892 = vunpack.c.l.b16 %v219
    %v893 = vunpack.c.l.b16 %v220
    %v894 = vunpack.c.l.b16 %v221
    %v895 = vunpack.c.l.b16 %v222
    %v896 = vunpack.c.l.b16 %v223
    %v897 = vunpack.c.l.b16 %v224
    %v898 = vunpack.c.l.b16 %v225
    %v899 = vunpack.c.l.b16 %v226
    %v900 = vunpack.c.l.b16 %v227
    %v901 = vunpack.c.l.b16 %v228
    %v902 = vunpack.c.l.b16 %v229
    %v903 = vunpack.c.l.b16 %v230
    %v904 = vunpack.c.l.b16 %v231
    %v905 = vunpack.c.l.b16 %v232
    %v906 = vunpack.c.l.b16 %v233
    %v907 = vunpack.c.l.b16 %v234
    %v908 = vunpack.c.l.b16 %v235
    %v909 = vunpack.c.l.b16 %v236
    %v910 = vunpack.c.l.b16 %v237
    %v911 = vunpack.c.l.b16 %v238
    %v912 = vunpack.c.l.b16 %v239
    %v913 = vunpack.c.l.b16 %v240
    %v914 = vunpack.c.l.b16 %v241
    %v915 = vunpack.c.l.b16 %v242
    %v916 = vunpack.c.l.b16 %v243
    %v917 = vunpack.c.l.b16 %v244
    %v918 = vunpack.c.l.b16 %v245
    %v919 = vunpack.c.l.b16 %v246
    %v920 = vunpack.c.l.b16 %v247
    %v921 = vunpack.c.l.b16 %v248
    %v922 = vunpack.c.l.b16 %v249
    %v923 = vunpack.c.l.b16 %v250
    %v924 = vunpack.c.l.b16 %v251
    %v925 = vunpack.c.l.b16 %v252
    %v926 = vunpack.c.l.b16 %v253
    %v927 = vunpack.c.l.b16 %v254
    %v928 = vunpack.c.l.b16 %v255
    %v929 = vunpack.c.l.b16 %v256
    %v930 = vunpack.c.l.b16 %v257
    %v931 = vunpack.c.l.b16 %v258
    %v932 = vunpack.c.l.b16 %v259
    %v933 = vunpack.c.l.b16 %v260
    %v934 = vunpack.c.l.b16 %v261
    %v935 = vunpack.c.l.b16 %v262
    %v936 = vunpack.c.l.b16 %v263
    %v937 = vunpack.c.l.b16 %v264
    %v938 = vunpack.c.l.b16 %v265
    %v939 = vunpack.c.l.b16 %v266
    %v940 = vunpack.c.l.b16 %v267
    %v941 = vunpack.c.l.b16 %v268
    %v942 = vunpack.c.l.b16 %v269
    %v943 = vunpack.c.l.b16 %v270
    %v944 = vunpack.c.l.b16 %v271
    %v945 = vunpack.c.l.b16 %v272
    %v946 = vunpack.c.l.b16 %v273
    %v947 = vunpack.c.l.b16 %v274
    %v948 = vunpack.c.l.b16 %v275
    %v949 = vunpack.c.l.b16 %v276
    %v950 = vunpack.c.l.b16 %v277
    %v951 = vunpack.c.l.b16 %v278
    %v952 = vunpack.c.l.b16 %v279
    %v953 = vunpack.c.l.b16 %v280
    %v954 = vunpack.c.l.b16 %v281
    %v955 = vunpack.c.l.b16 %v282
    %v956 = vunpack.c.l.b16 %v283
    %v957 = vunpack.c.l.b16 %v284
    %v958 = vunpack.c.l.b16 %v285
    %v959 = vunpack.c.l.b16 %v286
    %v960 = vunpack.c.l.b16 %v287
    %v961 = vunpack.c.l.b16 %v288
    %v962 = vunpack.c.l.b16 %v289
    %v963 = vunpack.c.l.b16 %v290
    %v964 = vunpack.c.l.b16 %v291
    %v965 = vunpack.c.l.b16 %v292
    %v966 = vunpack.c.l.b16 %v293
    %v967 = vunpack.c.l.b16 %v294
    %v968 = vunpack.c.l.b16 %v295
    %v969 = vunpack.c.l.b16 %v296
    %v970 = vunpack.c.l.b16 %v297
    %v971 = vunpack.c.l.b16 %v298
    %v972 = vunpack.c.l.b16 %v299
    %v973 = vunpack.c.l.b16 %v300
    %v974 = vunpack.c.l.b16 %v301
    %v975 = vunpack.c.l.b16 %v302
    %v976 = vunpack.c.l.b16 %v303
    %v977 = vunpack.c.l.b16 %v304
    %v978 = vunpack.c.l.b16 %v305
    %v979 = vunpack.c.l.b16 %v306
    %v980 = vunpack.c.l.b16 %v307
    %v981 = vunpack.c.l.b16 %v308
    %v982 = vunpack.c.l.b16 %v309
    %v983 = vunpack.c.l.b16 %v310
    %v984 = vunpack.c.l.b16 %v311
    %v985 = vunpack.c.l.b16 %v312
    %v986 = vunpack.c.l.b16 %v313
    %v987 = vunpack.c.l.b16 %v314
    %v988 = vunpack.c.l.b16 %v315
    %v989 = vunpack.c.l.b16 %v316
    %v990 = vunpack.c.l.b16 %v317
    %v991 = vunpack.c.l.b16 %v318
    %v992 = vunpack.c.l.b16 %v319
    %v993 = vunpack.c.l.b16 %v320
    %v994 = vunpack.c.l.b16 %v321
    %v995 = vunpack.c.l.b16 %v322
    %v996 = vunpack.c.l.b16 %v323
    %v997 = vunpack.c.l.b16 %v324
    %v998 = vunpack.c.l.b16 %v325
    %v999 = vunpack.c.l.b16 %v326
    %v1000 = vunpack.c.l.b16 %v327
    %v1001 = vunpack.c.l.b16 %v328
    %v1002 = vunpack.c.l.b16 %v329
    %v1003 = vunpack.c.l.b16 %v330
    %v1004 = vunpack.c.l.b16 %v331
    %v1005 = vunpack.c.l.b16 %v332
    %v1006 = vunpack.c.l.b16 %v333
    %v1007 = vunpack.c.l.b16 %v334
    %v1008 = vunpack.c.l.b16 %v335
    %v1009 = vunpack.c.l.b16 %v336
    %v1010 = vunpack.c.l.b16 %v337
    %v1011 = vunpack.c.l.b16 %v338
    %v1012 = vunpack.c.l.b16 %v339
    %v1013 = vunpack.c.l.b16 %v340
    %v1014 = vunpack.c.l.b16 %v341
    %v1015 = vunpack.c.l.b16 %v342
    %v1016 = vunpack.c.l.b16 %v343
    %v1017 = vunpack.c.l.b16 %v344
    %v1018 = vunpack.c.l.b16 %v345
    %v1019 = vunpack.c.l.b16 %v346
    %v1020 = vunpack.c.l.b16 %v347
    %v1021 = vunpack.c.l.b16 %v348
    %v1022 = vunpack.c.l.b16 %v349
    %v1023 = vunpack.c.l.b16 %v350
    %v1024 = vunpack.c.l.b16 %v351
    %v1025 = vunpack.c.l.b16 %v352
    %v1026 = vunpack.c.l.b16 %v353
    %v1027 = vunpack.c.l.b16 %v354
    %v1028 = vunpack.c.l.b16 %v355
    %v1029 = vunpack.c.l.b16 %v356
    %v1030 = vunpack.c.l.b16 %v357
    %v1031 = vunpack.c.l.b16 %v358
    %v1032 = vunpack.c.l.b16 %v359
    %v1033 = vunpack.c.l.b16 %v360
    %v1034 = vunpack.c.l.b16 %v361
    %v1035 = vunpack.c.l.b16 %v362
    %v1036 = vunpack.c.l.b16 %v363
    %v1037 = vunpack.c.l.b16 %v364
    %v1038 = vunpack.c.l.b16 %v365
    %v1039 = vunpack.c.l.b16 %v366
    %v1040 = vunpack.c.l.b16 %v367
    %v1041 = vunpack.c.l.b16 %v368
    %v1042 = vunpack.c.l.b16 %v369
    %v1043 = vunpack.c.l.b16 %v370
    %v1044 = vunpack.c.l.b16 %v371
    %v1045 = vunpack.c.l.b16 %v372
    %v1046 = vunpack.c.l.b16 %v373
    %v1047 = vunpack.c.l.b16 %v374
    %v1048 = vunpack.c.l.b16 %v375
    %v1049 = vunpack.c.l.b16 %v376
    %v1050 = vunpack.c.l.b16 %v377
    %v1051 = vunpack.c.l.b16 %v378
    %v1052 = vunpack.c.l.b16 %v379
    %v1053 = vunpack.c.l.b16 %v380
    %v1054 = vunpack.c.l.b16 %v381
    %v1055 = vunpack.c.l.b16 %v382
    %v1056 = vunpack.c.l.b16 %v383
    %v1057 = vunpack.c.l.b16 %v384
    %v1058 = vunpack.c.l.b16 %v385
    %v1059 = vunpack.c.l.b16 %v386
    %v1060 = vunpack.c.l.b16 %v387
    %v1061 = vunpack.c.l.b16 %v388
    %v1062 = vunpack.c.l.b16 %v389
    %v1063 = vunpack.c.l.b16 %v390
    %v1064 = vunpack.c.l.b16 %v391
    %v1065 = vunpack.c.l.b16 %v392
    %v1066 = vunpack.c.l.b16 %v393
    %v1067 = vunpack.c.l.b16 %v394
    %v1068 = vunpack.c.l.b16 %v395
    %v1069 = vunpack.c.l.b16 %v396
    %v1070 = vunpack.c.l.b16 %v397
    %v1071 = vunpack.c.l.b16 %v398
    %v1072 = vunpack.c.l.b16 %v399
    %v1073 = vunpack.c.l.b16 %v400
    %v1074 = vunpack.c.l.b16 %v401
    %v1075 = vunpack.c.l.b16 %v402
    %v1076 = vunpack.c.l.b16 %v403
    %v1077 = vunpack.c.l.b16 %v404
    %v1078 = vunpack.c.l.b16 %v405
    %v1079 = vunpack.c.l.b16 %v406
    %v1080 = vunpack.c.l.b16 %v407
    %v1081 = vunpack.c.l.b16 %v408
    %v1082 = vunpack.c.l.b16 %v409
    %v1083 = vunpack.c.l.b16 %v410
    %v1084 = vunpack.c.l.b16 %v411
    %v1085 = vunpack.c.l.b16 %v412
    %v1086 = vunpack.c.l.b16 %v413
    %v1087 = vunpack.c.l.b16 %v414
    %v1088 = vunpack.c.l.b16 %v415
    %v1089 = vunpack.c.l.b16 %v416
    %v1090 = vunpack.c.l.b16 %v417
    %v1091 = vunpack.c.l.b16 %v418
    %v1092 = vunpack.c.l.b16 %v419
    %v1093 = vunpack.c.l.b16 %v420
    %v1094 = vunpack.c.l.b16 %v421
    %v1095 = vunpack.c.l.b16 %v422
    %v1096 = vunpack.c.l.b16 %v423
    %v1097 = vunpack.c.l.b16 %v424
    %v1098 = vunpack.c.l.b16 %v425
    %v1099 = vunpack.c.l.b16 %v426
    %v1100 = vunpack.c.l.b16 %v427
    %v1101 = vunpack.c.l.b16 %v428
    %v1102 = vunpack.c.l.b16 %v429
    %v1103 = vunpack.c.l.b16 %v430
    %v1104 = vunpack.c.l.b16 %v431
    %v1105 = vunpack.c.l.b16 %v432
    %v1106 = vunpack.c.l.b16 %v433
    %v1107 = vunpack.c.l.b16 %v434
    %v1108 = vunpack.c.l.b16 %v435
    %v1109 = vunpack.c.l.b16 %v436
    %v1110 = vunpack.c.l.b16 %v437
    %v1111 = vunpack.c.l.b16 %v438
    %v1112 = vunpack.c.l.b16 %v439
    %v1113 = vunpack.c.l.b16 %v440
    %v1114 = vunpack.c.l.b16 %v441
    %v1115 = vunpack.c.l.b16 %v442
    %v1116 = vunpack.c.l.b16 %v443
    %v1117 = vunpack.c.l.b16 %v444
    %v1118 = vunpack.c.l.b16 %v445
    %v1119 = vunpack.c.l.b16 %v446
    %v1120 = vunpack.c.l.b16 %v447
    %v1121 = vunpack.c.l.b16 %v448
    %v1122 = vunpack.c.l.b16 %v449
    %v1123 = vunpack.c.l.b16 %v450
    %v1124 = vunpack.c.l.b16 %v451
    %v1125 = vunpack.c.l.b16 %v452
    %v1126 = vunpack.c.l.b16 %v453
    %v1127 = vunpack.c.l.b16 %v454
    %v1128 = vunpack.c.l.b16 %v455
    %v1129 = vunpack.c.l.b16 %v456
    %v1130 = vunpack.c.l.b16 %v457
    %v1131 = vunpack.c.l.b16 %v458
    %v1132 = vunpack.c.l.b16 %v459
    %v1133 = vunpack.c.l.b16 %v460
    %v1134 = vunpack.c.l.b16 %v461
    %v1135 = vunpack.c.l.b16 %v462
    %v1136 = vunpack.c.l.b16 %v463
    %v1137 = vunpack.c.l.b16 %v464
    %v1138 = vunpack.c.l.b16 %v465
    %v1139 = vunpack.c.l.b16 %v466
    %v1140 = vunpack.c.l.b16 %v467
    %v1141 = vunpack.c.l.b16 %v468
    %v1142 = vunpack.c.l.b16 %v469
    %v1143 = vunpack.c.l.b16 %v470
    %v1144 = vunpack.c.l.b16 %v471
    %v1145 = vunpack.c.l.b16 %v472
    %v1146 = vunpack.c.l.b16 %v473
    %v1147 = vpack.c.b16 %v892, %v891
    %v1148 = vpack.c.b16 %v894, %v893
    %v1149 = vpack.c.b16 %v896, %v895
    %v1150 = vpack.c.b16 %v898, %v897
    %v1151 = vpack.c.b16 %v900, %v899
    %v1152 = vpack.c.b16 %v902, %v901
    %v1153 = vpack.c.b16 %v904, %v903
    %v1154 = vpack.c.b16 %v906, %v905
    %v1155 = vpack.c.b16 %v908, %v907
    %v1156 = vpack.c.b16 %v910, %v909
    %v1157 = vpack.c.b16 %v912, %v911
    %v1158 = vpack.c.b16 %v914, %v913
    %v1159 = vpack.c.b16 %v916, %v915
    %v1160 = vpack.c.b16 %v918, %v917
    %v1161 = vpack.c.b16 %v920, %v919
    %v1162 = vpack.c.b16 %v922, %v921
    %v1163 = vpack.c.b16 %v924, %v923
    %v1164 = vpack.c.b16 %v926, %v925
    %v1165 = vpack.c.b16 %v928, %v927
    %v1166 = vpack.c.b16 %v930, %v929
    %v1167 = vpack.c.b16 %v932, %v931
    %v1168 = vpack.c.b16 %v934, %v933
    %v1169 = vpack.c.b16 %v936, %v935
    %v1170 = vpack.c.b16 %v938, %v937
    %v1171 = vpack.c.b16 %v940, %v939
    %v1172 = vpack.c.b16 %v942, %v941
    %v1173 = vpack.c.b16 %v944, %v943
    %v1174 = vpack.c.b16 %v946, %v945
    %v1175 = vpack.c.b16 %v948, %v947
    %v1176 = vpack.c.b16 %v950, %v949
    %v1177 = vpack.c.b16 %v952, %v951
    %v1178 = vpack.c.b16 %v954, %v953
    %v1179 = vpack.c.b16 %v956, %v955
    %v1180 = vpack.c.b16 %v958, %v957
    %v1181 = vpack.c.b16 %v960, %v959
    %v1182 = vpack.c.b16 %v962, %v961
    %v1183 = vpack.c.b16 %v964, %v963
    %v1184 = vpack.c.b16 %v966, %v965
    %v1185 = vpack.c.b16 %v968, %v967
    %v1186 = vpack.c.b16 %v970, %v969
    %v1187 = vpack.c.b16 %v972, %v971
    %v1188 = vpack.c.b16 %v974, %v973
    %v1189 = vpack.c.b16 %v976, %v975
    %v1190 = vpack.c.b16 %v978, %v977
    %v1191 = vpack.c.b16 %v980, %v979
    %v1192 = vpack.c.b16 %v982, %v981
    %v1193 = vpack.c.b16 %v984, %v983
    %v1194 = vpack.c.b16 %v986, %v985
    %v1195 = vpack.c.b16 %v988, %v987
    %v1196 = vpack.c.b16 %v990, %v989
    %v1197 = vpack.c.b16 %v992, %v991
    %v1198 = vpack.c.b16 %v994, %v993
    %v1199 = vpack.c.b16 %v996, %v995
    %v1200 = vpack.c.b16 %v998, %v997
    %v1201 = vpack.c.b16 %v1000, %v999
    %v1202 = vpack.c.b16 %v1002, %v1001
    %v1203 = vpack.c.b16 %v1004, %v1003
    %v1204 = vpack.c.b16 %v1006, %v1005
    %v1205 = vpack.c.b16 %v1008, %v1007
    %v1206 = vpack.c.b16 %v1010, %v1009
    %v1207 = vpack.c.b16 %v1012, %v1011
    %v1208 = vpack.c.b16 %v1014, %v1013
    %v1209 = vpack.c.b16 %v1016, %v1015
    %v1210 = vpack.c.b16 %v1018, %v1017
    %v1211 = vpack.c.b16 %v1020, %v1019
    %v1212 = vpack.c.b16 %v1022, %v1021
    %v1213 = vpack.c.b16 %v1024, %v1023
    %v1214 = vpack.c.b16 %v1026, %v1025
    %v1215 = vpack.c.b16 %v1028, %v1027
    %v1216 = vpack.c.b16 %v1030, %v1029
    %v1217 = vpack.c.b16 %v1032, %v1031
    %v1218 = vpack.c.b16 %v1034, %v1033
    %v1219 = vpack.c.b16 %v1036, %v1035
    %v1220 = vpack.c.b16 %v1038, %v1037
    %v1221 = vpack.c.b16 %v1040, %v1039
    %v1222 = vpack.c.b16 %v1042, %v1041
    %v1223 = vpack.c.b16 %v1044, %v1043
    %v1224 = vpack.c.b16 %v1046, %v1045
    %v1225 = vpack.c.b16 %v1048, %v1047
    %v1226 = vpack.c.b16 %v1050, %v1049
    %v1227 = vpack.c.b16 %v1052, %v1051
    %v1228 = vpack.c.b16 %v1054, %v1053
    %v1229 = vpack.c.b16 %v1056, %v1055
    %v1230 = vpack.c.b16 %v1058, %v1057
    %v1231 = vpack.c.b16 %v1060, %v1059
    %v1232 = vpack.c.b16 %v1062, %v1061
    %v1233 = vpack.c.b16 %v1064, %v1063
    %v1234 = vpack.c.b16 %v1066, %v1065
    %v1235 = vpack.c.b16 %v1068, %v1067
    %v1236 = vpack.c.b16 %v1070, %v1069
    %v1237 = vpack.c.b16 %v1072, %v1071
    %v1238 = vpack.c.b16 %v1074, %v1073
    %v1239 = vpack.c.b16 %v1076, %v1075
    %v1240 = vpack.c.b16 %v1078, %v1077
    %v1241 = vpack.c.b16 %v1080, %v1079
    %v1242 = vpack.c.b16 %v1082, %v1081
    %v1243 = vpack.c.b16 %v1084, %v1083
    %v1244 = vpack.c.b16 %v1086, %v1085
    %v1245 = vpack.c.b16 %v1088, %v1087
    %v1246 = vpack.c.b16 %v1090, %v1089
    %v1247 = vpack.c.b16 %v1092, %v1091
    %v1248 = vpack.c.b16 %v1094, %v1093
    %v1249 = vpack.c.b16 %v1096, %v1095
    %v1250 = vpack.c.b16 %v1098, %v1097
    %v1251 = vpack.c.b16 %v1100, %v1099
    %v1252 = vpack.c.b16 %v1102, %v1101
    %v1253 = vpack.c.b16 %v1104, %v1103
    %v1254 = vpack.c.b16 %v1106, %v1105
    %v1255 = vpack.c.b16 %v1108, %v1107
    %v1256 = vpack.c.b16 %v1110, %v1109
    %v1257 = vpack.c.b16 %v1112, %v1111
    %v1258 = vpack.c.b16 %v1114, %v1113
    %v1259 = vpack.c.b16 %v1116, %v1115
    %v1260 = vpack.c.b16 %v1118, %v1117
    %v1261 = vpack.c.b16 %v1120, %v1119
    %v1262 = vpack.c.b16 %v1122, %v1121
    %v1263 = vpack.c.b16 %v1124, %v1123
    %v1264 = vpack.c.b16 %v1126, %v1125
    %v1265 = vpack.c.b16 %v1128, %v1127
    %v1266 = vpack.c.b16 %v1130, %v1129
    %v1267 = vpack.c.b16 %v1132, %v1131
    %v1268 = vpack.c.b16 %v1134, %v1133
    %v1269 = vpack.c.b16 %v1136, %v1135
    %v1270 = vpack.c.b16 %v1138, %v1137
    %v1271 = vpack.c.b16 %v1140, %v1139
    %v1272 = vpack.c.b16 %v1142, %v1141
    %v1273 = vpack.c.b16 %v1144, %v1143
    %v1274 = vpack.c.b16 %v1146, %v1145
    %1403 = vmatpush.bf16.msra.mxu0 %v1154
    %1404 = vmatpush.bf16.msra.mxu0 %v1153
    %1405 = vmatpush.bf16.msra.mxu0 %v1152
    %1406 = vmatpush.bf16.msra.mxu0 %v1151
    %1407 = vmatpush.bf16.msra.mxu0 %v1150
    %1408 = vmatpush.bf16.msra.mxu0 %v1149
    %1409 = vmatpush.bf16.msra.mxu0 %v1148
    %1410 = vmatpush.bf16.msra.mxu0 %v1147
    %1411 = vmatmul.bf16.gmra.mxu0 %v571
    %v1412 = vpop.f32.mrf.mxu0
    %v1413 = vadd.f32 %v474, %v1412
    %v1414 = vpop.f32.mrf.mxu0
    %v1415 = vadd.f32 %v474, %v1414
    %1416 = vmatmul.bf16.gmra.mxu0 %v587
    %v1417 = vpop.f32.mrf.mxu0
    %v1418 = vadd.f32 %v474, %v1417
    %v1419 = vpop.f32.mrf.mxu0
    %v1420 = vadd.f32 %v474, %v1419
    %1421 = vdwg.mxu0
    %1422 = vmatpush.bf16.msra.mxu0 %v1162
    %1423 = vmatpush.bf16.msra.mxu0 %v1161
    %1424 = vmatpush.bf16.msra.mxu0 %v1160
    %1425 = vmatpush.bf16.msra.mxu0 %v1159
    %1426 = vmatpush.bf16.msra.mxu0 %v1158
    %1427 = vmatpush.bf16.msra.mxu0 %v1157
    %1428 = vmatpush.bf16.msra.mxu0 %v1156
    %1429 = vmatpush.bf16.msra.mxu0 %v1155
    %1430 = vmatmul.bf16.gmra.mxu0 %v572
    %v1431 = vpop.f32.mrf.mxu0
    %v1432 = vadd.f32 %v1413, %v1431
    %v1433 = vpop.f32.mrf.mxu0
    %v1434 = vadd.f32 %v1415, %v1433
    %1435 = vmatmul.bf16.gmra.mxu0 %v588
    %v1436 = vpop.f32.mrf.mxu0
    %v1437 = vadd.f32 %v1418, %v1436
    %v1438 = vpop.f32.mrf.mxu0
    %v1439 = vadd.f32 %v1420, %v1438
    %1440 = vdwg.mxu0
    %1441 = vmatpush.bf16.msra.mxu0 %v1170
    %1442 = vmatpush.bf16.msra.mxu0 %v1169
    %1443 = vmatpush.bf16.msra.mxu0 %v1168
    %1444 = vmatpush.bf16.msra.mxu0 %v1167
    %1445 = vmatpush.bf16.msra.mxu0 %v1166
    %1446 = vmatpush.bf16.msra.mxu0 %v1165
    %1447 = vmatpush.bf16.msra.mxu0 %v1164
    %1448 = vmatpush.bf16.msra.mxu0 %v1163
    %1449 = vmatmul.bf16.gmra.mxu0 %v573
    %v1450 = vpop.f32.mrf.mxu0
    %v1451 = vadd.f32 %v1432, %v1450
    %v1452 = vpop.f32.mrf.mxu0
    %v1453 = vadd.f32 %v1434, %v1452
    %1454 = vmatmul.bf16.gmra.mxu0 %v589
    %v1455 = vpop.f32.mrf.mxu0
    %v1456 = vadd.f32 %v1437, %v1455
    %v1457 = vpop.f32.mrf.mxu0
    %v1458 = vadd.f32 %v1439, %v1457
    %1459 = vdwg.mxu0
    %1460 = vmatpush.bf16.msra.mxu0 %v1178
    %1461 = vmatpush.bf16.msra.mxu0 %v1177
    %1462 = vmatpush.bf16.msra.mxu0 %v1176
    %1463 = vmatpush.bf16.msra.mxu0 %v1175
    %1464 = vmatpush.bf16.msra.mxu0 %v1174
    %1465 = vmatpush.bf16.msra.mxu0 %v1173
    %1466 = vmatpush.bf16.msra.mxu0 %v1172
    %1467 = vmatpush.bf16.msra.mxu0 %v1171
    %1468 = vmatmul.bf16.gmra.mxu0 %v574
    %v1469 = vpop.f32.mrf.mxu0
    %v1470 = vadd.f32 %v1451, %v1469
    %v1471 = vpop.f32.mrf.mxu0
    %v1472 = vadd.f32 %v1453, %v1471
    %1473 = vmatmul.bf16.gmra.mxu0 %v590
    %v1474 = vpop.f32.mrf.mxu0
    %v1475 = vadd.f32 %v1456, %v1474
    %v1476 = vpop.f32.mrf.mxu0
    %v1477 = vadd.f32 %v1458, %v1476
    %1478 = vdwg.mxu0
    %1479 = vmatpush.bf16.msra.mxu0 %v1186
    %1480 = vmatpush.bf16.msra.mxu0 %v1185
    %1481 = vmatpush.bf16.msra.mxu0 %v1184
    %1482 = vmatpush.bf16.msra.mxu0 %v1183
    %1483 = vmatpush.bf16.msra.mxu0 %v1182
    %1484 = vmatpush.bf16.msra.mxu0 %v1181
    %1485 = vmatpush.bf16.msra.mxu0 %v1180
    %1486 = vmatpush.bf16.msra.mxu0 %v1179
    %1487 = vmatmul.bf16.gmra.mxu0 %v575
    %v1488 = vpop.f32.mrf.mxu0
    %v1489 = vadd.f32 %v1470, %v1488
    %v1490 = vpop.f32.mrf.mxu0
    %v1491 = vadd.f32 %v1472, %v1490
    %1492 = vmatmul.bf16.gmra.mxu0 %v591
    %v1493 = vpop.f32.mrf.mxu0
    %v1494 = vadd.f32 %v1475, %v1493
    %v1495 = vpop.f32.mrf.mxu0
    %v1496 = vadd.f32 %v1477, %v1495
    %1497 = vdwg.mxu0
    %1498 = vmatpush.bf16.msra.mxu0 %v1194
    %1499 = vmatpush.bf16.msra.mxu0 %v1193
    %1500 = vmatpush.bf16.msra.mxu0 %v1192
    %1501 = vmatpush.bf16.msra.mxu0 %v1191
    %1502 = vmatpush.bf16.msra.mxu0 %v1190
    %1503 = vmatpush.bf16.msra.mxu0 %v1189
    %1504 = vmatpush.bf16.msra.mxu0 %v1188
    %1505 = vmatpush.bf16.msra.mxu0 %v1187
    %1506 = vmatmul.bf16.gmra.mxu0 %v576
    %v1507 = vpop.f32.mrf.mxu0
    %v1508 = vadd.f32 %v1489, %v1507
    %v1509 = vpop.f32.mrf.mxu0
    %v1510 = vadd.f32 %v1491, %v1509
    %1511 = vmatmul.bf16.gmra.mxu0 %v592
    %v1512 = vpop.f32.mrf.mxu0
    %v1513 = vadd.f32 %v1494, %v1512
    %v1514 = vpop.f32.mrf.mxu0
    %v1515 = vadd.f32 %v1496, %v1514
    %1516 = vdwg.mxu0
    %1517 = vmatpush.bf16.msra.mxu0 %v1202
    %1518 = vmatpush.bf16.msra.mxu0 %v1201
    %1519 = vmatpush.bf16.msra.mxu0 %v1200
    %1520 = vmatpush.bf16.msra.mxu0 %v1199
    %1521 = vmatpush.bf16.msra.mxu0 %v1198
    %1522 = vmatpush.bf16.msra.mxu0 %v1197
    %1523 = vmatpush.bf16.msra.mxu0 %v1196
    %1524 = vmatpush.bf16.msra.mxu0 %v1195
    %1525 = vmatmul.bf16.gmra.mxu0 %v577
    %v1526 = vpop.f32.mrf.mxu0
    %v1527 = vadd.f32 %v1508, %v1526
    %v1528 = vpop.f32.mrf.mxu0
    %v1529 = vadd.f32 %v1510, %v1528
    %1530 = vmatmul.bf16.gmra.mxu0 %v593
    %v1531 = vpop.f32.mrf.mxu0
    %v1532 = vadd.f32 %v1513, %v1531
    %v1533 = vpop.f32.mrf.mxu0
    %v1534 = vadd.f32 %v1515, %v1533
    %1535 = vdwg.mxu0
    %1536 = vmatpush.bf16.msra.mxu0 %v1210
    %1537 = vmatpush.bf16.msra.mxu0 %v1209
    %1538 = vmatpush.bf16.msra.mxu0 %v1208
    %1539 = vmatpush.bf16.msra.mxu0 %v1207
    %1540 = vmatpush.bf16.msra.mxu0 %v1206
    %1541 = vmatpush.bf16.msra.mxu0 %v1205
    %1542 = vmatpush.bf16.msra.mxu0 %v1204
    %1543 = vmatpush.bf16.msra.mxu0 %v1203
    %1544 = vmatmul.bf16.gmra.mxu0 %v578
    %v1545 = vpop.f32.mrf.mxu0
    %v1546 = vadd.f32 %v1527, %v1545
    %v1547 = vpop.f32.mrf.mxu0
    %v1548 = vadd.f32 %v1529, %v1547
    %1549 = vmatmul.bf16.gmra.mxu0 %v594
    %v1550 = vpop.f32.mrf.mxu0
    %v1551 = vadd.f32 %v1532, %v1550
    %v1552 = vpop.f32.mrf.mxu0
    %v1553 = vadd.f32 %v1534, %v1552
    %1554 = vdwg.mxu0
    %1555 = vmatpush.bf16.msra.mxu0 %v1218
    %1556 = vmatpush.bf16.msra.mxu0 %v1217
    %1557 = vmatpush.bf16.msra.mxu0 %v1216
    %1558 = vmatpush.bf16.msra.mxu0 %v1215
    %1559 = vmatpush.bf16.msra.mxu0 %v1214
    %1560 = vmatpush.bf16.msra.mxu0 %v1213
    %1561 = vmatpush.bf16.msra.mxu0 %v1212
    %1562 = vmatpush.bf16.msra.mxu0 %v1211
    %1563 = vmatmul.bf16.gmra.mxu0 %v579
    %v1564 = vpop.f32.mrf.mxu0
    %v1565 = vadd.f32 %v1546, %v1564
    %v1566 = vpop.f32.mrf.mxu0
    %v1567 = vadd.f32 %v1548, %v1566
    %1568 = vmatmul.bf16.gmra.mxu0 %v595
    %v1569 = vpop.f32.mrf.mxu0
    %v1570 = vadd.f32 %v1551, %v1569
    %v1571 = vpop.f32.mrf.mxu0
    %v1572 = vadd.f32 %v1553, %v1571
    %1573 = vdwg.mxu0
    %1574 = vmatpush.bf16.msra.mxu0 %v1226
    %1575 = vmatpush.bf16.msra.mxu0 %v1225
    %1576 = vmatpush.bf16.msra.mxu0 %v1224
    %1577 = vmatpush.bf16.msra.mxu0 %v1223
    %1578 = vmatpush.bf16.msra.mxu0 %v1222
    %1579 = vmatpush.bf16.msra.mxu0 %v1221
    %1580 = vmatpush.bf16.msra.mxu0 %v1220
    %1581 = vmatpush.bf16.msra.mxu0 %v1219
    %1582 = vmatmul.bf16.gmra.mxu0 %v580
    %v1583 = vpop.f32.mrf.mxu0
    %v1584 = vadd.f32 %v1565, %v1583
    %v1585 = vpop.f32.mrf.mxu0
    %v1586 = vadd.f32 %v1567, %v1585
    %1587 = vmatmul.bf16.gmra.mxu0 %v596
    %v1588 = vpop.f32.mrf.mxu0
    %v1589 = vadd.f32 %v1570, %v1588
    %v1590 = vpop.f32.mrf.mxu0
    %v1591 = vadd.f32 %v1572, %v1590
    %1592 = vdwg.mxu0
    %1593 = vmatpush.bf16.msra.mxu0 %v1234
    %1594 = vmatpush.bf16.msra.mxu0 %v1233
    %1595 = vmatpush.bf16.msra.mxu0 %v1232
    %1596 = vmatpush.bf16.msra.mxu0 %v1231
    %1597 = vmatpush.bf16.msra.mxu0 %v1230
    %1598 = vmatpush.bf16.msra.mxu0 %v1229
    %1599 = vmatpush.bf16.msra.mxu0 %v1228
    %1600 = vmatpush.bf16.msra.mxu0 %v1227
    %1601 = vmatmul.bf16.gmra.mxu0 %v581
    %v1602 = vpop.f32.mrf.mxu0
    %v1603 = vadd.f32 %v1584, %v1602
    %v1604 = vpop.f32.mrf.mxu0
    %v1605 = vadd.f32 %v1586, %v1604
    %1606 = vmatmul.bf16.gmra.mxu0 %v597
    %v1607 = vpop.f32.mrf.mxu0
    %v1608 = vadd.f32 %v1589, %v1607
    %v1609 = vpop.f32.mrf.mxu0
    %v1610 = vadd.f32 %v1591, %v1609
    %1611 = vdwg.mxu0
    %1612 = vmatpush.bf16.msra.mxu0 %v1242
    %1613 = vmatpush.bf16.msra.mxu0 %v1241
    %1614 = vmatpush.bf16.msra.mxu0 %v1240
    %1615 = vmatpush.bf16.msra.mxu0 %v1239
    %1616 = vmatpush.bf16.msra.mxu0 %v1238
    %1617 = vmatpush.bf16.msra.mxu0 %v1237
    %1618 = vmatpush.bf16.msra.mxu0 %v1236
    %1619 = vmatpush.bf16.msra.mxu0 %v1235
    %1620 = vmatmul.bf16.gmra.mxu0 %v582
    %v1621 = vpop.f32.mrf.mxu0
    %v1622 = vadd.f32 %v1603, %v1621
    %v1623 = vpop.f32.mrf.mxu0
    %v1624 = vadd.f32 %v1605, %v1623
    %1625 = vmatmul.bf16.gmra.mxu0 %v598
    %v1626 = vpop.f32.mrf.mxu0
    %v1627 = vadd.f32 %v1608, %v1626
    %v1628 = vpop.f32.mrf.mxu0
    %v1629 = vadd.f32 %v1610, %v1628
    %1630 = vdwg.mxu0
    %1631 = vmatpush.bf16.msra.mxu0 %v1250
    %1632 = vmatpush.bf16.msra.mxu0 %v1249
    %1633 = vmatpush.bf16.msra.mxu0 %v1248
    %1634 = vmatpush.bf16.msra.mxu0 %v1247
    %1635 = vmatpush.bf16.msra.mxu0 %v1246
    %1636 = vmatpush.bf16.msra.mxu0 %v1245
    %1637 = vmatpush.bf16.msra.mxu0 %v1244
    %1638 = vmatpush.bf16.msra.mxu0 %v1243
    %1639 = vmatmul.bf16.gmra.mxu0 %v583
    %v1640 = vpop.f32.mrf.mxu0
    %v1641 = vadd.f32 %v1622, %v1640
    %v1642 = vpop.f32.mrf.mxu0
    %v1643 = vadd.f32 %v1624, %v1642
    %1644 = vmatmul.bf16.gmra.mxu0 %v599
    %v1645 = vpop.f32.mrf.mxu0
    %v1646 = vadd.f32 %v1627, %v1645
    %v1647 = vpop.f32.mrf.mxu0
    %v1648 = vadd.f32 %v1629, %v1647
    %1649 = vdwg.mxu0
    %1650 = vmatpush.bf16.msra.mxu0 %v1258
    %1651 = vmatpush.bf16.msra.mxu0 %v1257
    %1652 = vmatpush.bf16.msra.mxu0 %v1256
    %1653 = vmatpush.bf16.msra.mxu0 %v1255
    %1654 = vmatpush.bf16.msra.mxu0 %v1254
    %1655 = vmatpush.bf16.msra.mxu0 %v1253
    %1656 = vmatpush.bf16.msra.mxu0 %v1252
    %1657 = vmatpush.bf16.msra.mxu0 %v1251
    %1658 = vmatmul.bf16.gmra.mxu0 %v584
    %v1659 = vpop.f32.mrf.mxu0
    %v1660 = vadd.f32 %v1641, %v1659
    %v1661 = vpop.f32.mrf.mxu0
    %v1662 = vadd.f32 %v1643, %v1661
    %1663 = vmatmul.bf16.gmra.mxu0 %v600
    %v1664 = vpop.f32.mrf.mxu0
    %v1665 = vadd.f32 %v1646, %v1664
    %v1666 = vpop.f32.mrf.mxu0
    %v1667 = vadd.f32 %v1648, %v1666
    %1668 = vdwg.mxu0
    %1669 = vmatpush.bf16.msra.mxu0 %v1266
    %1670 = vmatpush.bf16.msra.mxu0 %v1265
    %1671 = vmatpush.bf16.msra.mxu0 %v1264
    %1672 = vmatpush.bf16.msra.mxu0 %v1263
    %1673 = vmatpush.bf16.msra.mxu0 %v1262
    %1674 = vmatpush.bf16.msra.mxu0 %v1261
    %1675 = vmatpush.bf16.msra.mxu0 %v1260
    %1676 = vmatpush.bf16.msra.mxu0 %v1259
    %1677 = vmatmul.bf16.gmra.mxu0 %v585
    %v1678 = vpop.f32.mrf.mxu0
    %v1679 = vadd.f32 %v1660, %v1678
    %v1680 = vpop.f32.mrf.mxu0
    %v1681 = vadd.f32 %v1662, %v1680
    %1682 = vmatmul.bf16.gmra.mxu0 %v601
    %v1683 = vpop.f32.mrf.mxu0
    %v1684 = vadd.f32 %v1665, %v1683
    %v1685 = vpop.f32.mrf.mxu0
    %v1686 = vadd.f32 %v1667, %v1685
    %1687 = vdwg.mxu0
    %1688 = vmatpush.bf16.msra.mxu0 %v1274
    %1689 = vmatpush.bf16.msra.mxu0 %v1273
    %1690 = vmatpush.bf16.msra.mxu0 %v1272
    %1691 = vmatpush.bf16.msra.mxu0 %v1271
    %1692 = vmatpush.bf16.msra.mxu0 %v1270
    %1693 = vmatpush.bf16.msra.mxu0 %v1269
    %1694 = vmatpush.bf16.msra.mxu0 %v1268
    %1695 = vmatpush.bf16.msra.mxu0 %v1267
    %1696 = vmatmul.bf16.gmra.mxu0 %v586
    %v1697 = vpop.f32.mrf.mxu0
    %v1698 = vadd.f32 %v1679, %v1697
    %v1699 = vpop.f32.mrf.mxu0
    %v1700 = vadd.f32 %v1681, %v1699
    %1701 = vmatmul.bf16.gmra.mxu0 %v602
    %v1702 = vpop.f32.mrf.mxu0
    %v1703 = vadd.f32 %v1684, %v1702
    %v1704 = vpop.f32.mrf.mxu0
    %v1705 = vadd.f32 %v1686, %v1704
    %1706 = vdwg.mxu0
    %v1707 = vpack.c.bf16 %v1700, %v1698
    %v1708 = vpack.c.bf16 %v1705, %v1703
    %v1725 = vunpack.c.l.b16 %v170
    %v1726 = vunpack.c.l.b16 %v171
    %v1727 = vunpack.c.l.b16 %v172
    %v1728 = vunpack.c.l.b16 %v173
    %v1729 = vunpack.c.l.b16 %v174
    %v1730 = vunpack.c.l.b16 %v175
    %v1731 = vunpack.c.l.b16 %v176
    %v1732 = vunpack.c.l.b16 %v177
    %v1733 = vunpack.c.l.b16 %v178
    %v1734 = vunpack.c.l.b16 %v179
    %v1735 = vunpack.c.l.b16 %v180
    %v1736 = vunpack.c.l.b16 %v181
    %v1737 = vunpack.c.l.b16 %v182
    %v1738 = vunpack.c.l.b16 %v183
    %v1739 = vunpack.c.l.b16 %v184
    %v1740 = vunpack.c.l.b16 %v185
    %v1741 = vpack.c.b16 %v1726, %v1725
    %v1742 = vpack.c.b16 %v1728, %v1727
    %v1743 = vpack.c.b16 %v1730, %v1729
    %v1744 = vpack.c.b16 %v1732, %v1731
    %v1745 = vpack.c.b16 %v1734, %v1733
    %v1746 = vpack.c.b16 %v1736, %v1735
    %v1747 = vpack.c.b16 %v1738, %v1737
    %v1748 = vpack.c.b16 %v1740, %v1739
    %1757 = vmatpush.bf16.msra.mxu0 %v1748
    %1758 = vmatpush.bf16.msra.mxu0 %v1747
    %1759 = vmatpush.bf16.msra.mxu0 %v1746
    %1760 = vmatpush.bf16.msra.mxu0 %v1745
    %1761 = vmatpush.bf16.msra.mxu0 %v1744
    %1762 = vmatpush.bf16.msra.mxu0 %v1743
    %1763 = vmatpush.bf16.msra.mxu0 %v1742
    %1764 = vmatpush.bf16.msra.mxu0 %v1741
    %1765 = vmatmul.bf16.gmra.mxu0 %v1707
    %v1766 = vpop.f32.mrf.mxu0
    %v1767 = vadd.f32 0.0, %v1766
    %v1768 = vpop.f32.mrf.mxu0
    %v1769 = vadd.f32 0.0, %v1768
    %1770 = vmatmul.bf16.gmra.mxu0 %v1708
    %v1771 = vpop.f32.mrf.mxu0
    %v1772 = vadd.f32 0.0, %v1771
    %v1773 = vpop.f32.mrf.mxu0
    %v1774 = vadd.f32 0.0, %v1773
    %1775 = vdwg.mxu0
    %v1777 = vrot.slane %v30, 1
    %v1778 = vrot.slane %v30, 2
    %v1779 = vrot.slane %v30, 3
    %v1780 = vrot.slane %v30, 4
    %v1781 = vrot.slane %v30, 5
    %v1782 = vrot.slane %v30, 6
    %v1783 = vrot.slane %v30, 7
    %v1784 = vperm.slane %v30, 0
    %v1785 = vperm.slane %v1777, 0
    %v1786 = vperm.slane %v1778, 0
    %v1787 = vperm.slane %v1779, 0
    %v1788 = vperm.slane %v1780, 0
    %v1789 = vperm.slane %v1781, 0
    %v1790 = vperm.slane %v1782, 0
    %v1791 = vperm.slane %v1783, 0
    %v1800 = vmul.f32 %v1784, %v1767
    %v1801 = vmul.f32 %v1784, %v1769
    %v1802 = vmul.f32 %v1785, %v1767
    %v1803 = vmul.f32 %v1785, %v1769
    %v1804 = vmul.f32 %v1786, %v1767
    %v1805 = vmul.f32 %v1786, %v1769
    %v1806 = vmul.f32 %v1787, %v1767
    %v1807 = vmul.f32 %v1787, %v1769
    %v1808 = vmul.f32 %v1788, %v1767
    %v1809 = vmul.f32 %v1788, %v1769
    %v1810 = vmul.f32 %v1789, %v1767
    %v1811 = vmul.f32 %v1789, %v1769
    %v1812 = vmul.f32 %v1790, %v1767
    %v1813 = vmul.f32 %v1790, %v1769
    %v1814 = vmul.f32 %v1791, %v1767
    %v1815 = vmul.f32 %v1791, %v1769
    %v1816 = vmul.f32 %v1784, %v1772
    %v1817 = vmul.f32 %v1784, %v1774
    %v1818 = vmul.f32 %v1785, %v1772
    %v1819 = vmul.f32 %v1785, %v1774
    %v1820 = vmul.f32 %v1786, %v1772
    %v1821 = vmul.f32 %v1786, %v1774
    %v1822 = vmul.f32 %v1787, %v1772
    %v1823 = vmul.f32 %v1787, %v1774
    %v1824 = vmul.f32 %v1788, %v1772
    %v1825 = vmul.f32 %v1788, %v1774
    %v1826 = vmul.f32 %v1789, %v1772
    %v1827 = vmul.f32 %v1789, %v1774
    %v1828 = vmul.f32 %v1790, %v1772
    %v1829 = vmul.f32 %v1790, %v1774
    %v1830 = vmul.f32 %v1791, %v1772
    %v1831 = vmul.f32 %v1791, %v1774
    %v1832 = vtanh.pop %v1800
    %v1833 = vtanh.pop %v1801
    %v1834 = vtanh.pop %v1802
    %v1835 = vtanh.pop %v1803
    %v1836 = vtanh.pop %v1804
    %v1837 = vtanh.pop %v1805
    %v1838 = vtanh.pop %v1806
    %v1839 = vtanh.pop %v1807
    %v1840 = vtanh.pop %v1808
    %v1841 = vtanh.pop %v1809
    %v1842 = vtanh.pop %v1810
    %v1843 = vtanh.pop %v1811
    %v1844 = vtanh.pop %v1812
    %v1845 = vtanh.pop %v1813
    %v1846 = vtanh.pop %v1814
    %v1847 = vtanh.pop %v1815
    %v1848 = vtanh.pop %v1816
    %v1849 = vtanh.pop %v1817
    %v1850 = vtanh.pop %v1818
    %v1851 = vtanh.pop %v1819
    %v1852 = vtanh.pop %v1820
    %v1853 = vtanh.pop %v1821
    %v1854 = vtanh.pop %v1822
    %v1855 = vtanh.pop %v1823
    %v1856 = vtanh.pop %v1824
    %v1857 = vtanh.pop %v1825
    %v1858 = vtanh.pop %v1826
    %v1859 = vtanh.pop %v1827
    %v1860 = vtanh.pop %v1828
    %v1861 = vtanh.pop %v1829
    %v1862 = vtanh.pop %v1830
    %v1863 = vtanh.pop %v1831
    %v1864 = vperm.slane %v29, 0
    %v1865 = vmul.f32 %v1832, %v1864
    %v1866 = vmul.f32 %v1833, %v1864
    %v1867 = vmul.f32 %v1834, %v1864
    %v1868 = vmul.f32 %v1835, %v1864
    %v1869 = vmul.f32 %v1836, %v1864
    %v1870 = vmul.f32 %v1837, %v1864
    %v1871 = vmul.f32 %v1838, %v1864
    %v1872 = vmul.f32 %v1839, %v1864
    %v1873 = vmul.f32 %v1840, %v1864
    %v1874 = vmul.f32 %v1841, %v1864
    %v1875 = vmul.f32 %v1842, %v1864
    %v1876 = vmul.f32 %v1843, %v1864
    %v1877 = vmul.f32 %v1844, %v1864
    %v1878 = vmul.f32 %v1845, %v1864
    %v1879 = vmul.f32 %v1846, %v1864
    %v1880 = vmul.f32 %v1847, %v1864
    %v1881 = vmul.f32 %v1848, %v1864
    %v1882 = vmul.f32 %v1849, %v1864
    %v1883 = vmul.f32 %v1850, %v1864
    %v1884 = vmul.f32 %v1851, %v1864
    %v1885 = vmul.f32 %v1852, %v1864
    %v1886 = vmul.f32 %v1853, %v1864
    %v1887 = vmul.f32 %v1854, %v1864
    %v1888 = vmul.f32 %v1855, %v1864
    %v1889 = vmul.f32 %v1856, %v1864
    %v1890 = vmul.f32 %v1857, %v1864
    %v1891 = vmul.f32 %v1858, %v1864
    %v1892 = vmul.f32 %v1859, %v1864
    %v1893 = vmul.f32 %v1860, %v1864
    %v1894 = vmul.f32 %v1861, %v1864
    %v1895 = vmul.f32 %v1862, %v1864
    %v1896 = vmul.f32 %v1863, %v1864
    %vm1897 = vcmask 523264
    %v1898 = vsel %vm1897, %v1865, 0.0
    %1899 = vadd.xlane.f32.xlu0 %v1898
    %v1900 = vpop.xlane.xlu0 %1899
    %v1901 = vsel %vm1897, %v1866, 0.0
    %1902 = vadd.xlane.f32.xlu0 %v1901
    %v1903 = vpop.xlane.xlu0 %1902
    %v1904 = vsel %vm1897, %v1867, 0.0
    %1905 = vadd.xlane.f32.xlu0 %v1904
    %v1906 = vpop.xlane.xlu0 %1905
    %v1907 = vsel %vm1897, %v1868, 0.0
    %1908 = vadd.xlane.f32.xlu0 %v1907
    %v1909 = vpop.xlane.xlu0 %1908
    %v1910 = vsel %vm1897, %v1869, 0.0
    %1911 = vadd.xlane.f32.xlu0 %v1910
    %v1912 = vpop.xlane.xlu0 %1911
    %v1913 = vsel %vm1897, %v1870, 0.0
    %1914 = vadd.xlane.f32.xlu0 %v1913
    %v1915 = vpop.xlane.xlu0 %1914
    %v1916 = vsel %vm1897, %v1871, 0.0
    %1917 = vadd.xlane.f32.xlu0 %v1916
    %v1918 = vpop.xlane.xlu0 %1917
    %v1919 = vsel %vm1897, %v1872, 0.0
    %1920 = vadd.xlane.f32.xlu0 %v1919
    %v1921 = vpop.xlane.xlu0 %1920
    %v1922 = vsel %vm1897, %v1873, 0.0
    %1923 = vadd.xlane.f32.xlu0 %v1922
    %v1924 = vpop.xlane.xlu0 %1923
    %v1925 = vsel %vm1897, %v1874, 0.0
    %1926 = vadd.xlane.f32.xlu0 %v1925
    %v1927 = vpop.xlane.xlu0 %1926
    %v1928 = vsel %vm1897, %v1875, 0.0
    %1929 = vadd.xlane.f32.xlu0 %v1928
    %v1930 = vpop.xlane.xlu0 %1929
    %v1931 = vsel %vm1897, %v1876, 0.0
    %1932 = vadd.xlane.f32.xlu0 %v1931
    %v1933 = vpop.xlane.xlu0 %1932
    %v1934 = vsel %vm1897, %v1877, 0.0
    %1935 = vadd.xlane.f32.xlu0 %v1934
    %v1936 = vpop.xlane.xlu0 %1935
    %v1937 = vsel %vm1897, %v1878, 0.0
    %1938 = vadd.xlane.f32.xlu0 %v1937
    %v1939 = vpop.xlane.xlu0 %1938
    %v1940 = vsel %vm1897, %v1879, 0.0
    %1941 = vadd.xlane.f32.xlu0 %v1940
    %v1942 = vpop.xlane.xlu0 %1941
    %v1943 = vsel %vm1897, %v1880, 0.0
    %1944 = vadd.xlane.f32.xlu0 %v1943
    %v1945 = vpop.xlane.xlu0 %1944
    %v1946 = vsel %vm1897, %v1881, 0.0
    %1947 = vadd.xlane.f32.xlu0 %v1946
    %v1948 = vpop.xlane.xlu0 %1947
    %v1949 = vsel %vm1897, %v1882, 0.0
    %1950 = vadd.xlane.f32.xlu0 %v1949
    %v1951 = vpop.xlane.xlu0 %1950
    %v1952 = vsel %vm1897, %v1883, 0.0
    %1953 = vadd.xlane.f32.xlu0 %v1952
    %v1954 = vpop.xlane.xlu0 %1953
    %v1955 = vsel %vm1897, %v1884, 0.0
    %1956 = vadd.xlane.f32.xlu0 %v1955
    %v1957 = vpop.xlane.xlu0 %1956
    %v1958 = vsel %vm1897, %v1885, 0.0
    %1959 = vadd.xlane.f32.xlu0 %v1958
    %v1960 = vpop.xlane.xlu0 %1959
    %v1961 = vsel %vm1897, %v1886, 0.0
    %1962 = vadd.xlane.f32.xlu0 %v1961
    %v1963 = vpop.xlane.xlu0 %1962
    %v1964 = vsel %vm1897, %v1887, 0.0
    %1965 = vadd.xlane.f32.xlu0 %v1964
    %v1966 = vpop.xlane.xlu0 %1965
    %v1967 = vsel %vm1897, %v1888, 0.0
    %1968 = vadd.xlane.f32.xlu0 %v1967
    %v1969 = vpop.xlane.xlu0 %1968
    %v1970 = vsel %vm1897, %v1889, 0.0
    %1971 = vadd.xlane.f32.xlu0 %v1970
    %v1972 = vpop.xlane.xlu0 %1971
    %v1973 = vsel %vm1897, %v1890, 0.0
    %1974 = vadd.xlane.f32.xlu0 %v1973
    %v1975 = vpop.xlane.xlu0 %1974
    %v1976 = vsel %vm1897, %v1891, 0.0
    %1977 = vadd.xlane.f32.xlu0 %v1976
    %v1978 = vpop.xlane.xlu0 %1977
    %v1979 = vsel %vm1897, %v1892, 0.0
    %1980 = vadd.xlane.f32.xlu0 %v1979
    %v1981 = vpop.xlane.xlu0 %1980
    %v1982 = vsel %vm1897, %v1893, 0.0
    %1983 = vadd.xlane.f32.xlu0 %v1982
    %v1984 = vpop.xlane.xlu0 %1983
    %v1985 = vsel %vm1897, %v1894, 0.0
    %1986 = vadd.xlane.f32.xlu0 %v1985
    %v1987 = vpop.xlane.xlu0 %1986
    %v1988 = vsel %vm1897, %v1895, 0.0
    %1989 = vadd.xlane.f32.xlu0 %v1988
    %v1990 = vpop.xlane.xlu0 %1989
    %v1991 = vsel %vm1897, %v1896, 0.0
    %1992 = vadd.xlane.f32.xlu0 %v1991
    %v1993 = vpop.xlane.xlu0 %1992
    %v2026 = vlaneseq
    %v2027 = vand.u32 %v2026, 127
    %v2028 = vperm.slane %v1900, %v2027
    %v2029 = vadd.s32 %v2027, 4294967288
    %v2030 = vperm.slane %v1903, %v2029
    %vm2031 = vcmask 130112
    %v2032 = vsel %vm2031, %v2030, %v2028
    %v2033 = vperm.slane %v1906, %v2027
    %v2034 = vperm.slane %v1909, %v2029
    %v2035 = vsel %vm2031, %v2034, %v2033
    %v2036 = vperm.slane %v1912, %v2027
    %v2037 = vperm.slane %v1915, %v2029
    %v2038 = vsel %vm2031, %v2037, %v2036
    %v2039 = vperm.slane %v1918, %v2027
    %v2040 = vperm.slane %v1921, %v2029
    %v2041 = vsel %vm2031, %v2040, %v2039
    %v2042 = vperm.slane %v1924, %v2027
    %v2043 = vperm.slane %v1927, %v2029
    %v2044 = vsel %vm2031, %v2043, %v2042
    %v2045 = vperm.slane %v1930, %v2027
    %v2046 = vperm.slane %v1933, %v2029
    %v2047 = vsel %vm2031, %v2046, %v2045
    %v2048 = vperm.slane %v1936, %v2027
    %v2049 = vperm.slane %v1939, %v2029
    %v2050 = vsel %vm2031, %v2049, %v2048
    %v2051 = vperm.slane %v1942, %v2027
    %v2052 = vperm.slane %v1945, %v2029
    %v2053 = vsel %vm2031, %v2052, %v2051
    %v2054 = vperm.slane %v1948, %v2027
    %v2055 = vperm.slane %v1951, %v2029
    %v2056 = vsel %vm2031, %v2055, %v2054
    %v2057 = vperm.slane %v1954, %v2027
    %v2058 = vperm.slane %v1957, %v2029
    %v2059 = vsel %vm2031, %v2058, %v2057
    %v2060 = vperm.slane %v1960, %v2027
    %v2061 = vperm.slane %v1963, %v2029
    %v2062 = vsel %vm2031, %v2061, %v2060
    %v2063 = vperm.slane %v1966, %v2027
    %v2064 = vperm.slane %v1969, %v2029
    %v2065 = vsel %vm2031, %v2064, %v2063
    %v2066 = vperm.slane %v1972, %v2027
    %v2067 = vperm.slane %v1975, %v2029
    %v2068 = vsel %vm2031, %v2067, %v2066
    %v2069 = vperm.slane %v1978, %v2027
    %v2070 = vperm.slane %v1981, %v2029
    %v2071 = vsel %vm2031, %v2070, %v2069
    %v2072 = vperm.slane %v1984, %v2027
    %v2073 = vperm.slane %v1987, %v2029
    %v2074 = vsel %vm2031, %v2073, %v2072
    %v2075 = vperm.slane %v1990, %v2027
    %v2076 = vperm.slane %v1993, %v2029
    %v2077 = vsel %vm2031, %v2076, %v2075
    %vm2078 = vcmask 1041409
    %v2079 = vsel %vm2078, %v2035, %v2032
    %vm2080 = vcmask 1042434
    %v2081 = vsel %vm2080, %v2038, %v2079
    %vm2082 = vcmask 1043459
    %v2083 = vsel %vm2082, %v2041, %v2081
    %vm2084 = vcmask 1044484
    %v2085 = vsel %vm2084, %v2044, %v2083
    %vm2086 = vcmask 1045509
    %v2087 = vsel %vm2086, %v2047, %v2085
    %vm2088 = vcmask 1046534
    %v2089 = vsel %vm2088, %v2050, %v2087
    %vm2090 = vcmask 1047559
    %v2091 = vsel %vm2090, %v2053, %v2089
    %v2092 = vsel %vm2078, %v2059, %v2056
    %v2093 = vsel %vm2080, %v2062, %v2092
    %v2094 = vsel %vm2082, %v2065, %v2093
    %v2095 = vsel %vm2084, %v2068, %v2094
    %v2096 = vsel %vm2086, %v2071, %v2095
    %v2097 = vsel %vm2088, %v2074, %v2096
    %v2098 = vsel %vm2090, %v2077, %v2097
    %vm2101 = vcmask 130048
    %v2102 = vsel %vm2101, %v2091, -inf
    %2103 = vmax.xlane.f32.xlu0 %v2102
    %v2104 = vpop.xlane.xlu0 %2103
    %v2105 = vsel %vm2101, %v2098, -inf
    %2106 = vmax.xlane.f32.xlu0 %v2105
    %v2107 = vpop.xlane.xlu0 %2106
    %v2110 = vperm.slane %v2104, 0
    %v2111 = vperm.slane %v2104, 1
    %v2112 = vperm.slane %v2104, 2
    %v2113 = vperm.slane %v2104, 3
    %v2114 = vperm.slane %v2104, 4
    %v2115 = vperm.slane %v2104, 5
    %v2116 = vperm.slane %v2104, 6
    %v2117 = vperm.slane %v2104, 7
    %v2118 = vperm.slane %v2107, 0
    %v2119 = vperm.slane %v2107, 1
    %v2120 = vperm.slane %v2107, 2
    %v2121 = vperm.slane %v2107, 3
    %v2122 = vperm.slane %v2107, 4
    %v2123 = vperm.slane %v2107, 5
    %v2124 = vperm.slane %v2107, 6
    %v2125 = vperm.slane %v2107, 7
    %v2142 = vsub.f32 %v1900, %v2110
    %v2143 = vsub.f32 %v1903, %v2110
    %v2144 = vsub.f32 %v1906, %v2111
    %v2145 = vsub.f32 %v1909, %v2111
    %v2146 = vsub.f32 %v1912, %v2112
    %v2147 = vsub.f32 %v1915, %v2112
    %v2148 = vsub.f32 %v1918, %v2113
    %v2149 = vsub.f32 %v1921, %v2113
    %v2150 = vsub.f32 %v1924, %v2114
    %v2151 = vsub.f32 %v1927, %v2114
    %v2152 = vsub.f32 %v1930, %v2115
    %v2153 = vsub.f32 %v1933, %v2115
    %v2154 = vsub.f32 %v1936, %v2116
    %v2155 = vsub.f32 %v1939, %v2116
    %v2156 = vsub.f32 %v1942, %v2117
    %v2157 = vsub.f32 %v1945, %v2117
    %v2158 = vsub.f32 %v1948, %v2118
    %v2159 = vsub.f32 %v1951, %v2118
    %v2160 = vsub.f32 %v1954, %v2119
    %v2161 = vsub.f32 %v1957, %v2119
    %v2162 = vsub.f32 %v1960, %v2120
    %v2163 = vsub.f32 %v1963, %v2120
    %v2164 = vsub.f32 %v1966, %v2121
    %v2165 = vsub.f32 %v1969, %v2121
    %v2166 = vsub.f32 %v1972, %v2122
    %v2167 = vsub.f32 %v1975, %v2122
    %v2168 = vsub.f32 %v1978, %v2123
    %v2169 = vsub.f32 %v1981, %v2123
    %v2170 = vsub.f32 %v1984, %v2124
    %v2171 = vsub.f32 %v1987, %v2124
    %v2172 = vsub.f32 %v1990, %v2125
    %v2173 = vsub.f32 %v1993, %v2125
    %v2174 = vmul.f32 %v2142, 1.442695
    %v2175 = vpow.pop %v2174
    %v2176 = vmul.f32 %v2143, 1.442695
    %v2177 = vpow.pop %v2176
    %v2178 = vmul.f32 %v2144, 1.442695
    %v2179 = vpow.pop %v2178
    %v2180 = vmul.f32 %v2145, 1.442695
    %v2181 = vpow.pop %v2180
    %v2182 = vmul.f32 %v2146, 1.442695
    %v2183 = vpow.pop %v2182
    %v2184 = vmul.f32 %v2147, 1.442695
    %v2185 = vpow.pop %v2184
    %v2186 = vmul.f32 %v2148, 1.442695
    %v2187 = vpow.pop %v2186
    %v2188 = vmul.f32 %v2149, 1.442695
    %v2189 = vpow.pop %v2188
    %v2190 = vmul.f32 %v2150, 1.442695
    %v2191 = vpow.pop %v2190
    %v2192 = vmul.f32 %v2151, 1.442695
    %v2193 = vpow.pop %v2192
    %v2194 = vmul.f32 %v2152, 1.442695
    %v2195 = vpow.pop %v2194
    %v2196 = vmul.f32 %v2153, 1.442695
    %v2197 = vpow.pop %v2196
    %v2198 = vmul.f32 %v2154, 1.442695
    %v2199 = vpow.pop %v2198
    %v2200 = vmul.f32 %v2155, 1.442695
    %v2201 = vpow.pop %v2200
    %v2202 = vmul.f32 %v2156, 1.442695
    %v2203 = vpow.pop %v2202
    %v2204 = vmul.f32 %v2157, 1.442695
    %v2205 = vpow.pop %v2204
    %v2206 = vmul.f32 %v2158, 1.442695
    %v2207 = vpow.pop %v2206
    %v2208 = vmul.f32 %v2159, 1.442695
    %v2209 = vpow.pop %v2208
    %v2210 = vmul.f32 %v2160, 1.442695
    %v2211 = vpow.pop %v2210
    %v2212 = vmul.f32 %v2161, 1.442695
    %v2213 = vpow.pop %v2212
    %v2214 = vmul.f32 %v2162, 1.442695
    %v2215 = vpow.pop %v2214
    %v2216 = vmul.f32 %v2163, 1.442695
    %v2217 = vpow.pop %v2216
    %v2218 = vmul.f32 %v2164, 1.442695
    %v2219 = vpow.pop %v2218
    %v2220 = vmul.f32 %v2165, 1.442695
    %v2221 = vpow.pop %v2220
    %v2222 = vmul.f32 %v2166, 1.442695
    %v2223 = vpow.pop %v2222
    %v2224 = vmul.f32 %v2167, 1.442695
    %v2225 = vpow.pop %v2224
    %v2226 = vmul.f32 %v2168, 1.442695
    %v2227 = vpow.pop %v2226
    %v2228 = vmul.f32 %v2169, 1.442695
    %v2229 = vpow.pop %v2228
    %v2230 = vmul.f32 %v2170, 1.442695
    %v2231 = vpow.pop %v2230
    %v2232 = vmul.f32 %v2171, 1.442695
    %v2233 = vpow.pop %v2232
    %v2234 = vmul.f32 %v2172, 1.442695
    %v2235 = vpow.pop %v2234
    %v2236 = vmul.f32 %v2173, 1.442695
    %v2237 = vpow.pop %v2236
    %2270 = vset.pattern.permute.xlu0 0
    %2271 = vperm.xlu0 %2270, %v2175
    %v2272 = vpop.permute.xlu0 %2271
    %2273 = vset.pattern.permute.xlu0 0
    %2274 = vperm.xlu0 %2273, %v2177
    %v2275 = vpop.permute.xlu0 %2274
    %2276 = vset.pattern.permute.xlu0 0
    %2277 = vperm.xlu0 %2276, %v2179
    %v2278 = vpop.permute.xlu0 %2277
    %2279 = vset.pattern.permute.xlu0 0
    %2280 = vperm.xlu0 %2279, %v2181
    %v2281 = vpop.permute.xlu0 %2280
    %2282 = vset.pattern.permute.xlu0 0
    %2283 = vperm.xlu0 %2282, %v2183
    %v2284 = vpop.permute.xlu0 %2283
    %2285 = vset.pattern.permute.xlu0 0
    %2286 = vperm.xlu0 %2285, %v2185
    %v2287 = vpop.permute.xlu0 %2286
    %2288 = vset.pattern.permute.xlu0 0
    %2289 = vperm.xlu0 %2288, %v2187
    %v2290 = vpop.permute.xlu0 %2289
    %2291 = vset.pattern.permute.xlu0 0
    %2292 = vperm.xlu0 %2291, %v2189
    %v2293 = vpop.permute.xlu0 %2292
    %2294 = vset.pattern.permute.xlu0 0
    %2295 = vperm.xlu0 %2294, %v2191
    %v2296 = vpop.permute.xlu0 %2295
    %2297 = vset.pattern.permute.xlu0 0
    %2298 = vperm.xlu0 %2297, %v2193
    %v2299 = vpop.permute.xlu0 %2298
    %2300 = vset.pattern.permute.xlu0 0
    %2301 = vperm.xlu0 %2300, %v2195
    %v2302 = vpop.permute.xlu0 %2301
    %2303 = vset.pattern.permute.xlu0 0
    %2304 = vperm.xlu0 %2303, %v2197
    %v2305 = vpop.permute.xlu0 %2304
    %2306 = vset.pattern.permute.xlu0 0
    %2307 = vperm.xlu0 %2306, %v2199
    %v2308 = vpop.permute.xlu0 %2307
    %2309 = vset.pattern.permute.xlu0 0
    %2310 = vperm.xlu0 %2309, %v2201
    %v2311 = vpop.permute.xlu0 %2310
    %2312 = vset.pattern.permute.xlu0 0
    %2313 = vperm.xlu0 %2312, %v2203
    %v2314 = vpop.permute.xlu0 %2313
    %2315 = vset.pattern.permute.xlu0 0
    %2316 = vperm.xlu0 %2315, %v2205
    %v2317 = vpop.permute.xlu0 %2316
    %2318 = vset.pattern.permute.xlu0 0
    %2319 = vperm.xlu0 %2318, %v2207
    %v2320 = vpop.permute.xlu0 %2319
    %2321 = vset.pattern.permute.xlu0 0
    %2322 = vperm.xlu0 %2321, %v2209
    %v2323 = vpop.permute.xlu0 %2322
    %2324 = vset.pattern.permute.xlu0 0
    %2325 = vperm.xlu0 %2324, %v2211
    %v2326 = vpop.permute.xlu0 %2325
    %2327 = vset.pattern.permute.xlu0 0
    %2328 = vperm.xlu0 %2327, %v2213
    %v2329 = vpop.permute.xlu0 %2328
    %2330 = vset.pattern.permute.xlu0 0
    %2331 = vperm.xlu0 %2330, %v2215
    %v2332 = vpop.permute.xlu0 %2331
    %2333 = vset.pattern.permute.xlu0 0
    %2334 = vperm.xlu0 %2333, %v2217
    %v2335 = vpop.permute.xlu0 %2334
    %2336 = vset.pattern.permute.xlu0 0
    %2337 = vperm.xlu0 %2336, %v2219
    %v2338 = vpop.permute.xlu0 %2337
    %2339 = vset.pattern.permute.xlu0 0
    %2340 = vperm.xlu0 %2339, %v2221
    %v2341 = vpop.permute.xlu0 %2340
    %2342 = vset.pattern.permute.xlu0 0
    %2343 = vperm.xlu0 %2342, %v2223
    %v2344 = vpop.permute.xlu0 %2343
    %2345 = vset.pattern.permute.xlu0 0
    %2346 = vperm.xlu0 %2345, %v2225
    %v2347 = vpop.permute.xlu0 %2346
    %2348 = vset.pattern.permute.xlu0 0
    %2349 = vperm.xlu0 %2348, %v2227
    %v2350 = vpop.permute.xlu0 %2349
    %2351 = vset.pattern.permute.xlu0 0
    %2352 = vperm.xlu0 %2351, %v2229
    %v2353 = vpop.permute.xlu0 %2352
    %2354 = vset.pattern.permute.xlu0 0
    %2355 = vperm.xlu0 %2354, %v2231
    %v2356 = vpop.permute.xlu0 %2355
    %2357 = vset.pattern.permute.xlu0 0
    %2358 = vperm.xlu0 %2357, %v2233
    %v2359 = vpop.permute.xlu0 %2358
    %2360 = vset.pattern.permute.xlu0 0
    %2361 = vperm.xlu0 %2360, %v2235
    %v2362 = vpop.permute.xlu0 %2361
    %2363 = vset.pattern.permute.xlu0 0
    %2364 = vperm.xlu0 %2363, %v2237
    %v2365 = vpop.permute.xlu0 %2364
    %v2366 = vperm.slane %v2272, %v2027
    %v2367 = vperm.slane %v2275, %v2029
    %v2368 = vsel %vm2031, %v2367, %v2366
    %v2369 = vperm.slane %v2278, %v2027
    %v2370 = vperm.slane %v2281, %v2029
    %v2371 = vsel %vm2031, %v2370, %v2369
    %v2372 = vperm.slane %v2284, %v2027
    %v2373 = vperm.slane %v2287, %v2029
    %v2374 = vsel %vm2031, %v2373, %v2372
    %v2375 = vperm.slane %v2290, %v2027
    %v2376 = vperm.slane %v2293, %v2029
    %v2377 = vsel %vm2031, %v2376, %v2375
    %v2378 = vperm.slane %v2296, %v2027
    %v2379 = vperm.slane %v2299, %v2029
    %v2380 = vsel %vm2031, %v2379, %v2378
    %v2381 = vperm.slane %v2302, %v2027
    %v2382 = vperm.slane %v2305, %v2029
    %v2383 = vsel %vm2031, %v2382, %v2381
    %v2384 = vperm.slane %v2308, %v2027
    %v2385 = vperm.slane %v2311, %v2029
    %v2386 = vsel %vm2031, %v2385, %v2384
    %v2387 = vperm.slane %v2314, %v2027
    %v2388 = vperm.slane %v2317, %v2029
    %v2389 = vsel %vm2031, %v2388, %v2387
    %v2390 = vperm.slane %v2320, %v2027
    %v2391 = vperm.slane %v2323, %v2029
    %v2392 = vsel %vm2031, %v2391, %v2390
    %v2393 = vperm.slane %v2326, %v2027
    %v2394 = vperm.slane %v2329, %v2029
    %v2395 = vsel %vm2031, %v2394, %v2393
    %v2396 = vperm.slane %v2332, %v2027
    %v2397 = vperm.slane %v2335, %v2029
    %v2398 = vsel %vm2031, %v2397, %v2396
    %v2399 = vperm.slane %v2338, %v2027
    %v2400 = vperm.slane %v2341, %v2029
    %v2401 = vsel %vm2031, %v2400, %v2399
    %v2402 = vperm.slane %v2344, %v2027
    %v2403 = vperm.slane %v2347, %v2029
    %v2404 = vsel %vm2031, %v2403, %v2402
    %v2405 = vperm.slane %v2350, %v2027
    %v2406 = vperm.slane %v2353, %v2029
    %v2407 = vsel %vm2031, %v2406, %v2405
    %v2408 = vperm.slane %v2356, %v2027
    %v2409 = vperm.slane %v2359, %v2029
    %v2410 = vsel %vm2031, %v2409, %v2408
    %v2411 = vperm.slane %v2362, %v2027
    %v2412 = vperm.slane %v2365, %v2029
    %v2413 = vsel %vm2031, %v2412, %v2411
    %v2414 = vsel %vm2078, %v2371, %v2368
    %v2415 = vsel %vm2080, %v2374, %v2414
    %v2416 = vsel %vm2082, %v2377, %v2415
    %v2417 = vsel %vm2084, %v2380, %v2416
    %v2418 = vsel %vm2086, %v2383, %v2417
    %v2419 = vsel %vm2088, %v2386, %v2418
    %v2420 = vsel %vm2090, %v2389, %v2419
    %v2421 = vsel %vm2078, %v2395, %v2392
    %v2422 = vsel %vm2080, %v2398, %v2421
    %v2423 = vsel %vm2082, %v2401, %v2422
    %v2424 = vsel %vm2084, %v2404, %v2423
    %v2425 = vsel %vm2086, %v2407, %v2424
    %v2426 = vsel %vm2088, %v2410, %v2425
    %v2427 = vsel %vm2090, %v2413, %v2426
    %v2430 = vsel %vm2101, %v2420, 0.0
    %2431 = vadd.xlane.f32.xlu0 %v2430
    %v2432 = vpop.xlane.xlu0 %2431
    %v2433 = vsel %vm2101, %v2427, 0.0
    %2434 = vadd.xlane.f32.xlu0 %v2433
    %v2435 = vpop.xlane.xlu0 %2434
    %v2438 = vperm.slane %v2432, 0
    %v2439 = vperm.slane %v2432, 1
    %v2440 = vperm.slane %v2432, 2
    %v2441 = vperm.slane %v2432, 3
    %v2442 = vperm.slane %v2432, 4
    %v2443 = vperm.slane %v2432, 5
    %v2444 = vperm.slane %v2432, 6
    %v2445 = vperm.slane %v2432, 7
    %v2446 = vperm.slane %v2435, 0
    %v2447 = vperm.slane %v2435, 1
    %v2448 = vperm.slane %v2435, 2
    %v2449 = vperm.slane %v2435, 3
    %v2450 = vperm.slane %v2435, 4
    %v2451 = vperm.slane %v2435, 5
    %v2452 = vperm.slane %v2435, 6
    %v2453 = vperm.slane %v2435, 7
    %v2470 = vrcp.pop %v2438
    %v2471 = vmul.f32 %v2438, %v2470
    %v2472 = vsub.f32 1.0, %v2471
    %v2473 = vmul.f32 %v2470, %v2472
    %v2474 = vadd.f32 %v2470, %v2473
    %vm2475 = vweird.f32 %v2438
    %vm2476 = vweird.f32 %v2470
    %vm2477 = vmor %vm2475, %vm2476
    %v2478 = vsel %vm2477, %v2470, %v2474
    %v2479 = vand.u32 2147483647, %v2438
    %vm2480 = vcmp.eq.f32.partialorder %v2479, 8.507059e+37
    %v2481 = vand.u32 %v2438, 2147483648
    %v2482 = vor.u32 1.1754944e-38, %v2481
    %v2483 = vsel %vm2480, %v2482, %v2478
    %v2484 = vmul.f32 %v2175, %v2483
    %v2485 = vmul.f32 %v2177, %v2483
    %v2486 = vrcp.pop %v2439
    %v2487 = vmul.f32 %v2439, %v2486
    %v2488 = vsub.f32 1.0, %v2487
    %v2489 = vmul.f32 %v2486, %v2488
    %v2490 = vadd.f32 %v2486, %v2489
    %vm2491 = vweird.f32 %v2439
    %vm2492 = vweird.f32 %v2486
    %vm2493 = vmor %vm2491, %vm2492
    %v2494 = vsel %vm2493, %v2486, %v2490
    %v2495 = vand.u32 2147483647, %v2439
    %vm2496 = vcmp.eq.f32.partialorder %v2495, 8.507059e+37
    %v2497 = vand.u32 %v2439, 2147483648
    %v2498 = vor.u32 1.1754944e-38, %v2497
    %v2499 = vsel %vm2496, %v2498, %v2494
    %v2500 = vmul.f32 %v2179, %v2499
    %v2501 = vmul.f32 %v2181, %v2499
    %v2502 = vrcp.pop %v2440
    %v2503 = vmul.f32 %v2440, %v2502
    %v2504 = vsub.f32 1.0, %v2503
    %v2505 = vmul.f32 %v2502, %v2504
    %v2506 = vadd.f32 %v2502, %v2505
    %vm2507 = vweird.f32 %v2440
    %vm2508 = vweird.f32 %v2502
    %vm2509 = vmor %vm2507, %vm2508
    %v2510 = vsel %vm2509, %v2502, %v2506
    %v2511 = vand.u32 2147483647, %v2440
    %vm2512 = vcmp.eq.f32.partialorder %v2511, 8.507059e+37
    %v2513 = vand.u32 %v2440, 2147483648
    %v2514 = vor.u32 1.1754944e-38, %v2513
    %v2515 = vsel %vm2512, %v2514, %v2510
    %v2516 = vmul.f32 %v2183, %v2515
    %v2517 = vmul.f32 %v2185, %v2515
    %v2518 = vrcp.pop %v2441
    %v2519 = vmul.f32 %v2441, %v2518
    %v2520 = vsub.f32 1.0, %v2519
    %v2521 = vmul.f32 %v2518, %v2520
    %v2522 = vadd.f32 %v2518, %v2521
    %vm2523 = vweird.f32 %v2441
    %vm2524 = vweird.f32 %v2518
    %vm2525 = vmor %vm2523, %vm2524
    %v2526 = vsel %vm2525, %v2518, %v2522
    %v2527 = vand.u32 2147483647, %v2441
    %vm2528 = vcmp.eq.f32.partialorder %v2527, 8.507059e+37
    %v2529 = vand.u32 %v2441, 2147483648
    %v2530 = vor.u32 1.1754944e-38, %v2529
    %v2531 = vsel %vm2528, %v2530, %v2526
    %v2532 = vmul.f32 %v2187, %v2531
    %v2533 = vmul.f32 %v2189, %v2531
    %v2534 = vrcp.pop %v2442
    %v2535 = vmul.f32 %v2442, %v2534
    %v2536 = vsub.f32 1.0, %v2535
    %v2537 = vmul.f32 %v2534, %v2536
    %v2538 = vadd.f32 %v2534, %v2537
    %vm2539 = vweird.f32 %v2442
    %vm2540 = vweird.f32 %v2534
    %vm2541 = vmor %vm2539, %vm2540
    %v2542 = vsel %vm2541, %v2534, %v2538
    %v2543 = vand.u32 2147483647, %v2442
    %vm2544 = vcmp.eq.f32.partialorder %v2543, 8.507059e+37
    %v2545 = vand.u32 %v2442, 2147483648
    %v2546 = vor.u32 1.1754944e-38, %v2545
    %v2547 = vsel %vm2544, %v2546, %v2542
    %v2548 = vmul.f32 %v2191, %v2547
    %v2549 = vmul.f32 %v2193, %v2547
    %v2550 = vrcp.pop %v2443
    %v2551 = vmul.f32 %v2443, %v2550
    %v2552 = vsub.f32 1.0, %v2551
    %v2553 = vmul.f32 %v2550, %v2552
    %v2554 = vadd.f32 %v2550, %v2553
    %vm2555 = vweird.f32 %v2443
    %vm2556 = vweird.f32 %v2550
    %vm2557 = vmor %vm2555, %vm2556
    %v2558 = vsel %vm2557, %v2550, %v2554
    %v2559 = vand.u32 2147483647, %v2443
    %vm2560 = vcmp.eq.f32.partialorder %v2559, 8.507059e+37
    %v2561 = vand.u32 %v2443, 2147483648
    %v2562 = vor.u32 1.1754944e-38, %v2561
    %v2563 = vsel %vm2560, %v2562, %v2558
    %v2564 = vmul.f32 %v2195, %v2563
    %v2565 = vmul.f32 %v2197, %v2563
    %v2566 = vrcp.pop %v2444
    %v2567 = vmul.f32 %v2444, %v2566
    %v2568 = vsub.f32 1.0, %v2567
    %v2569 = vmul.f32 %v2566, %v2568
    %v2570 = vadd.f32 %v2566, %v2569
    %vm2571 = vweird.f32 %v2444
    %vm2572 = vweird.f32 %v2566
    %vm2573 = vmor %vm2571, %vm2572
    %v2574 = vsel %vm2573, %v2566, %v2570
    %v2575 = vand.u32 2147483647, %v2444
    %vm2576 = vcmp.eq.f32.partialorder %v2575, 8.507059e+37
    %v2577 = vand.u32 %v2444, 2147483648
    %v2578 = vor.u32 1.1754944e-38, %v2577
    %v2579 = vsel %vm2576, %v2578, %v2574
    %v2580 = vmul.f32 %v2199, %v2579
    %v2581 = vmul.f32 %v2201, %v2579
    %v2582 = vrcp.pop %v2445
    %v2583 = vmul.f32 %v2445, %v2582
    %v2584 = vsub.f32 1.0, %v2583
    %v2585 = vmul.f32 %v2582, %v2584
    %v2586 = vadd.f32 %v2582, %v2585
    %vm2587 = vweird.f32 %v2445
    %vm2588 = vweird.f32 %v2582
    %vm2589 = vmor %vm2587, %vm2588
    %v2590 = vsel %vm2589, %v2582, %v2586
    %v2591 = vand.u32 2147483647, %v2445
    %vm2592 = vcmp.eq.f32.partialorder %v2591, 8.507059e+37
    %v2593 = vand.u32 %v2445, 2147483648
    %v2594 = vor.u32 1.1754944e-38, %v2593
    %v2595 = vsel %vm2592, %v2594, %v2590
    %v2596 = vmul.f32 %v2203, %v2595
    %v2597 = vmul.f32 %v2205, %v2595
    %v2598 = vrcp.pop %v2446
    %v2599 = vmul.f32 %v2446, %v2598
    %v2600 = vsub.f32 1.0, %v2599
    %v2601 = vmul.f32 %v2598, %v2600
    %v2602 = vadd.f32 %v2598, %v2601
    %vm2603 = vweird.f32 %v2446
    %vm2604 = vweird.f32 %v2598
    %vm2605 = vmor %vm2603, %vm2604
    %v2606 = vsel %vm2605, %v2598, %v2602
    %v2607 = vand.u32 2147483647, %v2446
    %vm2608 = vcmp.eq.f32.partialorder %v2607, 8.507059e+37
    %v2609 = vand.u32 %v2446, 2147483648
    %v2610 = vor.u32 1.1754944e-38, %v2609
    %v2611 = vsel %vm2608, %v2610, %v2606
    %v2612 = vmul.f32 %v2207, %v2611
    %v2613 = vmul.f32 %v2209, %v2611
    %v2614 = vrcp.pop %v2447
    %v2615 = vmul.f32 %v2447, %v2614
    %v2616 = vsub.f32 1.0, %v2615
    %v2617 = vmul.f32 %v2614, %v2616
    %v2618 = vadd.f32 %v2614, %v2617
    %vm2619 = vweird.f32 %v2447
    %vm2620 = vweird.f32 %v2614
    %vm2621 = vmor %vm2619, %vm2620
    %v2622 = vsel %vm2621, %v2614, %v2618
    %v2623 = vand.u32 2147483647, %v2447
    %vm2624 = vcmp.eq.f32.partialorder %v2623, 8.507059e+37
    %v2625 = vand.u32 %v2447, 2147483648
    %v2626 = vor.u32 1.1754944e-38, %v2625
    %v2627 = vsel %vm2624, %v2626, %v2622
    %v2628 = vmul.f32 %v2211, %v2627
    %v2629 = vmul.f32 %v2213, %v2627
    %v2630 = vrcp.pop %v2448
    %v2631 = vmul.f32 %v2448, %v2630
    %v2632 = vsub.f32 1.0, %v2631
    %v2633 = vmul.f32 %v2630, %v2632
    %v2634 = vadd.f32 %v2630, %v2633
    %vm2635 = vweird.f32 %v2448
    %vm2636 = vweird.f32 %v2630
    %vm2637 = vmor %vm2635, %vm2636
    %v2638 = vsel %vm2637, %v2630, %v2634
    %v2639 = vand.u32 2147483647, %v2448
    %vm2640 = vcmp.eq.f32.partialorder %v2639, 8.507059e+37
    %v2641 = vand.u32 %v2448, 2147483648
    %v2642 = vor.u32 1.1754944e-38, %v2641
    %v2643 = vsel %vm2640, %v2642, %v2638
    %v2644 = vmul.f32 %v2215, %v2643
    %v2645 = vmul.f32 %v2217, %v2643
    %v2646 = vrcp.pop %v2449
    %v2647 = vmul.f32 %v2449, %v2646
    %v2648 = vsub.f32 1.0, %v2647
    %v2649 = vmul.f32 %v2646, %v2648
    %v2650 = vadd.f32 %v2646, %v2649
    %vm2651 = vweird.f32 %v2449
    %vm2652 = vweird.f32 %v2646
    %vm2653 = vmor %vm2651, %vm2652
    %v2654 = vsel %vm2653, %v2646, %v2650
    %v2655 = vand.u32 2147483647, %v2449
    %vm2656 = vcmp.eq.f32.partialorder %v2655, 8.507059e+37
    %v2657 = vand.u32 %v2449, 2147483648
    %v2658 = vor.u32 1.1754944e-38, %v2657
    %v2659 = vsel %vm2656, %v2658, %v2654
    %v2660 = vmul.f32 %v2219, %v2659
    %v2661 = vmul.f32 %v2221, %v2659
    %v2662 = vrcp.pop %v2450
    %v2663 = vmul.f32 %v2450, %v2662
    %v2664 = vsub.f32 1.0, %v2663
    %v2665 = vmul.f32 %v2662, %v2664
    %v2666 = vadd.f32 %v2662, %v2665
    %vm2667 = vweird.f32 %v2450
    %vm2668 = vweird.f32 %v2662
    %vm2669 = vmor %vm2667, %vm2668
    %v2670 = vsel %vm2669, %v2662, %v2666
    %v2671 = vand.u32 2147483647, %v2450
    %vm2672 = vcmp.eq.f32.partialorder %v2671, 8.507059e+37
    %v2673 = vand.u32 %v2450, 2147483648
    %v2674 = vor.u32 1.1754944e-38, %v2673
    %v2675 = vsel %vm2672, %v2674, %v2670
    %v2676 = vmul.f32 %v2223, %v2675
    %v2677 = vmul.f32 %v2225, %v2675
    %v2678 = vrcp.pop %v2451
    %v2679 = vmul.f32 %v2451, %v2678
    %v2680 = vsub.f32 1.0, %v2679
    %v2681 = vmul.f32 %v2678, %v2680
    %v2682 = vadd.f32 %v2678, %v2681
    %vm2683 = vweird.f32 %v2451
    %vm2684 = vweird.f32 %v2678
    %vm2685 = vmor %vm2683, %vm2684
    %v2686 = vsel %vm2685, %v2678, %v2682
    %v2687 = vand.u32 2147483647, %v2451
    %vm2688 = vcmp.eq.f32.partialorder %v2687, 8.507059e+37
    %v2689 = vand.u32 %v2451, 2147483648
    %v2690 = vor.u32 1.1754944e-38, %v2689
    %v2691 = vsel %vm2688, %v2690, %v2686
    %v2692 = vmul.f32 %v2227, %v2691
    %v2693 = vmul.f32 %v2229, %v2691
    %v2694 = vrcp.pop %v2452
    %v2695 = vmul.f32 %v2452, %v2694
    %v2696 = vsub.f32 1.0, %v2695
    %v2697 = vmul.f32 %v2694, %v2696
    %v2698 = vadd.f32 %v2694, %v2697
    %vm2699 = vweird.f32 %v2452
    %vm2700 = vweird.f32 %v2694
    %vm2701 = vmor %vm2699, %vm2700
    %v2702 = vsel %vm2701, %v2694, %v2698
    %v2703 = vand.u32 2147483647, %v2452
    %vm2704 = vcmp.eq.f32.partialorder %v2703, 8.507059e+37
    %v2705 = vand.u32 %v2452, 2147483648
    %v2706 = vor.u32 1.1754944e-38, %v2705
    %v2707 = vsel %vm2704, %v2706, %v2702
    %v2708 = vmul.f32 %v2231, %v2707
    %v2709 = vmul.f32 %v2233, %v2707
    %v2710 = vrcp.pop %v2453
    %v2711 = vmul.f32 %v2453, %v2710
    %v2712 = vsub.f32 1.0, %v2711
    %v2713 = vmul.f32 %v2710, %v2712
    %v2714 = vadd.f32 %v2710, %v2713
    %vm2715 = vweird.f32 %v2453
    %vm2716 = vweird.f32 %v2710
    %vm2717 = vmor %vm2715, %vm2716
    %v2718 = vsel %vm2717, %v2710, %v2714
    %v2719 = vand.u32 2147483647, %v2453
    %vm2720 = vcmp.eq.f32.partialorder %v2719, 8.507059e+37
    %v2721 = vand.u32 %v2453, 2147483648
    %v2722 = vor.u32 1.1754944e-38, %v2721
    %v2723 = vsel %vm2720, %v2722, %v2718
    %v2724 = vmul.f32 %v2235, %v2723
    %v2725 = vmul.f32 %v2237, %v2723
    %2742 = vset.pattern.permute.xlu0 0
    %2743 = vperm.xlu0 %2742, %v2484
    %v2744 = vpop.permute.xlu0 %2743
    %2745 = vset.pattern.permute.xlu0 0
    %2746 = vperm.xlu0 %2745, %v2485
    %v2747 = vpop.permute.xlu0 %2746
    %2748 = vset.pattern.permute.xlu0 0
    %2749 = vperm.xlu0 %2748, %v2500
    %v2750 = vpop.permute.xlu0 %2749
    %2751 = vset.pattern.permute.xlu0 0
    %2752 = vperm.xlu0 %2751, %v2501
    %v2753 = vpop.permute.xlu0 %2752
    %2754 = vset.pattern.permute.xlu0 0
    %2755 = vperm.xlu0 %2754, %v2516
    %v2756 = vpop.permute.xlu0 %2755
    %2757 = vset.pattern.permute.xlu0 0
    %2758 = vperm.xlu0 %2757, %v2517
    %v2759 = vpop.permute.xlu0 %2758
    %2760 = vset.pattern.permute.xlu0 0
    %2761 = vperm.xlu0 %2760, %v2532
    %v2762 = vpop.permute.xlu0 %2761
    %2763 = vset.pattern.permute.xlu0 0
    %2764 = vperm.xlu0 %2763, %v2533
    %v2765 = vpop.permute.xlu0 %2764
    %2766 = vset.pattern.permute.xlu0 0
    %2767 = vperm.xlu0 %2766, %v2548
    %v2768 = vpop.permute.xlu0 %2767
    %2769 = vset.pattern.permute.xlu0 0
    %2770 = vperm.xlu0 %2769, %v2549
    %v2771 = vpop.permute.xlu0 %2770
    %2772 = vset.pattern.permute.xlu0 0
    %2773 = vperm.xlu0 %2772, %v2564
    %v2774 = vpop.permute.xlu0 %2773
    %2775 = vset.pattern.permute.xlu0 0
    %2776 = vperm.xlu0 %2775, %v2565
    %v2777 = vpop.permute.xlu0 %2776
    %2778 = vset.pattern.permute.xlu0 0
    %2779 = vperm.xlu0 %2778, %v2580
    %v2780 = vpop.permute.xlu0 %2779
    %2781 = vset.pattern.permute.xlu0 0
    %2782 = vperm.xlu0 %2781, %v2581
    %v2783 = vpop.permute.xlu0 %2782
    %2784 = vset.pattern.permute.xlu0 0
    %2785 = vperm.xlu0 %2784, %v2596
    %v2786 = vpop.permute.xlu0 %2785
    %2787 = vset.pattern.permute.xlu0 0
    %2788 = vperm.xlu0 %2787, %v2597
    %v2789 = vpop.permute.xlu0 %2788
    %v2790 = vperm.slane %v2744, %v2027
    %v2791 = vperm.slane %v2747, %v2029
    %v2792 = vsel %vm2031, %v2791, %v2790
    %v2793 = vperm.slane %v2750, %v2027
    %v2794 = vperm.slane %v2753, %v2029
    %v2795 = vsel %vm2031, %v2794, %v2793
    %v2796 = vperm.slane %v2756, %v2027
    %v2797 = vperm.slane %v2759, %v2029
    %v2798 = vsel %vm2031, %v2797, %v2796
    %v2799 = vperm.slane %v2762, %v2027
    %v2800 = vperm.slane %v2765, %v2029
    %v2801 = vsel %vm2031, %v2800, %v2799
    %v2802 = vperm.slane %v2768, %v2027
    %v2803 = vperm.slane %v2771, %v2029
    %v2804 = vsel %vm2031, %v2803, %v2802
    %v2805 = vperm.slane %v2774, %v2027
    %v2806 = vperm.slane %v2777, %v2029
    %v2807 = vsel %vm2031, %v2806, %v2805
    %v2808 = vperm.slane %v2780, %v2027
    %v2809 = vperm.slane %v2783, %v2029
    %v2810 = vsel %vm2031, %v2809, %v2808
    %v2811 = vperm.slane %v2786, %v2027
    %v2812 = vperm.slane %v2789, %v2029
    %v2813 = vsel %vm2031, %v2812, %v2811
    %v2814 = vsel %vm2078, %v2795, %v2792
    %v2815 = vsel %vm2080, %v2798, %v2814
    %v2816 = vsel %vm2082, %v2801, %v2815
    %v2817 = vsel %vm2084, %v2804, %v2816
    %v2818 = vsel %vm2086, %v2807, %v2817
    %v2819 = vsel %vm2088, %v2810, %v2818
    %v2820 = vsel %vm2090, %v2813, %v2819
    %v2821 = vsel %vm2101, %v2820, 0
    %2823 = vmatpush.msra.mxu0 0.0
    %2824 = vmatpush.msra.mxu0 0.0
    %2825 = vmatpush.msra.mxu0 0.0
    %2826 = vmatpush.msra.mxu0 0.0
    %2827 = vmatpush.msra.mxu0 0.0
    %2828 = vmatpush.msra.mxu0 0.0
    %2829 = vmatpush.msra.mxu0 0.0
    %2830 = vmatpush.msra.mxu0 0.0
    %2831 = vmatpush.msra.mxu0 0.0
    %2832 = vmatpush.msra.mxu0 0.0
    %2833 = vmatpush.msra.mxu0 0.0
    %2834 = vmatpush.msra.mxu0 0.0
    %2835 = vmatpush.msra.mxu0 0.0
    %2836 = vmatpush.msra.mxu0 0.0
    %2837 = vmatpush.msra.mxu0 %v1700
    %2838 = vmatpush.msra.mxu0 %v1698
    %2839 = vmatmul.f32.gmra.mxu0 %v2821
    %v2840 = vpop.f32.mrf.mxu0
    %v2841 = vadd.f32 0.0, %v2840
    %2842 = vdwg.mxu0
    %2859 = vset.pattern.permute.xlu0 0
    %2860 = vperm.xlu0 %2859, %v2612
    %v2861 = vpop.permute.xlu0 %2860
    %2862 = vset.pattern.permute.xlu0 0
    %2863 = vperm.xlu0 %2862, %v2613
    %v2864 = vpop.permute.xlu0 %2863
    %2865 = vset.pattern.permute.xlu0 0
    %2866 = vperm.xlu0 %2865, %v2628
    %v2867 = vpop.permute.xlu0 %2866
    %2868 = vset.pattern.permute.xlu0 0
    %2869 = vperm.xlu0 %2868, %v2629
    %v2870 = vpop.permute.xlu0 %2869
    %2871 = vset.pattern.permute.xlu0 0
    %2872 = vperm.xlu0 %2871, %v2644
    %v2873 = vpop.permute.xlu0 %2872
    %2874 = vset.pattern.permute.xlu0 0
    %2875 = vperm.xlu0 %2874, %v2645
    %v2876 = vpop.permute.xlu0 %2875
    %2877 = vset.pattern.permute.xlu0 0
    %2878 = vperm.xlu0 %2877, %v2660
    %v2879 = vpop.permute.xlu0 %2878
    %2880 = vset.pattern.permute.xlu0 0
    %2881 = vperm.xlu0 %2880, %v2661
    %v2882 = vpop.permute.xlu0 %2881
    %2883 = vset.pattern.permute.xlu0 0
    %2884 = vperm.xlu0 %2883, %v2676
    %v2885 = vpop.permute.xlu0 %2884
    %2886 = vset.pattern.permute.xlu0 0
    %2887 = vperm.xlu0 %2886, %v2677
    %v2888 = vpop.permute.xlu0 %2887
    %2889 = vset.pattern.permute.xlu0 0
    %2890 = vperm.xlu0 %2889, %v2692
    %v2891 = vpop.permute.xlu0 %2890
    %2892 = vset.pattern.permute.xlu0 0
    %2893 = vperm.xlu0 %2892, %v2693
    %v2894 = vpop.permute.xlu0 %2893
    %2895 = vset.pattern.permute.xlu0 0
    %2896 = vperm.xlu0 %2895, %v2708
    %v2897 = vpop.permute.xlu0 %2896
    %2898 = vset.pattern.permute.xlu0 0
    %2899 = vperm.xlu0 %2898, %v2709
    %v2900 = vpop.permute.xlu0 %2899
    %2901 = vset.pattern.permute.xlu0 0
    %2902 = vperm.xlu0 %2901, %v2724
    %v2903 = vpop.permute.xlu0 %2902
    %2904 = vset.pattern.permute.xlu0 0
    %2905 = vperm.xlu0 %2904, %v2725
    %v2906 = vpop.permute.xlu0 %2905
    %v2907 = vperm.slane %v2861, %v2027
    %v2908 = vperm.slane %v2864, %v2029
    %v2909 = vsel %vm2031, %v2908, %v2907
    %v2910 = vperm.slane %v2867, %v2027
    %v2911 = vperm.slane %v2870, %v2029
    %v2912 = vsel %vm2031, %v2911, %v2910
    %v2913 = vperm.slane %v2873, %v2027
    %v2914 = vperm.slane %v2876, %v2029
    %v2915 = vsel %vm2031, %v2914, %v2913
    %v2916 = vperm.slane %v2879, %v2027
    %v2917 = vperm.slane %v2882, %v2029
    %v2918 = vsel %vm2031, %v2917, %v2916
    %v2919 = vperm.slane %v2885, %v2027
    %v2920 = vperm.slane %v2888, %v2029
    %v2921 = vsel %vm2031, %v2920, %v2919
    %v2922 = vperm.slane %v2891, %v2027
    %v2923 = vperm.slane %v2894, %v2029
    %v2924 = vsel %vm2031, %v2923, %v2922
    %v2925 = vperm.slane %v2897, %v2027
    %v2926 = vperm.slane %v2900, %v2029
    %v2927 = vsel %vm2031, %v2926, %v2925
    %v2928 = vperm.slane %v2903, %v2027
    %v2929 = vperm.slane %v2906, %v2029
    %v2930 = vsel %vm2031, %v2929, %v2928
    %v2931 = vsel %vm2078, %v2912, %v2909
    %v2932 = vsel %vm2080, %v2915, %v2931
    %v2933 = vsel %vm2082, %v2918, %v2932
    %v2934 = vsel %vm2084, %v2921, %v2933
    %v2935 = vsel %vm2086, %v2924, %v2934
    %v2936 = vsel %vm2088, %v2927, %v2935
    %v2937 = vsel %vm2090, %v2930, %v2936
    %v2938 = vsel %vm2101, %v2937, 0
    %2940 = vmatpush.msra.mxu0 0.0
    %2941 = vmatpush.msra.mxu0 0.0
    %2942 = vmatpush.msra.mxu0 0.0
    %2943 = vmatpush.msra.mxu0 0.0
    %2944 = vmatpush.msra.mxu0 0.0
    %2945 = vmatpush.msra.mxu0 0.0
    %2946 = vmatpush.msra.mxu0 0.0
    %2947 = vmatpush.msra.mxu0 0.0
    %2948 = vmatpush.msra.mxu0 0.0
    %2949 = vmatpush.msra.mxu0 0.0
    %2950 = vmatpush.msra.mxu0 0.0
    %2951 = vmatpush.msra.mxu0 0.0
    %2952 = vmatpush.msra.mxu0 0.0
    %2953 = vmatpush.msra.mxu0 0.0
    %2954 = vmatpush.msra.mxu0 %v1705
    %2955 = vmatpush.msra.mxu0 %v1703
    %2956 = vmatmul.f32.gmra.mxu0 %v2938
    %v2957 = vpop.f32.mrf.mxu0
    %v2958 = vadd.f32 0.0, %v2957
    %2959 = vdwg.mxu0
    %v2960 = vpack.c.bf16 %v2841, %v2841
    %v2961 = vpack.c.bf16 %v2958, %v2958
    %v2964 = vunpack.c.l.b16 %v40
    %v2965 = vunpack.c.l.b16 %v41
    %v2966 = vpack.c.b16 %v2965, %v2964
    %v2969 = vunpack.c.l.b16 %v2960
    %v2970 = vunpack.c.l.b16 %v2961
    %v2971 = vpack.c.b16 %v2970, %v2969
    %v2974 = vsel %vm2101, %v2966, 0
    %2976 = vmatpush.bf16.msra.mxu0 0
    %2977 = vmatpush.bf16.msra.mxu0 0
    %2978 = vmatpush.bf16.msra.mxu0 0
    %2979 = vmatpush.bf16.msra.mxu0 0
    %2980 = vmatpush.bf16.msra.mxu0 0
    %2981 = vmatpush.bf16.msra.mxu0 0
    %2982 = vmatpush.bf16.msra.mxu0 0
    %2983 = vmatpush.bf16.msra.mxu0 %v2971
    %2984 = vmatmul.bf16.gmra.mxu0 %v2974
    %v2985 = vpop.f32.mrf.mxu0
    %v2986 = vadd.f32 0.0, %v2985
    %v2987 = vpop.f32.mrf.mxu0
    %v2988 = vadd.f32 0.0, %v2987
    %2989 = vdwg.mxu0
    %2990 = vrot.lane.b32.xlu0 %v2966, 112
    %v2991 = vpop.permute.xlu0 %2990
    %v2993 = vsel %vm2101, %v2991, 0
    %2995 = vmatpush.bf16.msra.mxu0 0
    %2996 = vmatpush.bf16.msra.mxu0 0
    %2997 = vmatpush.bf16.msra.mxu0 0
    %2998 = vmatpush.bf16.msra.mxu0 0
    %2999 = vmatpush.bf16.msra.mxu0 0
    %3000 = vmatpush.bf16.msra.mxu0 0
    %3001 = vmatpush.bf16.msra.mxu0 0
    %3002 = vmatpush.bf16.msra.mxu0 %v2971
    %3003 = vmatmul.bf16.gmra.mxu0 %v2993
    %v3004 = vpop.f32.mrf.mxu0
    %v3005 = vadd.f32 0.0, %v3004
    %v3006 = vpop.f32.mrf.mxu0
    %v3007 = vadd.f32 0.0, %v3006
    %3008 = vdwg.mxu0
    %v3009 = vpack.c.bf16 %v2986, %v2986
    %v3010 = vpack.c.bf16 %v2988, %v2988
    %v3011 = vpack.c.bf16 %v3005, %v3005
    %v3012 = vpack.c.bf16 %v3007, %v3007
    %v3015 = vunpack.c.l.b16 %v3009
    %v3016 = vunpack.c.l.b16 %v3010
    %v3017 = vpack.c.b16 %v3016, %v3015
    %v3021 = vunpack.c.l.b16 %v3011
    %v3022 = vunpack.c.l.b16 %v3012
    %v3023 = vpack.c.b16 %v3022, %v3021
    %v3089 = vunpack.c.l.b16 %v42
    %v3090 = vunpack.c.h.b16 %v42
    %v3091 = vunpack.c.l.b16 %v43
    %v3092 = vunpack.c.l.b16 %v44
    %v3093 = vunpack.c.h.b16 %v44
    %v3094 = vunpack.c.l.b16 %v45
    %v3095 = vunpack.c.l.b16 %v46
    %v3096 = vunpack.c.h.b16 %v46
    %v3097 = vunpack.c.l.b16 %v47
    %v3098 = vunpack.c.l.b16 %v48
    %v3099 = vunpack.c.h.b16 %v48
    %v3100 = vunpack.c.l.b16 %v49
    %v3101 = vunpack.c.l.b16 %v50
    %v3102 = vunpack.c.h.b16 %v50
    %v3103 = vunpack.c.l.b16 %v51
    %v3104 = vunpack.c.l.b16 %v52
    %v3105 = vunpack.c.h.b16 %v52
    %v3106 = vunpack.c.l.b16 %v53
    %v3107 = vunpack.c.l.b16 %v54
    %v3108 = vunpack.c.h.b16 %v54
    %v3109 = vunpack.c.l.b16 %v55
    %v3110 = vunpack.c.l.b16 %v56
    %v3111 = vunpack.c.h.b16 %v56
    %v3112 = vunpack.c.l.b16 %v57
    %v3113 = vunpack.c.l.b16 %v58
    %v3114 = vunpack.c.h.b16 %v58
    %v3115 = vunpack.c.l.b16 %v59
    %v3116 = vunpack.c.l.b16 %v60
    %v3117 = vunpack.c.h.b16 %v60
    %v3118 = vunpack.c.l.b16 %v61
    %v3119 = vunpack.c.l.b16 %v62
    %v3120 = vunpack.c.h.b16 %v62
    %v3121 = vunpack.c.l.b16 %v63
    %v3122 = vunpack.c.l.b16 %v64
    %v3123 = vunpack.c.h.b16 %v64
    %v3124 = vunpack.c.l.b16 %v65
    %v3125 = vunpack.c.l.b16 %v66
    %v3126 = vunpack.c.h.b16 %v66
    %v3127 = vunpack.c.l.b16 %v67
    %v3128 = vunpack.c.l.b16 %v68
    %v3129 = vunpack.c.h.b16 %v68
    %v3130 = vunpack.c.l.b16 %v69
    %v3131 = vunpack.c.l.b16 %v70
    %v3132 = vunpack.c.h.b16 %v70
    %v3133 = vunpack.c.l.b16 %v71
    %v3134 = vunpack.c.l.b16 %v72
    %v3135 = vunpack.c.h.b16 %v72
    %v3136 = vunpack.c.l.b16 %v73
    %v3137 = vunpack.c.l.b16 %v74
    %v3138 = vunpack.c.h.b16 %v74
    %v3139 = vunpack.c.l.b16 %v75
    %v3140 = vunpack.c.l.b16 %v76
    %v3141 = vunpack.c.h.b16 %v76
    %v3142 = vunpack.c.l.b16 %v77
    %v3143 = vunpack.c.l.b16 %v78
    %v3144 = vunpack.c.h.b16 %v78
    %v3145 = vunpack.c.l.b16 %v79
    %v3146 = vunpack.c.l.b16 %v80
    %v3147 = vunpack.c.h.b16 %v80
    %v3148 = vunpack.c.l.b16 %v81
    %v3149 = vunpack.c.l.b16 %v82
    %v3150 = vunpack.c.h.b16 %v82
    %v3151 = vunpack.c.l.b16 %v83
    %v3152 = vunpack.c.l.b16 %v84
    %v3153 = vunpack.c.h.b16 %v84
    %v3154 = vunpack.c.l.b16 %v85
    %v3155 = vunpack.c.l.b16 %v86
    %v3156 = vunpack.c.h.b16 %v86
    %v3157 = vunpack.c.l.b16 %v87
    %v3158 = vunpack.c.l.b16 %v88
    %v3159 = vunpack.c.h.b16 %v88
    %v3160 = vunpack.c.l.b16 %v89
    %v3161 = vunpack.c.l.b16 %v90
    %v3162 = vunpack.c.h.b16 %v90
    %v3163 = vunpack.c.l.b16 %v91
    %v3164 = vunpack.c.l.b16 %v92
    %v3165 = vunpack.c.h.b16 %v92
    %v3166 = vunpack.c.l.b16 %v93
    %v3167 = vunpack.c.l.b16 %v94
    %v3168 = vunpack.c.h.b16 %v94
    %v3169 = vunpack.c.l.b16 %v95
    %v3170 = vunpack.c.l.b16 %v96
    %v3171 = vunpack.c.h.b16 %v96
    %v3172 = vunpack.c.l.b16 %v97
    %v3173 = vunpack.c.l.b16 %v98
    %v3174 = vunpack.c.h.b16 %v98
    %v3175 = vunpack.c.l.b16 %v99
    %v3176 = vunpack.c.l.b16 %v100
    %v3177 = vunpack.c.h.b16 %v100
    %v3178 = vunpack.c.l.b16 %v101
    %v3179 = vunpack.c.l.b16 %v102
    %v3180 = vunpack.c.h.b16 %v102
    %v3181 = vunpack.c.l.b16 %v103
    %v3182 = vunpack.c.l.b16 %v104
    %v3183 = vunpack.c.h.b16 %v104
    %v3184 = vunpack.c.l.b16 %v105
    %v3185 = vpack.c.b16 %v3092, %v3089
    %v3186 = vpack.c.b16 %v3093, %v3090
    %v3187 = vpack.c.b16 %v3094, %v3091
    %v3188 = vpack.c.b16 %v3098, %v3095
    %v3189 = vpack.c.b16 %v3099, %v3096
    %v3190 = vpack.c.b16 %v3100, %v3097
    %v3191 = vpack.c.b16 %v3104, %v3101
    %v3192 = vpack.c.b16 %v3105, %v3102
    %v3193 = vpack.c.b16 %v3106, %v3103
    %v3194 = vpack.c.b16 %v3110, %v3107
    %v3195 = vpack.c.b16 %v3111, %v3108
    %v3196 = vpack.c.b16 %v3112, %v3109
    %v3197 = vpack.c.b16 %v3116, %v3113
    %v3198 = vpack.c.b16 %v3117, %v3114
    %v3199 = vpack.c.b16 %v3118, %v3115
    %v3200 = vpack.c.b16 %v3122, %v3119
    %v3201 = vpack.c.b16 %v3123, %v3120
    %v3202 = vpack.c.b16 %v3124, %v3121
    %v3203 = vpack.c.b16 %v3128, %v3125
    %v3204 = vpack.c.b16 %v3129, %v3126
    %v3205 = vpack.c.b16 %v3130, %v3127
    %v3206 = vpack.c.b16 %v3134, %v3131
    %v3207 = vpack.c.b16 %v3135, %v3132
    %v3208 = vpack.c.b16 %v3136, %v3133
    %v3209 = vpack.c.b16 %v3140, %v3137
    %v3210 = vpack.c.b16 %v3141, %v3138
    %v3211 = vpack.c.b16 %v3142, %v3139
    %v3212 = vpack.c.b16 %v3146, %v3143
    %v3213 = vpack.c.b16 %v3147, %v3144
    %v3214 = vpack.c.b16 %v3148, %v3145
    %v3215 = vpack.c.b16 %v3152, %v3149
    %v3216 = vpack.c.b16 %v3153, %v3150
    %v3217 = vpack.c.b16 %v3154, %v3151
    %v3218 = vpack.c.b16 %v3158, %v3155
    %v3219 = vpack.c.b16 %v3159, %v3156
    %v3220 = vpack.c.b16 %v3160, %v3157
    %v3221 = vpack.c.b16 %v3164, %v3161
    %v3222 = vpack.c.b16 %v3165, %v3162
    %v3223 = vpack.c.b16 %v3166, %v3163
    %v3224 = vpack.c.b16 %v3170, %v3167
    %v3225 = vpack.c.b16 %v3171, %v3168
    %v3226 = vpack.c.b16 %v3172, %v3169
    %v3227 = vpack.c.b16 %v3176, %v3173
    %v3228 = vpack.c.b16 %v3177, %v3174
    %v3229 = vpack.c.b16 %v3178, %v3175
    %v3230 = vpack.c.b16 %v3182, %v3179
    %v3231 = vpack.c.b16 %v3183, %v3180
    %v3232 = vpack.c.b16 %v3184, %v3181
    %3281 = vmatpush.bf16.msra.mxu0 %v3206
    %3282 = vmatpush.bf16.msra.mxu0 %v3203
    %3283 = vmatpush.bf16.msra.mxu0 %v3200
    %3284 = vmatpush.bf16.msra.mxu0 %v3197
    %3285 = vmatpush.bf16.msra.mxu0 %v3194
    %3286 = vmatpush.bf16.msra.mxu0 %v3191
    %3287 = vmatpush.bf16.msra.mxu0 %v3188
    %3288 = vmatpush.bf16.msra.mxu0 %v3185
    %3289 = vmatmul.bf16.gmra.mxu0 %v3017
    %v3290 = vpop.f32.mrf.mxu0
    %v3291 = vadd.f32 0.0, %v3290
    %v3292 = vpop.f32.mrf.mxu0
    %v3293 = vadd.f32 0.0, %v3292
    %3294 = vdwg.mxu0
    %3295 = vmatpush.bf16.msra.mxu0 %v3230
    %3296 = vmatpush.bf16.msra.mxu0 %v3227
    %3297 = vmatpush.bf16.msra.mxu0 %v3224
    %3298 = vmatpush.bf16.msra.mxu0 %v3221
    %3299 = vmatpush.bf16.msra.mxu0 %v3218
    %3300 = vmatpush.bf16.msra.mxu0 %v3215
    %3301 = vmatpush.bf16.msra.mxu0 %v3212
    %3302 = vmatpush.bf16.msra.mxu0 %v3209
    %3303 = vmatmul.bf16.gmra.mxu0 %v3023
    %v3304 = vpop.f32.mrf.mxu0
    %v3305 = vadd.f32 %v3291, %v3304
    %v3306 = vpop.f32.mrf.mxu0
    %v3307 = vadd.f32 %v3293, %v3306
    %3308 = vdwg.mxu0
    %3309 = vmatpush.bf16.msra.mxu0 %v3207
    %3310 = vmatpush.bf16.msra.mxu0 %v3204
    %3311 = vmatpush.bf16.msra.mxu0 %v3201
    %3312 = vmatpush.bf16.msra.mxu0 %v3198
    %3313 = vmatpush.bf16.msra.mxu0 %v3195
    %3314 = vmatpush.bf16.msra.mxu0 %v3192
    %3315 = vmatpush.bf16.msra.mxu0 %v3189
    %3316 = vmatpush.bf16.msra.mxu0 %v3186
    %3317 = vmatmul.bf16.gmra.mxu0 %v3017
    %v3318 = vpop.f32.mrf.mxu0
    %v3319 = vadd.f32 0.0, %v3318
    %v3320 = vpop.f32.mrf.mxu0
    %v3321 = vadd.f32 0.0, %v3320
    %3322 = vdwg.mxu0
    %3323 = vmatpush.bf16.msra.mxu0 %v3231
    %3324 = vmatpush.bf16.msra.mxu0 %v3228
    %3325 = vmatpush.bf16.msra.mxu0 %v3225
    %3326 = vmatpush.bf16.msra.mxu0 %v3222
    %3327 = vmatpush.bf16.msra.mxu0 %v3219
    %3328 = vmatpush.bf16.msra.mxu0 %v3216
    %3329 = vmatpush.bf16.msra.mxu0 %v3213
    %3330 = vmatpush.bf16.msra.mxu0 %v3210
    %3331 = vmatmul.bf16.gmra.mxu0 %v3023
    %v3332 = vpop.f32.mrf.mxu0
    %v3333 = vadd.f32 %v3319, %v3332
    %v3334 = vpop.f32.mrf.mxu0
    %v3335 = vadd.f32 %v3321, %v3334
    %3336 = vdwg.mxu0
    %3337 = vmatpush.bf16.msra.mxu0 %v3208
    %3338 = vmatpush.bf16.msra.mxu0 %v3205
    %3339 = vmatpush.bf16.msra.mxu0 %v3202
    %3340 = vmatpush.bf16.msra.mxu0 %v3199
    %3341 = vmatpush.bf16.msra.mxu0 %v3196
    %3342 = vmatpush.bf16.msra.mxu0 %v3193
    %3343 = vmatpush.bf16.msra.mxu0 %v3190
    %3344 = vmatpush.bf16.msra.mxu0 %v3187
    %3345 = vmatmul.bf16.gmra.mxu0 %v3017
    %v3346 = vpop.f32.mrf.mxu0
    %v3347 = vadd.f32 0.0, %v3346
    %v3348 = vpop.f32.mrf.mxu0
    %v3349 = vadd.f32 0.0, %v3348
    %3350 = vdwg.mxu0
    %3351 = vmatpush.bf16.msra.mxu0 %v3232
    %3352 = vmatpush.bf16.msra.mxu0 %v3229
    %3353 = vmatpush.bf16.msra.mxu0 %v3226
    %3354 = vmatpush.bf16.msra.mxu0 %v3223
    %3355 = vmatpush.bf16.msra.mxu0 %v3220
    %3356 = vmatpush.bf16.msra.mxu0 %v3217
    %3357 = vmatpush.bf16.msra.mxu0 %v3214
    %3358 = vmatpush.bf16.msra.mxu0 %v3211
    %3359 = vmatmul.bf16.gmra.mxu0 %v3023
    %v3360 = vpop.f32.mrf.mxu0
    %v3361 = vadd.f32 %v3347, %v3360
    %v3362 = vpop.f32.mrf.mxu0
    %v3363 = vadd.f32 %v3349, %v3362
    %3364 = vdwg.mxu0
    %v3381 = vunpack.c.l.b16 %v138
    %v3382 = vunpack.c.h.b16 %v138
    %v3383 = vunpack.c.l.b16 %v139
    %v3384 = vunpack.c.h.b16 %v139
    %v3385 = vunpack.c.l.b16 %v140
    %v3386 = vunpack.c.h.b16 %v140
    %v3387 = vunpack.c.l.b16 %v141
    %v3388 = vunpack.c.h.b16 %v141
    %v3389 = vunpack.c.l.b16 %v142
    %v3390 = vunpack.c.h.b16 %v142
    %v3391 = vunpack.c.l.b16 %v143
    %v3392 = vunpack.c.h.b16 %v143
    %v3393 = vunpack.c.l.b16 %v144
    %v3394 = vunpack.c.h.b16 %v144
    %v3395 = vunpack.c.l.b16 %v145
    %v3396 = vunpack.c.h.b16 %v145
    %v3397 = vunpack.c.l.b16 %v146
    %v3398 = vunpack.c.h.b16 %v146
    %v3399 = vunpack.c.l.b16 %v147
    %v3400 = vunpack.c.h.b16 %v147
    %v3401 = vunpack.c.l.b16 %v148
    %v3402 = vunpack.c.h.b16 %v148
    %v3403 = vunpack.c.l.b16 %v149
    %v3404 = vunpack.c.h.b16 %v149
    %v3405 = vunpack.c.l.b16 %v150
    %v3406 = vunpack.c.h.b16 %v150
    %v3407 = vunpack.c.l.b16 %v151
    %v3408 = vunpack.c.h.b16 %v151
    %v3409 = vunpack.c.l.b16 %v152
    %v3410 = vunpack.c.h.b16 %v152
    %v3411 = vunpack.c.l.b16 %v153
    %v3412 = vunpack.c.h.b16 %v153
    %v3413 = vpack.c.b16 %v3383, %v3381
    %v3414 = vpack.c.b16 %v3384, %v3382
    %v3415 = vpack.c.b16 %v3387, %v3385
    %v3416 = vpack.c.b16 %v3388, %v3386
    %v3417 = vpack.c.b16 %v3391, %v3389
    %v3418 = vpack.c.b16 %v3392, %v3390
    %v3419 = vpack.c.b16 %v3395, %v3393
    %v3420 = vpack.c.b16 %v3396, %v3394
    %v3421 = vpack.c.b16 %v3399, %v3397
    %v3422 = vpack.c.b16 %v3400, %v3398
    %v3423 = vpack.c.b16 %v3403, %v3401
    %v3424 = vpack.c.b16 %v3404, %v3402
    %v3425 = vpack.c.b16 %v3407, %v3405
    %v3426 = vpack.c.b16 %v3408, %v3406
    %v3427 = vpack.c.b16 %v3411, %v3409
    %v3428 = vpack.c.b16 %v3412, %v3410
    %3445 = vmatpush.bf16.msra.mxu0 %v3427
    %3446 = vmatpush.bf16.msra.mxu0 %v3425
    %3447 = vmatpush.bf16.msra.mxu0 %v3423
    %3448 = vmatpush.bf16.msra.mxu0 %v3421
    %3449 = vmatpush.bf16.msra.mxu0 %v3419
    %3450 = vmatpush.bf16.msra.mxu0 %v3417
    %3451 = vmatpush.bf16.msra.mxu0 %v3415
    %3452 = vmatpush.bf16.msra.mxu0 %v3413
    %3453 = vmatmul.bf16.gmra.mxu0 %v2971
    %v3454 = vpop.f32.mrf.mxu0
    %v3455 = vadd.f32 0.0, %v3454
    %v3456 = vpop.f32.mrf.mxu0
    %v3457 = vadd.f32 0.0, %v3456
    %3458 = vdwg.mxu0
    %3459 = vmatpush.bf16.msra.mxu0 %v3428
    %3460 = vmatpush.bf16.msra.mxu0 %v3426
    %3461 = vmatpush.bf16.msra.mxu0 %v3424
    %3462 = vmatpush.bf16.msra.mxu0 %v3422
    %3463 = vmatpush.bf16.msra.mxu0 %v3420
    %3464 = vmatpush.bf16.msra.mxu0 %v3418
    %3465 = vmatpush.bf16.msra.mxu0 %v3416
    %3466 = vmatpush.bf16.msra.mxu0 %v3414
    %3467 = vmatmul.bf16.gmra.mxu0 %v2971
    %v3468 = vpop.f32.mrf.mxu0
    %v3469 = vadd.f32 0.0, %v3468
    %v3470 = vpop.f32.mrf.mxu0
    %v3471 = vadd.f32 0.0, %v3470
    %3472 = vdwg.mxu0
    %v3473 = vperm.slane %v31, 0
    %v3474 = vadd.f32 %v3305, %v3473
    %v3475 = vadd.f32 %v3307, %v3473
    %v3476 = vadd.f32 %v3474, %v3455
    %v3477 = vadd.f32 %v3475, %v3457
    %v3478 = vperm.slane %v34, 0
    %v3479 = vadd.f32 %v3476, %v3478
    %v3480 = vadd.f32 %v3477, %v3478
    %v3481 = vxor.u32 %v3479, 2147483648
    %v3482 = vxor.u32 %v3480, 2147483648
    %v3483 = vmul.f32 %v3481, 1.442695
    %v3484 = vpow.pop %v3483
    %v3485 = vmul.f32 %v3482, 1.442695
    %v3486 = vpow.pop %v3485
    %v3487 = vadd.f32 %v3484, 1.0
    %v3488 = vadd.f32 %v3486, 1.0
    %v3489 = vrcp.pop %v3487
    %v3490 = vmul.f32 %v3487, %v3489
    %v3491 = vsub.f32 1.0, %v3490
    %v3492 = vmul.f32 %v3489, %v3491
    %v3493 = vadd.f32 %v3489, %v3492
    %vm3494 = vweird.f32 %v3487
    %vm3495 = vweird.f32 %v3489
    %vm3496 = vmor %vm3494, %vm3495
    %v3497 = vsel %vm3496, %v3489, %v3493
    %v3498 = vand.u32 2147483647, %v3487
    %vm3499 = vcmp.eq.f32.partialorder %v3498, 8.507059e+37
    %v3500 = vand.u32 %v3487, 2147483648
    %v3501 = vor.u32 1.1754944e-38, %v3500
    %v3502 = vsel %vm3499, %v3501, %v3497
    %v3503 = vmul.f32 1.0, %v3502
    %v3504 = vrcp.pop %v3488
    %v3505 = vmul.f32 %v3488, %v3504
    %v3506 = vsub.f32 1.0, %v3505
    %v3507 = vmul.f32 %v3504, %v3506
    %v3508 = vadd.f32 %v3504, %v3507
    %vm3509 = vweird.f32 %v3488
    %vm3510 = vweird.f32 %v3504
    %vm3511 = vmor %vm3509, %vm3510
    %v3512 = vsel %vm3511, %v3504, %v3508
    %v3513 = vand.u32 2147483647, %v3488
    %vm3514 = vcmp.eq.f32.partialorder %v3513, 8.507059e+37
    %v3515 = vand.u32 %v3488, 2147483648
    %v3516 = vor.u32 1.1754944e-38, %v3515
    %v3517 = vsel %vm3514, %v3516, %v3512
    %v3518 = vmul.f32 1.0, %v3517
    %v3519 = vperm.slane %v32, 0
    %v3520 = vadd.f32 %v3333, %v3519
    %v3521 = vadd.f32 %v3335, %v3519
    %v3522 = vadd.f32 %v3520, %v3469
    %v3523 = vadd.f32 %v3521, %v3471
    %v3524 = vperm.slane %v35, 0
    %v3525 = vadd.f32 %v3522, %v3524
    %v3526 = vadd.f32 %v3523, %v3524
    %v3527 = vxor.u32 %v3525, 2147483648
    %v3528 = vxor.u32 %v3526, 2147483648
    %v3529 = vmul.f32 %v3527, 1.442695
    %v3530 = vpow.pop %v3529
    %v3531 = vmul.f32 %v3528, 1.442695
    %v3532 = vpow.pop %v3531
    %v3533 = vadd.f32 %v3530, 1.0
    %v3534 = vadd.f32 %v3532, 1.0
    %v3535 = vrcp.pop %v3533
    %v3536 = vmul.f32 %v3533, %v3535
    %v3537 = vsub.f32 1.0, %v3536
    %v3538 = vmul.f32 %v3535, %v3537
    %v3539 = vadd.f32 %v3535, %v3538
    %vm3540 = vweird.f32 %v3533
    %vm3541 = vweird.f32 %v3535
    %vm3542 = vmor %vm3540, %vm3541
    %v3543 = vsel %vm3542, %v3535, %v3539
    %v3544 = vand.u32 2147483647, %v3533
    %vm3545 = vcmp.eq.f32.partialorder %v3544, 8.507059e+37
    %v3546 = vand.u32 %v3533, 2147483648
    %v3547 = vor.u32 1.1754944e-38, %v3546
    %v3548 = vsel %vm3545, %v3547, %v3543
    %v3549 = vmul.f32 1.0, %v3548
    %v3550 = vrcp.pop %v3534
    %v3551 = vmul.f32 %v3534, %v3550
    %v3552 = vsub.f32 1.0, %v3551
    %v3553 = vmul.f32 %v3550, %v3552
    %v3554 = vadd.f32 %v3550, %v3553
    %vm3555 = vweird.f32 %v3534
    %vm3556 = vweird.f32 %v3550
    %vm3557 = vmor %vm3555, %vm3556
    %v3558 = vsel %vm3557, %v3550, %v3554
    %v3559 = vand.u32 2147483647, %v3534
    %vm3560 = vcmp.eq.f32.partialorder %v3559, 8.507059e+37
    %v3561 = vand.u32 %v3534, 2147483648
    %v3562 = vor.u32 1.1754944e-38, %v3561
    %v3563 = vsel %vm3560, %v3562, %v3558
    %v3564 = vmul.f32 1.0, %v3563
    %v3565 = vperm.slane %v33, 0
    %v3566 = vadd.f32 %v3361, %v3565
    %v3567 = vadd.f32 %v3363, %v3565
    %v3568 = vmul.f32 %v3549, %v2841
    %v3569 = vmul.f32 %v3564, %v2958
    %v3570 = vpack.c.bf16 %v3569, %v3568
    %v3587 = vunpack.c.l.b16 %v154
    %v3588 = vunpack.c.l.b16 %v155
    %v3589 = vunpack.c.l.b16 %v156
    %v3590 = vunpack.c.l.b16 %v157
    %v3591 = vunpack.c.l.b16 %v158
    %v3592 = vunpack.c.l.b16 %v159
    %v3593 = vunpack.c.l.b16 %v160
    %v3594 = vunpack.c.l.b16 %v161
    %v3595 = vunpack.c.l.b16 %v162
    %v3596 = vunpack.c.l.b16 %v163
    %v3597 = vunpack.c.l.b16 %v164
    %v3598 = vunpack.c.l.b16 %v165
    %v3599 = vunpack.c.l.b16 %v166
    %v3600 = vunpack.c.l.b16 %v167
    %v3601 = vunpack.c.l.b16 %v168
    %v3602 = vunpack.c.l.b16 %v169
    %v3603 = vpack.c.b16 %v3588, %v3587
    %v3604 = vpack.c.b16 %v3590, %v3589
    %v3605 = vpack.c.b16 %v3592, %v3591
    %v3606 = vpack.c.b16 %v3594, %v3593
    %v3607 = vpack.c.b16 %v3596, %v3595
    %v3608 = vpack.c.b16 %v3598, %v3597
    %v3609 = vpack.c.b16 %v3600, %v3599
    %v3610 = vpack.c.b16 %v3602, %v3601
    %3619 = vmatpush.bf16.msra.mxu0 %v3610
    %3620 = vmatpush.bf16.msra.mxu0 %v3609
    %3621 = vmatpush.bf16.msra.mxu0 %v3608
    %3622 = vmatpush.bf16.msra.mxu0 %v3607
    %3623 = vmatpush.bf16.msra.mxu0 %v3606
    %3624 = vmatpush.bf16.msra.mxu0 %v3605
    %3625 = vmatpush.bf16.msra.mxu0 %v3604
    %3626 = vmatpush.bf16.msra.mxu0 %v3603
    %3627 = vmatmul.bf16.gmra.mxu0 %v3570
    %v3628 = vpop.f32.mrf.mxu0
    %v3629 = vadd.f32 0.0, %v3628
    %v3630 = vpop.f32.mrf.mxu0
    %v3631 = vadd.f32 0.0, %v3630
    %3632 = vdwg.mxu0
    %v3633 = vadd.f32 %v3566, %v3629
    %v3634 = vadd.f32 %v3567, %v3631
    %v3635 = vperm.slane %v36, 0
    %v3636 = vadd.f32 %v3633, %v3635
    %v3637 = vadd.f32 %v3634, %v3635
    %v3638 = vtanh.pop %v3636
    %v3639 = vtanh.pop %v3637
    %v3640 = vsub.f32 1.0, %v3503
    %v3641 = vsub.f32 1.0, %v3518
    %v3642 = vmul.f32 %v3640, %v2841
    %v3643 = vmul.f32 %v3641, %v2958
    %v3644 = vmul.f32 %v3503, %v3638
    %v3645 = vmul.f32 %v3518, %v3639
    %v3646 = vadd.f32 %v3642, %v3644
    %v3647 = vadd.f32 %v3643, %v3645
    %v3648 = vpack.c.bf16 %v3647, %v3646
    %3649 = vmatpush.bf16.msra.mxu0 0
    %3650 = vmatpush.bf16.msra.mxu0 0
    %3651 = vmatpush.bf16.msra.mxu0 0
    %3652 = vmatpush.bf16.msra.mxu0 0
    %3653 = vmatpush.bf16.msra.mxu0 0
    %3654 = vmatpush.bf16.msra.mxu0 0
    %3655 = vmatpush.bf16.msra.mxu0 0
    %3656 = vmatpush.bf16.msra.mxu0 %v3648
    %3657 = vmatmul.bf16.gmra.mxu0 %v2974
    %v3658 = vpop.f32.mrf.mxu0
    %v3659 = vadd.f32 0.0, %v3658
    %v3660 = vpop.f32.mrf.mxu0
    %v3661 = vadd.f32 0.0, %v3660
    %3662 = vdwg.mxu0
    %3663 = vmatpush.bf16.msra.mxu0 0
    %3664 = vmatpush.bf16.msra.mxu0 0
    %3665 = vmatpush.bf16.msra.mxu0 0
    %3666 = vmatpush.bf16.msra.mxu0 0
    %3667 = vmatpush.bf16.msra.mxu0 0
    %3668 = vmatpush.bf16.msra.mxu0 0
    %3669 = vmatpush.bf16.msra.mxu0 0
    %3670 = vmatpush.bf16.msra.mxu0 %v3648
    %3671 = vmatmul.bf16.gmra.mxu0 %v2993
    %v3672 = vpop.f32.mrf.mxu0
    %v3673 = vadd.f32 0.0, %v3672
    %v3674 = vpop.f32.mrf.mxu0
    %v3675 = vadd.f32 0.0, %v3674
    %3676 = vdwg.mxu0
    %v3677 = vpack.c.bf16 %v3659, %v3659
    %v3678 = vpack.c.bf16 %v3661, %v3661
    %v3679 = vpack.c.bf16 %v3673, %v3673
    %v3680 = vpack.c.bf16 %v3675, %v3675
    %v3683 = vunpack.c.l.b16 %v3677
    %v3684 = vunpack.c.l.b16 %v3678
    %v3685 = vpack.c.b16 %v3684, %v3683
    %v3689 = vunpack.c.l.b16 %v3679
    %v3690 = vunpack.c.l.b16 %v3680
    %v3691 = vpack.c.b16 %v3690, %v3689
    %3693 = vmatpush.bf16.msra.mxu0 %v3206
    %3694 = vmatpush.bf16.msra.mxu0 %v3203
    %3695 = vmatpush.bf16.msra.mxu0 %v3200
    %3696 = vmatpush.bf16.msra.mxu0 %v3197
    %3697 = vmatpush.bf16.msra.mxu0 %v3194
    %3698 = vmatpush.bf16.msra.mxu0 %v3191
    %3699 = vmatpush.bf16.msra.mxu0 %v3188
    %3700 = vmatpush.bf16.msra.mxu0 %v3185
    %3701 = vmatmul.bf16.gmra.mxu0 %v3685
    %v3702 = vpop.f32.mrf.mxu0
    %v3703 = vadd.f32 0.0, %v3702
    %v3704 = vpop.f32.mrf.mxu0
    %v3705 = vadd.f32 0.0, %v3704
    %3706 = vdwg.mxu0
    %3707 = vmatpush.bf16.msra.mxu0 %v3230
    %3708 = vmatpush.bf16.msra.mxu0 %v3227
    %3709 = vmatpush.bf16.msra.mxu0 %v3224
    %3710 = vmatpush.bf16.msra.mxu0 %v3221
    %3711 = vmatpush.bf16.msra.mxu0 %v3218
    %3712 = vmatpush.bf16.msra.mxu0 %v3215
    %3713 = vmatpush.bf16.msra.mxu0 %v3212
    %3714 = vmatpush.bf16.msra.mxu0 %v3209
    %3715 = vmatmul.bf16.gmra.mxu0 %v3691
    %v3716 = vpop.f32.mrf.mxu0
    %v3717 = vadd.f32 %v3703, %v3716
    %v3718 = vpop.f32.mrf.mxu0
    %v3719 = vadd.f32 %v3705, %v3718
    %3720 = vdwg.mxu0
    %3721 = vmatpush.bf16.msra.mxu0 %v3207
    %3722 = vmatpush.bf16.msra.mxu0 %v3204
    %3723 = vmatpush.bf16.msra.mxu0 %v3201
    %3724 = vmatpush.bf16.msra.mxu0 %v3198
    %3725 = vmatpush.bf16.msra.mxu0 %v3195
    %3726 = vmatpush.bf16.msra.mxu0 %v3192
    %3727 = vmatpush.bf16.msra.mxu0 %v3189
    %3728 = vmatpush.bf16.msra.mxu0 %v3186
    %3729 = vmatmul.bf16.gmra.mxu0 %v3685
    %v3730 = vpop.f32.mrf.mxu0
    %v3731 = vadd.f32 0.0, %v3730
    %v3732 = vpop.f32.mrf.mxu0
    %v3733 = vadd.f32 0.0, %v3732
    %3734 = vdwg.mxu0
    %3735 = vmatpush.bf16.msra.mxu0 %v3231
    %3736 = vmatpush.bf16.msra.mxu0 %v3228
    %3737 = vmatpush.bf16.msra.mxu0 %v3225
    %3738 = vmatpush.bf16.msra.mxu0 %v3222
    %3739 = vmatpush.bf16.msra.mxu0 %v3219
    %3740 = vmatpush.bf16.msra.mxu0 %v3216
    %3741 = vmatpush.bf16.msra.mxu0 %v3213
    %3742 = vmatpush.bf16.msra.mxu0 %v3210
    %3743 = vmatmul.bf16.gmra.mxu0 %v3691
    %v3744 = vpop.f32.mrf.mxu0
    %v3745 = vadd.f32 %v3731, %v3744
    %v3746 = vpop.f32.mrf.mxu0
    %v3747 = vadd.f32 %v3733, %v3746
    %3748 = vdwg.mxu0
    %3749 = vmatpush.bf16.msra.mxu0 %v3208
    %3750 = vmatpush.bf16.msra.mxu0 %v3205
    %3751 = vmatpush.bf16.msra.mxu0 %v3202
    %3752 = vmatpush.bf16.msra.mxu0 %v3199
    %3753 = vmatpush.bf16.msra.mxu0 %v3196
    %3754 = vmatpush.bf16.msra.mxu0 %v3193
    %3755 = vmatpush.bf16.msra.mxu0 %v3190
    %3756 = vmatpush.bf16.msra.mxu0 %v3187
    %3757 = vmatmul.bf16.gmra.mxu0 %v3685
    %v3758 = vpop.f32.mrf.mxu0
    %v3759 = vadd.f32 0.0, %v3758
    %v3760 = vpop.f32.mrf.mxu0
    %v3761 = vadd.f32 0.0, %v3760
    %3762 = vdwg.mxu0
    %3763 = vmatpush.bf16.msra.mxu0 %v3232
    %3764 = vmatpush.bf16.msra.mxu0 %v3229
    %3765 = vmatpush.bf16.msra.mxu0 %v3226
    %3766 = vmatpush.bf16.msra.mxu0 %v3223
    %3767 = vmatpush.bf16.msra.mxu0 %v3220
    %3768 = vmatpush.bf16.msra.mxu0 %v3217
    %3769 = vmatpush.bf16.msra.mxu0 %v3214
    %3770 = vmatpush.bf16.msra.mxu0 %v3211
    %3771 = vmatmul.bf16.gmra.mxu0 %v3691
    %v3772 = vpop.f32.mrf.mxu0
    %v3773 = vadd.f32 %v3759, %v3772
    %v3774 = vpop.f32.mrf.mxu0
    %v3775 = vadd.f32 %v3761, %v3774
    %3776 = vdwg.mxu0
    %3777 = vmatpush.bf16.msra.mxu0 %v3427
    %3778 = vmatpush.bf16.msra.mxu0 %v3425
    %3779 = vmatpush.bf16.msra.mxu0 %v3423
    %3780 = vmatpush.bf16.msra.mxu0 %v3421
    %3781 = vmatpush.bf16.msra.mxu0 %v3419
    %3782 = vmatpush.bf16.msra.mxu0 %v3417
    %3783 = vmatpush.bf16.msra.mxu0 %v3415
    %3784 = vmatpush.bf16.msra.mxu0 %v3413
    %3785 = vmatmul.bf16.gmra.mxu0 %v3648
    %v3786 = vpop.f32.mrf.mxu0
    %v3787 = vadd.f32 0.0, %v3786
    %v3788 = vpop.f32.mrf.mxu0
    %v3789 = vadd.f32 0.0, %v3788
    %3790 = vdwg.mxu0
    %3791 = vmatpush.bf16.msra.mxu0 %v3428
    %3792 = vmatpush.bf16.msra.mxu0 %v3426
    %3793 = vmatpush.bf16.msra.mxu0 %v3424
    %3794 = vmatpush.bf16.msra.mxu0 %v3422
    %3795 = vmatpush.bf16.msra.mxu0 %v3420
    %3796 = vmatpush.bf16.msra.mxu0 %v3418
    %3797 = vmatpush.bf16.msra.mxu0 %v3416
    %3798 = vmatpush.bf16.msra.mxu0 %v3414
    %3799 = vmatmul.bf16.gmra.mxu0 %v3648
    %v3800 = vpop.f32.mrf.mxu0
    %v3801 = vadd.f32 0.0, %v3800
    %v3802 = vpop.f32.mrf.mxu0
    %v3803 = vadd.f32 0.0, %v3802
    %3804 = vdwg.mxu0
    %v3805 = vadd.f32 %v3717, %v3473
    %v3806 = vadd.f32 %v3719, %v3473
    %v3807 = vadd.f32 %v3805, %v3787
    %v3808 = vadd.f32 %v3806, %v3789
    %v3809 = vadd.f32 %v3807, %v3478
    %v3810 = vadd.f32 %v3808, %v3478
    %v3811 = vxor.u32 %v3809, 2147483648
    %v3812 = vxor.u32 %v3810, 2147483648
    %v3813 = vmul.f32 %v3811, 1.442695
    %v3814 = vpow.pop %v3813
    %v3815 = vmul.f32 %v3812, 1.442695
    %v3816 = vpow.pop %v3815
    %v3817 = vadd.f32 %v3814, 1.0
    %v3818 = vadd.f32 %v3816, 1.0
    %v3819 = vrcp.pop %v3817
    %v3820 = vmul.f32 %v3817, %v3819
    %v3821 = vsub.f32 1.0, %v3820
    %v3822 = vmul.f32 %v3819, %v3821
    %v3823 = vadd.f32 %v3819, %v3822
    %vm3824 = vweird.f32 %v3817
    %vm3825 = vweird.f32 %v3819
    %vm3826 = vmor %vm3824, %vm3825
    %v3827 = vsel %vm3826, %v3819, %v3823
    %v3828 = vand.u32 2147483647, %v3817
    %vm3829 = vcmp.eq.f32.partialorder %v3828, 8.507059e+37
    %v3830 = vand.u32 %v3817, 2147483648
    %v3831 = vor.u32 1.1754944e-38, %v3830
    %v3832 = vsel %vm3829, %v3831, %v3827
    %v3833 = vmul.f32 1.0, %v3832
    %v3834 = vrcp.pop %v3818
    %v3835 = vmul.f32 %v3818, %v3834
    %v3836 = vsub.f32 1.0, %v3835
    %v3837 = vmul.f32 %v3834, %v3836
    %v3838 = vadd.f32 %v3834, %v3837
    %vm3839 = vweird.f32 %v3818
    %vm3840 = vweird.f32 %v3834
    %vm3841 = vmor %vm3839, %vm3840
    %v3842 = vsel %vm3841, %v3834, %v3838
    %v3843 = vand.u32 2147483647, %v3818
    %vm3844 = vcmp.eq.f32.partialorder %v3843, 8.507059e+37
    %v3845 = vand.u32 %v3818, 2147483648
    %v3846 = vor.u32 1.1754944e-38, %v3845
    %v3847 = vsel %vm3844, %v3846, %v3842
    %v3848 = vmul.f32 1.0, %v3847
    %v3849 = vadd.f32 %v3745, %v3519
    %v3850 = vadd.f32 %v3747, %v3519
    %v3851 = vadd.f32 %v3849, %v3801
    %v3852 = vadd.f32 %v3850, %v3803
    %v3853 = vadd.f32 %v3851, %v3524
    %v3854 = vadd.f32 %v3852, %v3524
    %v3855 = vxor.u32 %v3853, 2147483648
    %v3856 = vxor.u32 %v3854, 2147483648
    %v3857 = vmul.f32 %v3855, 1.442695
    %v3858 = vpow.pop %v3857
    %v3859 = vmul.f32 %v3856, 1.442695
    %v3860 = vpow.pop %v3859
    %v3861 = vadd.f32 %v3858, 1.0
    %v3862 = vadd.f32 %v3860, 1.0
    %v3863 = vrcp.pop %v3861
    %v3864 = vmul.f32 %v3861, %v3863
    %v3865 = vsub.f32 1.0, %v3864
    %v3866 = vmul.f32 %v3863, %v3865
    %v3867 = vadd.f32 %v3863, %v3866
    %vm3868 = vweird.f32 %v3861
    %vm3869 = vweird.f32 %v3863
    %vm3870 = vmor %vm3868, %vm3869
    %v3871 = vsel %vm3870, %v3863, %v3867
    %v3872 = vand.u32 2147483647, %v3861
    %vm3873 = vcmp.eq.f32.partialorder %v3872, 8.507059e+37
    %v3874 = vand.u32 %v3861, 2147483648
    %v3875 = vor.u32 1.1754944e-38, %v3874
    %v3876 = vsel %vm3873, %v3875, %v3871
    %v3877 = vmul.f32 1.0, %v3876
    %v3878 = vrcp.pop %v3862
    %v3879 = vmul.f32 %v3862, %v3878
    %v3880 = vsub.f32 1.0, %v3879
    %v3881 = vmul.f32 %v3878, %v3880
    %v3882 = vadd.f32 %v3878, %v3881
    %vm3883 = vweird.f32 %v3862
    %vm3884 = vweird.f32 %v3878
    %vm3885 = vmor %vm3883, %vm3884
    %v3886 = vsel %vm3885, %v3878, %v3882
    %v3887 = vand.u32 2147483647, %v3862
    %vm3888 = vcmp.eq.f32.partialorder %v3887, 8.507059e+37
    %v3889 = vand.u32 %v3862, 2147483648
    %v3890 = vor.u32 1.1754944e-38, %v3889
    %v3891 = vsel %vm3888, %v3890, %v3886
    %v3892 = vmul.f32 1.0, %v3891
    %v3893 = vadd.f32 %v3773, %v3565
    %v3894 = vadd.f32 %v3775, %v3565
    %v3895 = vmul.f32 %v3877, %v3646
    %v3896 = vmul.f32 %v3892, %v3647
    %v3897 = vpack.c.bf16 %v3896, %v3895
    %3898 = vmatpush.bf16.msra.mxu0 %v3610
    %3899 = vmatpush.bf16.msra.mxu0 %v3609
    %3900 = vmatpush.bf16.msra.mxu0 %v3608
    %3901 = vmatpush.bf16.msra.mxu0 %v3607
    %3902 = vmatpush.bf16.msra.mxu0 %v3606
    %3903 = vmatpush.bf16.msra.mxu0 %v3605
    %3904 = vmatpush.bf16.msra.mxu0 %v3604
    %3905 = vmatpush.bf16.msra.mxu0 %v3603
    %3906 = vmatmul.bf16.gmra.mxu0 %v3897
    %v3907 = vpop.f32.mrf.mxu0
    %v3908 = vadd.f32 0.0, %v3907
    %v3909 = vpop.f32.mrf.mxu0
    %v3910 = vadd.f32 0.0, %v3909
    %3911 = vdwg.mxu0
    %v3912 = vadd.f32 %v3893, %v3908
    %v3913 = vadd.f32 %v3894, %v3910
    %v3914 = vadd.f32 %v3912, %v3635
    %v3915 = vadd.f32 %v3913, %v3635
    %v3916 = vtanh.pop %v3914
    %v3917 = vtanh.pop %v3915
    %v3918 = vsub.f32 1.0, %v3833
    %v3919 = vsub.f32 1.0, %v3848
    %v3920 = vmul.f32 %v3918, %v3646
    %v3921 = vmul.f32 %v3919, %v3647
    %v3922 = vmul.f32 %v3833, %v3916
    %v3923 = vmul.f32 %v3848, %v3917
    %v3924 = vadd.f32 %v3920, %v3922
    %v3925 = vadd.f32 %v3921, %v3923
    %v3926 = vpack.c.bf16 %v3925, %v3924
    %3927 = vmatpush.bf16.msra.mxu0 0
    %3928 = vmatpush.bf16.msra.mxu0 0
    %3929 = vmatpush.bf16.msra.mxu0 0
    %3930 = vmatpush.bf16.msra.mxu0 0
    %3931 = vmatpush.bf16.msra.mxu0 0
    %3932 = vmatpush.bf16.msra.mxu0 0
    %3933 = vmatpush.bf16.msra.mxu0 0
    %3934 = vmatpush.bf16.msra.mxu0 %v3926
    %3935 = vmatmul.bf16.gmra.mxu0 %v2974
    %v3936 = vpop.f32.mrf.mxu0
    %v3937 = vadd.f32 0.0, %v3936
    %v3938 = vpop.f32.mrf.mxu0
    %v3939 = vadd.f32 0.0, %v3938
    %3940 = vdwg.mxu0
    %3941 = vmatpush.bf16.msra.mxu0 0
    %3942 = vmatpush.bf16.msra.mxu0 0
    %3943 = vmatpush.bf16.msra.mxu0 0
    %3944 = vmatpush.bf16.msra.mxu0 0
    %3945 = vmatpush.bf16.msra.mxu0 0
    %3946 = vmatpush.bf16.msra.mxu0 0
    %3947 = vmatpush.bf16.msra.mxu0 0
    %3948 = vmatpush.bf16.msra.mxu0 %v3926
    %3949 = vmatmul.bf16.gmra.mxu0 %v2993
    %v3950 = vpop.f32.mrf.mxu0
    %v3951 = vadd.f32 0.0, %v3950
    %v3952 = vpop.f32.mrf.mxu0
    %v3953 = vadd.f32 0.0, %v3952
    %3954 = vdwg.mxu0
    %v3955 = vpack.c.bf16 %v3937, %v3937
    %v3956 = vpack.c.bf16 %v3939, %v3939
    %v3957 = vpack.c.bf16 %v3951, %v3951
    %v3958 = vpack.c.bf16 %v3953, %v3953
    %v3961 = vunpack.c.l.b16 %v3955
    %v3962 = vunpack.c.l.b16 %v3956
    %v3963 = vpack.c.b16 %v3962, %v3961
    %v3967 = vunpack.c.l.b16 %v3957
    %v3968 = vunpack.c.l.b16 %v3958
    %v3969 = vpack.c.b16 %v3968, %v3967
    %3971 = vmatpush.bf16.msra.mxu0 %v3206
    %3972 = vmatpush.bf16.msra.mxu0 %v3203
    %3973 = vmatpush.bf16.msra.mxu0 %v3200
    %3974 = vmatpush.bf16.msra.mxu0 %v3197
    %3975 = vmatpush.bf16.msra.mxu0 %v3194
    %3976 = vmatpush.bf16.msra.mxu0 %v3191
    %3977 = vmatpush.bf16.msra.mxu0 %v3188
    %3978 = vmatpush.bf16.msra.mxu0 %v3185
    %3979 = vmatmul.bf16.gmra.mxu0 %v3963
    %v3980 = vpop.f32.mrf.mxu0
    %v3981 = vadd.f32 0.0, %v3980
    %v3982 = vpop.f32.mrf.mxu0
    %v3983 = vadd.f32 0.0, %v3982
    %3984 = vdwg.mxu0
    %3985 = vmatpush.bf16.msra.mxu0 %v3230
    %3986 = vmatpush.bf16.msra.mxu0 %v3227
    %3987 = vmatpush.bf16.msra.mxu0 %v3224
    %3988 = vmatpush.bf16.msra.mxu0 %v3221
    %3989 = vmatpush.bf16.msra.mxu0 %v3218
    %3990 = vmatpush.bf16.msra.mxu0 %v3215
    %3991 = vmatpush.bf16.msra.mxu0 %v3212
    %3992 = vmatpush.bf16.msra.mxu0 %v3209
    %3993 = vmatmul.bf16.gmra.mxu0 %v3969
    %v3994 = vpop.f32.mrf.mxu0
    %v3995 = vadd.f32 %v3981, %v3994
    %v3996 = vpop.f32.mrf.mxu0
    %v3997 = vadd.f32 %v3983, %v3996
    %3998 = vdwg.mxu0
    %3999 = vmatpush.bf16.msra.mxu0 %v3207
    %4000 = vmatpush.bf16.msra.mxu0 %v3204
    %4001 = vmatpush.bf16.msra.mxu0 %v3201
    %4002 = vmatpush.bf16.msra.mxu0 %v3198
    %4003 = vmatpush.bf16.msra.mxu0 %v3195
    %4004 = vmatpush.bf16.msra.mxu0 %v3192
    %4005 = vmatpush.bf16.msra.mxu0 %v3189
    %4006 = vmatpush.bf16.msra.mxu0 %v3186
    %4007 = vmatmul.bf16.gmra.mxu0 %v3963
    %v4008 = vpop.f32.mrf.mxu0
    %v4009 = vadd.f32 0.0, %v4008
    %v4010 = vpop.f32.mrf.mxu0
    %v4011 = vadd.f32 0.0, %v4010
    %4012 = vdwg.mxu0
    %4013 = vmatpush.bf16.msra.mxu0 %v3231
    %4014 = vmatpush.bf16.msra.mxu0 %v3228
    %4015 = vmatpush.bf16.msra.mxu0 %v3225
    %4016 = vmatpush.bf16.msra.mxu0 %v3222
    %4017 = vmatpush.bf16.msra.mxu0 %v3219
    %4018 = vmatpush.bf16.msra.mxu0 %v3216
    %4019 = vmatpush.bf16.msra.mxu0 %v3213
    %4020 = vmatpush.bf16.msra.mxu0 %v3210
    %4021 = vmatmul.bf16.gmra.mxu0 %v3969
    %v4022 = vpop.f32.mrf.mxu0
    %v4023 = vadd.f32 %v4009, %v4022
    %v4024 = vpop.f32.mrf.mxu0
    %v4025 = vadd.f32 %v4011, %v4024
    %4026 = vdwg.mxu0
    %4027 = vmatpush.bf16.msra.mxu0 %v3208
    %4028 = vmatpush.bf16.msra.mxu0 %v3205
    %4029 = vmatpush.bf16.msra.mxu0 %v3202
    %4030 = vmatpush.bf16.msra.mxu0 %v3199
    %4031 = vmatpush.bf16.msra.mxu0 %v3196
    %4032 = vmatpush.bf16.msra.mxu0 %v3193
    %4033 = vmatpush.bf16.msra.mxu0 %v3190
    %4034 = vmatpush.bf16.msra.mxu0 %v3187
    %4035 = vmatmul.bf16.gmra.mxu0 %v3963
    %v4036 = vpop.f32.mrf.mxu0
    %v4037 = vadd.f32 0.0, %v4036
    %v4038 = vpop.f32.mrf.mxu0
    %v4039 = vadd.f32 0.0, %v4038
    %4040 = vdwg.mxu0
    %4041 = vmatpush.bf16.msra.mxu0 %v3232
    %4042 = vmatpush.bf16.msra.mxu0 %v3229
    %4043 = vmatpush.bf16.msra.mxu0 %v3226
    %4044 = vmatpush.bf16.msra.mxu0 %v3223
    %4045 = vmatpush.bf16.msra.mxu0 %v3220
    %4046 = vmatpush.bf16.msra.mxu0 %v3217
    %4047 = vmatpush.bf16.msra.mxu0 %v3214
    %4048 = vmatpush.bf16.msra.mxu0 %v3211
    %4049 = vmatmul.bf16.gmra.mxu0 %v3969
    %v4050 = vpop.f32.mrf.mxu0
    %v4051 = vadd.f32 %v4037, %v4050
    %v4052 = vpop.f32.mrf.mxu0
    %v4053 = vadd.f32 %v4039, %v4052
    %4054 = vdwg.mxu0
    %4055 = vmatpush.bf16.msra.mxu0 %v3427
    %4056 = vmatpush.bf16.msra.mxu0 %v3425
    %4057 = vmatpush.bf16.msra.mxu0 %v3423
    %4058 = vmatpush.bf16.msra.mxu0 %v3421
    %4059 = vmatpush.bf16.msra.mxu0 %v3419
    %4060 = vmatpush.bf16.msra.mxu0 %v3417
    %4061 = vmatpush.bf16.msra.mxu0 %v3415
    %4062 = vmatpush.bf16.msra.mxu0 %v3413
    %4063 = vmatmul.bf16.gmra.mxu0 %v3926
    %v4064 = vpop.f32.mrf.mxu0
    %v4065 = vadd.f32 0.0, %v4064
    %v4066 = vpop.f32.mrf.mxu0
    %v4067 = vadd.f32 0.0, %v4066
    %4068 = vdwg.mxu0
    %4069 = vmatpush.bf16.msra.mxu0 %v3428
    %4070 = vmatpush.bf16.msra.mxu0 %v3426
    %4071 = vmatpush.bf16.msra.mxu0 %v3424
    %4072 = vmatpush.bf16.msra.mxu0 %v3422
    %4073 = vmatpush.bf16.msra.mxu0 %v3420
    %4074 = vmatpush.bf16.msra.mxu0 %v3418
    %4075 = vmatpush.bf16.msra.mxu0 %v3416
    %4076 = vmatpush.bf16.msra.mxu0 %v3414
    %4077 = vmatmul.bf16.gmra.mxu0 %v3926
    %v4078 = vpop.f32.mrf.mxu0
    %v4079 = vadd.f32 0.0, %v4078
    %v4080 = vpop.f32.mrf.mxu0
    %v4081 = vadd.f32 0.0, %v4080
    %4082 = vdwg.mxu0
    %v4083 = vadd.f32 %v3995, %v3473
    %v4084 = vadd.f32 %v3997, %v3473
    %v4085 = vadd.f32 %v4083, %v4065
    %v4086 = vadd.f32 %v4084, %v4067
    %v4087 = vadd.f32 %v4085, %v3478
    %v4088 = vadd.f32 %v4086, %v3478
    %v4089 = vxor.u32 %v4087, 2147483648
    %v4090 = vxor.u32 %v4088, 2147483648
    %v4091 = vmul.f32 %v4089, 1.442695
    %v4092 = vpow.pop %v4091
    %v4093 = vmul.f32 %v4090, 1.442695
    %v4094 = vpow.pop %v4093
    %v4095 = vadd.f32 %v4092, 1.0
    %v4096 = vadd.f32 %v4094, 1.0
    %v4097 = vrcp.pop %v4095
    %v4098 = vmul.f32 %v4095, %v4097
    %v4099 = vsub.f32 1.0, %v4098
    %v4100 = vmul.f32 %v4097, %v4099
    %v4101 = vadd.f32 %v4097, %v4100
    %vm4102 = vweird.f32 %v4095
    %vm4103 = vweird.f32 %v4097
    %vm4104 = vmor %vm4102, %vm4103
    %v4105 = vsel %vm4104, %v4097, %v4101
    %v4106 = vand.u32 2147483647, %v4095
    %vm4107 = vcmp.eq.f32.partialorder %v4106, 8.507059e+37
    %v4108 = vand.u32 %v4095, 2147483648
    %v4109 = vor.u32 1.1754944e-38, %v4108
    %v4110 = vsel %vm4107, %v4109, %v4105
    %v4111 = vmul.f32 1.0, %v4110
    %v4112 = vrcp.pop %v4096
    %v4113 = vmul.f32 %v4096, %v4112
    %v4114 = vsub.f32 1.0, %v4113
    %v4115 = vmul.f32 %v4112, %v4114
    %v4116 = vadd.f32 %v4112, %v4115
    %vm4117 = vweird.f32 %v4096
    %vm4118 = vweird.f32 %v4112
    %vm4119 = vmor %vm4117, %vm4118
    %v4120 = vsel %vm4119, %v4112, %v4116
    %v4121 = vand.u32 2147483647, %v4096
    %vm4122 = vcmp.eq.f32.partialorder %v4121, 8.507059e+37
    %v4123 = vand.u32 %v4096, 2147483648
    %v4124 = vor.u32 1.1754944e-38, %v4123
    %v4125 = vsel %vm4122, %v4124, %v4120
    %v4126 = vmul.f32 1.0, %v4125
    %v4127 = vadd.f32 %v4023, %v3519
    %v4128 = vadd.f32 %v4025, %v3519
    %v4129 = vadd.f32 %v4127, %v4079
    %v4130 = vadd.f32 %v4128, %v4081
    %v4131 = vadd.f32 %v4129, %v3524
    %v4132 = vadd.f32 %v4130, %v3524
    %v4133 = vxor.u32 %v4131, 2147483648
    %v4134 = vxor.u32 %v4132, 2147483648
    %v4135 = vmul.f32 %v4133, 1.442695
    %v4136 = vpow.pop %v4135
    %v4137 = vmul.f32 %v4134, 1.442695
    %v4138 = vpow.pop %v4137
    %v4139 = vadd.f32 %v4136, 1.0
    %v4140 = vadd.f32 %v4138, 1.0
    %v4141 = vrcp.pop %v4139
    %v4142 = vmul.f32 %v4139, %v4141
    %v4143 = vsub.f32 1.0, %v4142
    %v4144 = vmul.f32 %v4141, %v4143
    %v4145 = vadd.f32 %v4141, %v4144
    %vm4146 = vweird.f32 %v4139
    %vm4147 = vweird.f32 %v4141
    %vm4148 = vmor %vm4146, %vm4147
    %v4149 = vsel %vm4148, %v4141, %v4145
    %v4150 = vand.u32 2147483647, %v4139
    %vm4151 = vcmp.eq.f32.partialorder %v4150, 8.507059e+37
    %v4152 = vand.u32 %v4139, 2147483648
    %v4153 = vor.u32 1.1754944e-38, %v4152
    %v4154 = vsel %vm4151, %v4153, %v4149
    %v4155 = vmul.f32 1.0, %v4154
    %v4156 = vrcp.pop %v4140
    %v4157 = vmul.f32 %v4140, %v4156
    %v4158 = vsub.f32 1.0, %v4157
    %v4159 = vmul.f32 %v4156, %v4158
    %v4160 = vadd.f32 %v4156, %v4159
    %vm4161 = vweird.f32 %v4140
    %vm4162 = vweird.f32 %v4156
    %vm4163 = vmor %vm4161, %vm4162
    %v4164 = vsel %vm4163, %v4156, %v4160
    %v4165 = vand.u32 2147483647, %v4140
    %vm4166 = vcmp.eq.f32.partialorder %v4165, 8.507059e+37
    %v4167 = vand.u32 %v4140, 2147483648
    %v4168 = vor.u32 1.1754944e-38, %v4167
    %v4169 = vsel %vm4166, %v4168, %v4164
    %v4170 = vmul.f32 1.0, %v4169
    %v4171 = vadd.f32 %v4051, %v3565
    %v4172 = vadd.f32 %v4053, %v3565
    %v4173 = vmul.f32 %v4155, %v3924
    %v4174 = vmul.f32 %v4170, %v3925
    %v4175 = vpack.c.bf16 %v4174, %v4173
    %4176 = vmatpush.bf16.msra.mxu0 %v3610
    %4177 = vmatpush.bf16.msra.mxu0 %v3609
    %4178 = vmatpush.bf16.msra.mxu0 %v3608
    %4179 = vmatpush.bf16.msra.mxu0 %v3607
    %4180 = vmatpush.bf16.msra.mxu0 %v3606
    %4181 = vmatpush.bf16.msra.mxu0 %v3605
    %4182 = vmatpush.bf16.msra.mxu0 %v3604
    %4183 = vmatpush.bf16.msra.mxu0 %v3603
    %4184 = vmatmul.bf16.gmra.mxu0 %v4175
    %v4185 = vpop.f32.mrf.mxu0
    %v4186 = vadd.f32 0.0, %v4185
    %v4187 = vpop.f32.mrf.mxu0
    %v4188 = vadd.f32 0.0, %v4187
    %4189 = vdwg.mxu0
    %v4190 = vadd.f32 %v4171, %v4186
    %v4191 = vadd.f32 %v4172, %v4188
    %v4192 = vadd.f32 %v4190, %v3635
    %v4193 = vadd.f32 %v4191, %v3635
    %v4194 = vtanh.pop %v4192
    %v4195 = vtanh.pop %v4193
    %v4196 = vsub.f32 1.0, %v4111
    %v4197 = vsub.f32 1.0, %v4126
    %v4198 = vmul.f32 %v4196, %v3924
    %v4199 = vmul.f32 %v4197, %v3925
    %v4200 = vmul.f32 %v4111, %v4194
    %v4201 = vmul.f32 %v4126, %v4195
    %v4202 = vadd.f32 %v4198, %v4200
    %v4203 = vadd.f32 %v4199, %v4201
    %v4204 = vpack.c.bf16 %v4202, %v4202
    %v4205 = vpack.c.bf16 %v4203, %v4203
    %v4208 = vunpack.c.l.b16 %v4204
    %v4209 = vunpack.c.l.b16 %v4205
    %v4210 = vpack.c.b16 %v4209, %v4208
    %v4212 = vperm.slane %v37, 0
    %v4245 = vunpack.c.l.b16 %v106
    %v4246 = vunpack.c.l.b16 %v107
    %v4247 = vunpack.c.l.b16 %v108
    %v4248 = vunpack.c.l.b16 %v109
    %v4249 = vunpack.c.l.b16 %v110
    %v4250 = vunpack.c.l.b16 %v111
    %v4251 = vunpack.c.l.b16 %v112
    %v4252 = vunpack.c.l.b16 %v113
    %v4253 = vunpack.c.l.b16 %v114
    %v4254 = vunpack.c.l.b16 %v115
    %v4255 = vunpack.c.l.b16 %v116
    %v4256 = vunpack.c.l.b16 %v117
    %v4257 = vunpack.c.l.b16 %v118
    %v4258 = vunpack.c.l.b16 %v119
    %v4259 = vunpack.c.l.b16 %v120
    %v4260 = vunpack.c.l.b16 %v121
    %v4261 = vunpack.c.l.b16 %v122
    %v4262 = vunpack.c.l.b16 %v123
    %v4263 = vunpack.c.l.b16 %v124
    %v4264 = vunpack.c.l.b16 %v125
    %v4265 = vunpack.c.l.b16 %v126
    %v4266 = vunpack.c.l.b16 %v127
    %v4267 = vunpack.c.l.b16 %v128
    %v4268 = vunpack.c.l.b16 %v129
    %v4269 = vunpack.c.l.b16 %v130
    %v4270 = vunpack.c.l.b16 %v131
    %v4271 = vunpack.c.l.b16 %v132
    %v4272 = vunpack.c.l.b16 %v133
    %v4273 = vunpack.c.l.b16 %v134
    %v4274 = vunpack.c.l.b16 %v135
    %v4275 = vunpack.c.l.b16 %v136
    %v4276 = vunpack.c.l.b16 %v137
    %v4277 = vpack.c.b16 %v4246, %v4245
    %v4278 = vpack.c.b16 %v4248, %v4247
    %v4279 = vpack.c.b16 %v4250, %v4249
    %v4280 = vpack.c.b16 %v4252, %v4251
    %v4281 = vpack.c.b16 %v4254, %v4253
    %v4282 = vpack.c.b16 %v4256, %v4255
    %v4283 = vpack.c.b16 %v4258, %v4257
    %v4284 = vpack.c.b16 %v4260, %v4259
    %v4285 = vpack.c.b16 %v4262, %v4261
    %v4286 = vpack.c.b16 %v4264, %v4263
    %v4287 = vpack.c.b16 %v4266, %v4265
    %v4288 = vpack.c.b16 %v4268, %v4267
    %v4289 = vpack.c.b16 %v4270, %v4269
    %v4290 = vpack.c.b16 %v4272, %v4271
    %v4291 = vpack.c.b16 %v4274, %v4273
    %v4292 = vpack.c.b16 %v4276, %v4275
    %4309 = vmatpush.bf16.msra.mxu0 %v4284
    %4310 = vmatpush.bf16.msra.mxu0 %v4283
    %4311 = vmatpush.bf16.msra.mxu0 %v4282
    %4312 = vmatpush.bf16.msra.mxu0 %v4281
    %4313 = vmatpush.bf16.msra.mxu0 %v4280
    %4314 = vmatpush.bf16.msra.mxu0 %v4279
    %4315 = vmatpush.bf16.msra.mxu0 %v4278
    %4316 = vmatpush.bf16.msra.mxu0 %v4277
    %4317 = vmatmul.bf16.gmra.mxu0 %v4210
    %v4318 = vpop.f32.mrf.mxu0
    %v4319 = vadd.f32 %v4212, %v4318
    %v4320 = vpop.f32.mrf.mxu0
    %v4321 = vadd.f32 %v4212, %v4320
    %4322 = vdwg.mxu0
    %4323 = vmatpush.bf16.msra.mxu0 %v4292
    %4324 = vmatpush.bf16.msra.mxu0 %v4291
    %4325 = vmatpush.bf16.msra.mxu0 %v4290
    %4326 = vmatpush.bf16.msra.mxu0 %v4289
    %4327 = vmatpush.bf16.msra.mxu0 %v4288
    %4328 = vmatpush.bf16.msra.mxu0 %v4287
    %4329 = vmatpush.bf16.msra.mxu0 %v4286
    %4330 = vmatpush.bf16.msra.mxu0 %v4285
    %4331 = vmatmul.bf16.gmra.mxu0 %v2971
    %v4332 = vpop.f32.mrf.mxu0
    %v4333 = vadd.f32 %v4319, %v4332
    %v4334 = vpop.f32.mrf.mxu0
    %v4335 = vadd.f32 %v4321, %v4334
    %4336 = vdwg.mxu0
    %v4337 = vtanh.pop %v4333
    %v4338 = vtanh.pop %v4335
    %v4339 = vmul.f32 %v4337, %v38
    %v4340 = vmul.f32 %v4338, %v38
    %4341 = vadd.xlane.f32.xlu0 %v4339
    %v4342 = vpop.xlane.xlu0 %4341
    %4343 = vadd.xlane.f32.xlu0 %v4340
    %v4344 = vpop.xlane.xlu0 %4343
    %v4345 = vperm.slane %v39, 0
    %v4347 = vlaneseq
    %v4348 = vshrl.u32 %v4347, 7
    %4350 = vset.pattern.permute.xlu0 %v4348
    %4351 = vperm.xlu0 %4350, %v4345
    %v4352 = vpop.permute.xlu0 %4351
    %v4354 = vadd.f32 %v4342, %v4352
    %v4355 = vadd.f32 %v4344, %v4352
    %4358 = vset.pattern.permute.xlu0 0
    %4359 = vperm.xlu0 %4358, %v4354
    %v4360 = vpop.permute.xlu0 %4359
    %4361 = vset.pattern.permute.xlu0 0
    %4362 = vperm.xlu0 %4361, %v4355
    %v4363 = vpop.permute.xlu0 %4362
    %v4364 = vperm.slane %v4360, %v2027
    %v4365 = vperm.slane %v4363, %v2027
    %v4366 = vsel %vm2078, %v4365, %v4364
    %vm4368 = vcmask 58368
    %4369 = vst.msk [vmem:[#allocation2] sm:$0x3] %vm4368, %v4366
    %4370 = vst [vmem:[#allocation4] sm:$0xff] %v2841
    %4371 = vst [vmem:[#allocation4 + $0x8] sm:$0xff] %v2958
    // Predicated region
    $region26: #{sarb_forward.1} parent=1 // pred_check
      _
    $region27: #{sarb_forward.1} parent=1 // pred_check_branch
      %4373 = sbr.rel (0) target = $region29
    $region28: #{sarb_forward.1} parent=1 // pred_region
      %4375 = vsyncadd [#allocation3], 0
      %s4377 = sshll.u32 [#allocation2], 4
      %s4378 = int_to_ptr.vmem [resolvable:$true] %s4377
      %s4379 = sshll.u32 %s6, 4
      %s4380 = int_to_ptr.hbm [resolvable:$true] %s4379
      %4382 = dma.vmem_to_hbm [thread:$0]  %s4378, 32, %s4380, [#allocation3]
    $region29: #{sarb_forward.1} parent=1 // pred_fallthru
      _
    // Predicated region
    $region30: #{sarb_forward.1} parent=1 // pred_check
      _
    $region31: #{sarb_forward.1} parent=1 // pred_check_branch
      %4384 = sbr.rel (0) target = $region33
    $region32: #{sarb_forward.1} parent=1 // pred_region
      %4386 = vsyncadd [#allocation5], 0
      %s4387 = sshll.u32 [#allocation4], 4
      %s4388 = int_to_ptr.vmem [resolvable:$true] %s4387
      %s4389 = sshll.u32 %s7, 4
      %s4390 = int_to_ptr.hbm [resolvable:$true] %s4389
      %4395 = dma.vmem_to_hbm [thread:$0]  %s4388, 256, %s4390, [#allocation5], 128, 128, 8
    $region33: #{sarb_forward.1} parent=1 // pred_fallthru
      _
    // Predicated region
    $region34: #{sarb_forward.1} parent=1 // pred_check
      _
    $region35: #{sarb_forward.1} parent=1 // pred_check_branch
      %4397 = sbr.rel (0) target = $region37
    $region36: #{sarb_forward.1} parent=1 // pred_region
      %4399 = dma.done [#allocation3], 32
    $region37: #{sarb_forward.1} parent=1 // pred_fallthru
      _
    // Predicated region
    $region38: #{sarb_forward.1} parent=1 // pred_check
      _
    $region39: #{sarb_forward.1} parent=1 // pred_check_branch
      %4401 = sbr.rel (0) target = $region41
    $region40: #{sarb_forward.1} parent=1 // pred_region
      %4403 = dma.done [#allocation5], 256
    $region41: #{sarb_forward.1} parent=1 // pred_fallthru
      _
    %4404 = vsyncpa [#allocation3], 1
    %4405 = vsyncpa [#allocation5], 1

</llo_original>
